<compile_context>
chip_gen: v7x
topology: tpu7x:2x2x1
jax: 0.10.0
libtpu: 0.0.40
codegen_flags: <defaults>
</compile_context>

<pallas_src>
import jax
import jax.numpy as jnp
from jax.experimental import pallas as pl
from jax.experimental.pallas import tpu as pltpu

K = 5  # SGConv propagation steps


# ---------------------------------------------------------------------------
# Kernel 1: SGConv (project-first) + folded-BN bias + ReLU + masked max pool.
# Grid is over blocks of the 1024-wide hidden dim ("parallel" -> both v7x TCs).
# ---------------------------------------------------------------------------
def sgc_pool_kernel(s_ref, x_ref, mask_ref, w_ref, b_ref, out_ref):
    # Project first:  S^K (x W) == (S^K x) W  -> propagation RHS is block_c
    # lanes wide (full MXU lanes) instead of 8.
    h = jnp.dot(x_ref[...], w_ref[...], preferred_element_type=jnp.float32)
    s = s_ref[...]
    for _ in range(K):  # static unroll
        h = jnp.dot(s, h, preferred_element_type=jnp.float32)
    # BN was folded into (w, b) on the host; just add bias and ReLU.
    h = jnp.maximum(h + b_ref[...], 0.0)

    # scatter_max over nodes of each graph. h >= 0 after ReLU, so masking by
    # multiplication is exact and avoids -inf sentinels / where-selects.
    m = mask_ref[...]                         # (B, N), 1.0 where node in graph b
    B = m.shape[0]                            # static, small
    rows = [jnp.max(h * m[b][:, None], axis=0, keepdims=True) for b in range(B)]
    out_ref[...] = jnp.concatenate(rows, axis=0)   # (B, block_c)


def sgc_pool(s, x, mask, w_sgc_f, b_sgc_f, *, block_c=512):
    N, C = x.shape
    B = mask.shape[0]
    H = w_sgc_f.shape[1]
    assert H % block_c == 0
    # TODO(synk): for large N, additionally tile S/h over the node dim with a
    # reduction ("arbitrary") grid axis instead of holding dense S in VMEM.
    return pl.pallas_call(
        sgc_pool_kernel,
        out_shape=jax.ShapeDtypeStruct((B, H), jnp.float32),
        grid=(H // block_c,),
        in_specs=[
            pl.BlockSpec((N, N), lambda i: (0, 0)),        # S (full, reused)
            pl.BlockSpec((N, C), lambda i: (0, 0)),        # x (full, reused)
            pl.BlockSpec((B, N), lambda i: (0, 0)),        # mask (full, reused)
            pl.BlockSpec((C, block_c), lambda i: (0, i)),  # w_sgc channel block
            pl.BlockSpec((1, block_c), lambda i: (0, i)),  # b_sgc channel block
        ],
        out_specs=pl.BlockSpec((B, block_c), lambda i: (0, i)),
        compiler_params=pltpu.CompilerParams(dimension_semantics=("parallel",)),
    )(s, x, mask, w_sgc_f, b_sgc_f)


# ---------------------------------------------------------------------------
# Kernel 2: fc head (Linear -> ReLU -> Linear -> ReLU -> Linear) + LogSoftmax.
# w1/w2 arrive as bf16 (half the HBM bytes); accumulation stays f32 on the MXU.
# Dropout(p=0.3) is identity in eval mode.
# ---------------------------------------------------------------------------
def fc_head_kernel(p_ref, w1_ref, b1_ref, w2_ref, b2_ref, w3_ref, b3_ref, out_ref):
    p = p_ref[...].astype(jnp.bfloat16)
    y = jnp.dot(p, w1_ref[...], preferred_element_type=jnp.float32) + b1_ref[...]
    y = jnp.maximum(y, 0.0)
    y = jnp.dot(y.astype(jnp.bfloat16), w2_ref[...],
                preferred_element_type=jnp.float32) + b2_ref[...]
    y = jnp.maximum(y, 0.0)
    y = jnp.dot(y, w3_ref[...], preferred_element_type=jnp.float32) + b3_ref[...]

    # LogSoftmax(dim=1)
    m = jnp.max(y, axis=1, keepdims=True)
    z = y - m
    out_ref[...] = z - jnp.log(jnp.sum(jnp.exp(z), axis=1, keepdims=True))


def fc_head(pooled, w1, b1, w2, b2, w3, b3):
    B = pooled.shape[0]
    C = w3.shape[1]
    vmem = pl.BlockSpec(memory_space=pltpu.MemorySpace.VMEM)
    return pl.pallas_call(
        fc_head_kernel,
        out_shape=jax.ShapeDtypeStruct((B, C), jnp.float32),
        in_specs=[vmem] * 7,
        out_specs=vmem,
    )(pooled, w1, b1, w2, b2, w3, b3)


@jax.jit
def sgc_classifier(s, x, mask, w_sgc_f, b_sgc_f, w1_f, b1_f, w2_f, b2_f, w3, b3):
    pooled = sgc_pool(s, x, mask, w_sgc_f, b_sgc_f)
    return fc_head(pooled, w1_f, b1_f, w2_f, b2_f, w3, b3)


# ---------------------------------------------------------------------------
# Host-side helpers: BN folding and the unfused f32 reference.
# ---------------------------------------------------------------------------
def _fold_bn(gamma, beta, mean, var, eps=1e-5):
    scale = gamma / jnp.sqrt(var + eps)
    shift = beta - mean * scale
    return scale[None, :], shift[None, :]


def _fold_into_linear(w, b, sc, sh):
    # BN(xW + b) = (xW + b) * sc + sh = x (W*sc) + (b*sc + sh)   (eval mode)
    return w * sc, b * sc + sh


def _reference(s, x, mask, w_sgc, b_sgc, sc1, sh1,
               w1, b1, sc2, sh2, w2, b2, sc3, sh3, w3, b3):
    h = x
    for _ in range(K):
        h = s @ h
    h = jnp.maximum((h @ w_sgc + b_sgc) * sc1 + sh1, 0.0)
    pooled = jnp.max(jnp.where(mask[:, :, None] > 0.5, h[None], -jnp.inf), axis=1)
    y = jnp.maximum((pooled @ w1 + b1) * sc2 + sh2, 0.0)
    y = jnp.maximum((y @ w2 + b2) * sc3 + sh3, 0.0)
    y = y @ w3 + b3
    return jax.nn.log_softmax(y, axis=1)


if __name__ == "__main__":
    key = jax.random.PRNGKey(0)
    ks = jax.random.split(key, 20)

    # ---- synthetic graph batch: B graphs, 32 nodes each ----
    B, nodes_per_graph, in_channels, classes = 2, 32, 3, 10
    N = B * nodes_per_graph
    E = 256

    pos = jax.random.normal(ks[0], (N, in_channels), dtype=jnp.float32)
    batch = jnp.repeat(jnp.arange(B, dtype=jnp.int32), nodes_per_graph)       # (N,)
    src_local = jax.random.randint(ks[1], (E,), 0, nodes_per_graph)
    dst_local = jax.random.randint(ks[2], (E,), 0, nodes_per_graph)
    graph_of_edge = jax.random.randint(ks[3], (E,), 0, B)
    src = graph_of_edge * nodes_per_graph + src_local
    dst = graph_of_edge * nodes_per_graph + dst_local

    # dense symmetrically-normalized adjacency with self-loops (gcn_norm, undirected)
    A = jnp.zeros((N, N), jnp.float32).at[dst, src].set(1.0)
    A = jnp.maximum(A, A.T)
    A_hat = A + jnp.eye(N, dtype=jnp.float32)
    dinv = 1.0 / jnp.sqrt(jnp.sum(A_hat, axis=1))
    S = dinv[:, None] * A_hat * dinv[None, :]

    # pad input channels 3 -> 8 (zeros don't change the math)
    Cpad = 8
    x_pad = jnp.concatenate(
        [pos, jnp.zeros((N, Cpad - in_channels), jnp.float32)], axis=1)

    # node->graph membership mask for scatter_max
    mask = (batch[None, :] == jnp.arange(B)[:, None]).astype(jnp.float32)     # (B, N)

    # ---- deterministic parameters ----
    def lin(k, fan_in, fan_out):
        kw, kb = jax.random.split(k)
        w = jax.random.normal(kw, (fan_in, fan_out), jnp.float32) * 0.05
        b = jax.random.normal(kb, (1, fan_out), jnp.float32) * 0.05
        return w, b

    def bn(k, h):
        k1, k2, k3, k4 = jax.random.split(k, 4)
        gamma = jax.random.uniform(k1, (h,), jnp.float32, 0.5, 1.5)
        beta = jax.random.normal(k2, (h,), jnp.float32) * 0.1
        mean = jax.random.normal(k3, (h,), jnp.float32) * 0.1
        var = jax.random.uniform(k4, (h,), jnp.float32, 0.5, 1.5)
        return _fold_bn(gamma, beta, mean, var)

    w_sgc, b_sgc = lin(ks[4], Cpad, 1024)
    sc1, sh1 = bn(ks[5], 1024)
    w1, b1 = lin(ks[6], 1024, 512)
    sc2, sh2 = bn(ks[7], 512)
    w2, b2 = lin(ks[8], 512, 256)
    sc3, sh3 = bn(ks[9], 256)
    w3, b3 = lin(ks[10], 256, classes)

    # ---- host-side BN folding + bf16 weight storage for the heavy matmuls ----
    w_sgc_f, b_sgc_f = _fold_into_linear(w_sgc, b_sgc, sc1, sh1)
    w1_f, b1_f = _fold_into_linear(w1, b1, sc2, sh2)
    w2_f, b2_f = _fold_into_linear(w2, b2, sc3, sh3)
    w1_f = w1_f.astype(jnp.bfloat16)   # 1024x512: dominant HBM traffic, halve it
    w2_f = w2_f.astype(jnp.bfloat16)   # 512x256
    # w_sgc_f / w3 are tiny -> keep f32 for numerics.

    out = sgc_classifier(S, x_pad, mask, w_sgc_f, b_sgc_f,
                         w1_f, b1_f, w2_f, b2_f, w3, b3)
    out = jax.block_until_ready(out)

    ref = _reference(S, x_pad, mask, w_sgc, b_sgc, sc1, sh1,
                     w1, b1, sc2, sh2, w2, b2, sc3, sh3, w3, b3)
    assert out.shape == (B, classes)
    # Tolerance reflects bf16 storage of w1/w2 (f32 accumulation on the MXU).
    assert jnp.allclose(out, ref, rtol=2e-2, atol=2e-2), (out, ref)

    print("KERNEL_OK")
</pallas_src>

<mosaic_0001>
module attributes {stable_mosaic.version = 11 : i64} {
  func.func @fc_head_kernel(%arg0: memref<2x1024xf32, #tpu.memory_space<vmem>>, %arg1: memref<1024x512xbf16, #tpu.memory_space<vmem>>, %arg2: memref<1x512xf32, #tpu.memory_space<vmem>>, %arg3: memref<512x256xbf16, #tpu.memory_space<vmem>>, %arg4: memref<1x256xf32, #tpu.memory_space<vmem>>, %arg5: memref<256x10xf32, #tpu.memory_space<vmem>>, %arg6: memref<1x10xf32, #tpu.memory_space<vmem>>, %arg7: memref<2x10xf32, #tpu.memory_space<vmem>>) attributes {dimension_semantics = [], scalar_prefetch = 0 : i64, scratch_operands = 0 : i64, tpu.core_type = #tpu.core_type<tc>} {
    %c0 = arith.constant 0 : index
    %c0_0 = arith.constant 0 : index
    %0 = vector.load %arg0[%c0, %c0_0] : memref<2x1024xf32, #tpu.memory_space<vmem>>, vector<2x1024xf32>
    %1 = arith.truncf %0 : vector<2x1024xf32> to vector<2x1024xbf16>
    %c0_1 = arith.constant 0 : index
    %c0_2 = arith.constant 0 : index
    %2 = vector.load %arg1[%c0_1, %c0_2] : memref<1024x512xbf16, #tpu.memory_space<vmem>>, vector<1024x512xbf16>
    %cst = arith.constant dense<0.000000e+00> : vector<2x512xf32>
    %3 = tpu.matmul %1, %2, %cst {dimension_numbers = #tpu.dot_dimension_numbers<[1], [0], [0], [1], [0, 0, 1, 1], [], []>} : vector<2x1024xbf16>, vector<1024x512xbf16>, vector<2x512xf32> -> vector<2x512xf32>
    %c0_3 = arith.constant 0 : index
    %c0_4 = arith.constant 0 : index
    %4 = vector.load %arg2[%c0_3, %c0_4] : memref<1x512xf32, #tpu.memory_space<vmem>>, vector<1x512xf32>
    %5 = vector.broadcast %4 : vector<1x512xf32> to vector<2x512xf32>
    %6 = arith.addf %3, %5 : vector<2x512xf32>
    %cst_5 = arith.constant 0.000000e+00 : f32
    %7 = vector.broadcast %cst_5 : f32 to vector<2x512xf32>
    %8 = arith.maximumf %6, %7 : vector<2x512xf32>
    %9 = arith.truncf %8 : vector<2x512xf32> to vector<2x512xbf16>
    %c0_6 = arith.constant 0 : index
    %c0_7 = arith.constant 0 : index
    %10 = vector.load %arg3[%c0_6, %c0_7] : memref<512x256xbf16, #tpu.memory_space<vmem>>, vector<512x256xbf16>
    %cst_8 = arith.constant dense<0.000000e+00> : vector<2x256xf32>
    %11 = tpu.matmul %9, %10, %cst_8 {dimension_numbers = #tpu.dot_dimension_numbers<[1], [0], [0], [1], [0, 0, 1, 1], [], []>} : vector<2x512xbf16>, vector<512x256xbf16>, vector<2x256xf32> -> vector<2x256xf32>
    %c0_9 = arith.constant 0 : index
    %c0_10 = arith.constant 0 : index
    %12 = vector.load %arg4[%c0_9, %c0_10] : memref<1x256xf32, #tpu.memory_space<vmem>>, vector<1x256xf32>
    %13 = vector.broadcast %12 : vector<1x256xf32> to vector<2x256xf32>
    %14 = arith.addf %11, %13 : vector<2x256xf32>
    %cst_11 = arith.constant 0.000000e+00 : f32
    %15 = vector.broadcast %cst_11 : f32 to vector<2x256xf32>
    %16 = arith.maximumf %14, %15 : vector<2x256xf32>
    %c0_12 = arith.constant 0 : index
    %c0_13 = arith.constant 0 : index
    %17 = vector.load %arg5[%c0_12, %c0_13] : memref<256x10xf32, #tpu.memory_space<vmem>>, vector<256x10xf32>
    %cst_14 = arith.constant dense<0.000000e+00> : vector<2x10xf32>
    %18 = tpu.matmul %16, %17, %cst_14 {dimension_numbers = #tpu.dot_dimension_numbers<[1], [0], [0], [1], [0, 0, 1, 1], [], []>} : vector<2x256xf32>, vector<256x10xf32>, vector<2x10xf32> -> vector<2x10xf32>
    %c0_15 = arith.constant 0 : index
    %c0_16 = arith.constant 0 : index
    %19 = vector.load %arg6[%c0_15, %c0_16] : memref<1x10xf32, #tpu.memory_space<vmem>>, vector<1x10xf32>
    %20 = vector.broadcast %19 : vector<1x10xf32> to vector<2x10xf32>
    %21 = arith.addf %18, %20 : vector<2x10xf32>
    %cst_17 = arith.constant dense<0xFF800000> : vector<2xf32>
    %22 = vector.multi_reduction <maximumf>, %21, %cst_17 [1] : vector<2x10xf32> to vector<2xf32>
    %23 = vector.shape_cast %22 : vector<2xf32> to vector<2x1xf32>
    %24 = vector.broadcast %23 : vector<2x1xf32> to vector<2x10xf32>
    %25 = arith.subf %21, %24 : vector<2x10xf32>
    %26 = math.exp %25 : vector<2x10xf32>
    %cst_18 = arith.constant dense<0.000000e+00> : vector<2xf32>
    %27 = vector.multi_reduction <add>, %26, %cst_18 [1] : vector<2x10xf32> to vector<2xf32>
    %28 = vector.shape_cast %27 : vector<2xf32> to vector<2x1xf32>
    %29 = math.log %28 : vector<2x1xf32>
    %30 = vector.broadcast %29 : vector<2x1xf32> to vector<2x10xf32>
    %31 = arith.subf %25, %30 : vector<2x10xf32>
    %c0_19 = arith.constant 0 : index
    %c0_20 = arith.constant 0 : index
    %32 = vector.load %arg7[%c0_19, %c0_20] : memref<2x10xf32, #tpu.memory_space<vmem>>, vector<2x10xf32>
    tpu.vector_store %arg7[%c0_19, %c0_20], %31 {strides = array<i32>} : memref<2x10xf32, #tpu.memory_space<vmem>>, vector<2x10xf32>,
    return
  }
}

module attributes {stable_mosaic.version = 11 : i64} {
  func.func @sgc_pool_kernel(%arg0: i32, %arg1: memref<64x64xf32, #tpu.memory_space<vmem>>, %arg2: memref<64x8xf32, #tpu.memory_space<vmem>>, %arg3: memref<2x64xf32, #tpu.memory_space<vmem>>, %arg4: memref<8x512xf32, #tpu.memory_space<vmem>>, %arg5: memref<1x512xf32, #tpu.memory_space<vmem>>, %arg6: memref<2x512xf32, #tpu.memory_space<vmem>>) attributes {dimension_semantics = [#tpu.dimension_semantics<parallel>], iteration_bounds = array<i64: 2>, scalar_prefetch = 0 : i64, scratch_operands = 0 : i64, tpu.core_type = #tpu.core_type<tc>, window_params = [{pipeline_mode = #tpu.pipeline_mode<synchronous>, transform_indices = @transform_0, window_bounds = array<i64: 64, 64>}, {pipeline_mode = #tpu.pipeline_mode<synchronous>, transform_indices = @transform_1, window_bounds = array<i64: 64, 8>}, {pipeline_mode = #tpu.pipeline_mode<synchronous>, transform_indices = @transform_2, window_bounds = array<i64: 2, 64>}, {transform_indices = @transform_3, window_bounds = array<i64: 8, 512>}, {transform_indices = @transform_4, window_bounds = array<i64: 1, 512>}, {transform_indices = @transform_5, window_bounds = array<i64: 2, 512>}]} {
    %c0 = arith.constant 0 : index
    %c0_0 = arith.constant 0 : index
    %0 = vector.load %arg2[%c0, %c0_0] : memref<64x8xf32, #tpu.memory_space<vmem>>, vector<64x8xf32>
    %c0_1 = arith.constant 0 : index
    %c0_2 = arith.constant 0 : index
    %1 = vector.load %arg4[%c0_1, %c0_2] : memref<8x512xf32, #tpu.memory_space<vmem>>, vector<8x512xf32>
    %cst = arith.constant dense<0.000000e+00> : vector<64x512xf32>
    %2 = tpu.matmul %0, %1, %cst {dimension_numbers = #tpu.dot_dimension_numbers<[1], [0], [0], [1], [0, 0, 1, 1], [], []>} : vector<64x8xf32>, vector<8x512xf32>, vector<64x512xf32> -> vector<64x512xf32>
    %c0_3 = arith.constant 0 : index
    %c0_4 = arith.constant 0 : index
    %3 = vector.load %arg1[%c0_3, %c0_4] : memref<64x64xf32, #tpu.memory_space<vmem>>, vector<64x64xf32>
    %cst_5 = arith.constant dense<0.000000e+00> : vector<64x512xf32>
    %4 = tpu.matmul %3, %2, %cst_5 {dimension_numbers = #tpu.dot_dimension_numbers<[1], [0], [0], [1], [0, 0, 1, 1], [], []>} : vector<64x64xf32>, vector<64x512xf32>, vector<64x512xf32> -> vector<64x512xf32>
    %cst_6 = arith.constant dense<0.000000e+00> : vector<64x512xf32>
    %5 = tpu.matmul %3, %4, %cst_6 {dimension_numbers = #tpu.dot_dimension_numbers<[1], [0], [0], [1], [0, 0, 1, 1], [], []>} : vector<64x64xf32>, vector<64x512xf32>, vector<64x512xf32> -> vector<64x512xf32>
    %cst_7 = arith.constant dense<0.000000e+00> : vector<64x512xf32>
    %6 = tpu.matmul %3, %5, %cst_7 {dimension_numbers = #tpu.dot_dimension_numbers<[1], [0], [0], [1], [0, 0, 1, 1], [], []>} : vector<64x64xf32>, vector<64x512xf32>, vector<64x512xf32> -> vector<64x512xf32>
    %cst_8 = arith.constant dense<0.000000e+00> : vector<64x512xf32>
    %7 = tpu.matmul %3, %6, %cst_8 {dimension_numbers = #tpu.dot_dimension_numbers<[1], [0], [0], [1], [0, 0, 1, 1], [], []>} : vector<64x64xf32>, vector<64x512xf32>, vector<64x512xf32> -> vector<64x512xf32>
    %cst_9 = arith.constant dense<0.000000e+00> : vector<64x512xf32>
    %8 = tpu.matmul %3, %7, %cst_9 {dimension_numbers = #tpu.dot_dimension_numbers<[1], [0], [0], [1], [0, 0, 1, 1], [], []>} : vector<64x64xf32>, vector<64x512xf32>, vector<64x512xf32> -> vector<64x512xf32>
    %c0_10 = arith.constant 0 : index
    %c0_11 = arith.constant 0 : index
    %9 = vector.load %arg5[%c0_10, %c0_11] : memref<1x512xf32, #tpu.memory_space<vmem>>, vector<1x512xf32>
    %10 = vector.broadcast %9 : vector<1x512xf32> to vector<64x512xf32>
    %11 = arith.addf %8, %10 : vector<64x512xf32>
    %cst_12 = arith.constant 0.000000e+00 : f32
    %12 = vector.broadcast %cst_12 : f32 to vector<64x512xf32>
    %13 = arith.maximumf %11, %12 : vector<64x512xf32>
    %c0_13 = arith.constant 0 : index
    %c0_14 = arith.constant 0 : index
    %14 = vector.load %arg3[%c0_13, %c0_14] : memref<2x64xf32, #tpu.memory_space<vmem>>, vector<2x64xf32>
    %15 = vector.extract_strided_slice %14 {offsets = [0, 0], sizes = [1, 64], strides = [1, 1]} : vector<2x64xf32> to vector<1x64xf32>
    %16 = vector.shape_cast %15 : vector<1x64xf32> to vector<64xf32>
    %17 = vector.shape_cast %16 : vector<64xf32> to vector<64x1xf32>
    %18 = vector.broadcast %17 : vector<64x1xf32> to vector<64x512xf32>
    %19 = arith.mulf %13, %18 : vector<64x512xf32>
    %cst_15 = arith.constant dense<0xFF800000> : vector<512xf32>
    %20 = vector.multi_reduction <maximumf>, %19, %cst_15 [0] : vector<64x512xf32> to vector<512xf32>
    %21 = vector.shape_cast %20 : vector<512xf32> to vector<1x512xf32>
    %22 = vector.extract_strided_slice %14 {offsets = [1, 0], sizes = [1, 64], strides = [1, 1]} : vector<2x64xf32> to vector<1x64xf32>
    %23 = vector.shape_cast %22 : vector<1x64xf32> to vector<64xf32>
    %24 = vector.shape_cast %23 : vector<64xf32> to vector<64x1xf32>
    %25 = vector.broadcast %24 : vector<64x1xf32> to vector<64x512xf32>
    %26 = arith.mulf %13, %25 : vector<64x512xf32>
    %cst_16 = arith.constant dense<0xFF800000> : vector<512xf32>
    %27 = vector.multi_reduction <maximumf>, %26, %cst_16 [0] : vector<64x512xf32> to vector<512xf32>
    %28 = vector.shape_cast %27 : vector<512xf32> to vector<1x512xf32>
    %29 = tpu.concatenate %21, %28 in 0 : vector<1x512xf32>, vector<1x512xf32> -> vector<2x512xf32>
    %c0_17 = arith.constant 0 : index
    %c0_18 = arith.constant 0 : index
    %30 = vector.load %arg6[%c0_17, %c0_18] : memref<2x512xf32, #tpu.memory_space<vmem>>, vector<2x512xf32>
    tpu.vector_store %arg6[%c0_17, %c0_18], %29 {strides = array<i32>} : memref<2x512xf32, #tpu.memory_space<vmem>>, vector<2x512xf32>,
    return
  }
  func.func @transform_0(%arg0: i32) -> (i32, i32) {
    %c0_i32 = arith.constant 0 : i32
    %c0_i32_0 = arith.constant 0 : i32
    %c0_i32_1 = arith.constant 0 : i32
    return %c0_i32, %c0_i32_0 : i32, i32
  }
  func.func @transform_1(%arg0: i32) -> (i32, i32) {
    %c0_i32 = arith.constant 0 : i32
    %c0_i32_0 = arith.constant 0 : i32
    %c0_i32_1 = arith.constant 0 : i32
    return %c0_i32, %c0_i32_0 : i32, i32
  }
  func.func @transform_2(%arg0: i32) -> (i32, i32) {
    %c0_i32 = arith.constant 0 : i32
    %c0_i32_0 = arith.constant 0 : i32
    %c0_i32_1 = arith.constant 0 : i32
    return %c0_i32, %c0_i32_0 : i32, i32
  }
  func.func @transform_3(%arg0: i32) -> (i32, i32) {
    %c0_i32 = arith.constant 0 : i32
    %c0_i32_0 = arith.constant 0 : i32
    return %c0_i32, %arg0 : i32, i32
  }
  func.func @transform_4(%arg0: i32) -> (i32, i32) {
    %c0_i32 = arith.constant 0 : i32
    %c0_i32_0 = arith.constant 0 : i32
    return %c0_i32, %arg0 : i32, i32
  }
  func.func @transform_5(%arg0: i32) -> (i32, i32) {
    %c0_i32 = arith.constant 0 : i32
    %c0_i32_0 = arith.constant 0 : i32
    return %c0_i32, %arg0 : i32, i32
  }
}

</mosaic_0001>

<llo_original>
// kernel: sgc_classifier.2
$region0: #{sgc_classifier.2}
  #allocation0 [shape = 'u32[]', space=smem, size = 0x4, offset = 0x4, fixed_abs, tag = 'smem constant byte address 0x4 - core index']
  #allocation1 [shape = 'u32[144,128]{1,0:T(1,128)}', space=vmem, size = 0x12000, scoped, tag = 'internal scratch']
  %s0 = inlined_call_operand.hbm [shape: f32[64,64], index: 0, kind: input, shape index: {}]
  %s1 = inlined_call_operand.vmem [shape: f32[64,8], index: 1, kind: input, shape index: {}]
  %s2 = inlined_call_operand.hbm [shape: f32[2,64], index: 2, kind: input, shape index: {}]
  %s3 = inlined_call_operand.hbm [shape: f32[8,1024], index: 3, kind: input, shape index: {}]
  %s4 = inlined_call_operand.hbm [shape: f32[1,1024], index: 4, kind: input, shape index: {}]
  %s5 = inlined_call_operand.vmem [shape: f32[2,1024], index: 5, kind: output, shape index: {}]
  %s6 = sld [smem:[#allocation0]]
  $region69: #{sgc_classifier.2} parent=0
    _
  %s8 = ssub.s32 1, %s6
  %s9 = scalar_select 0, %s8, %s6
  $region1: #{sgc_classifier.2} parent=0
    #allocation2 [shape = 'u8[32768]{0}', space=vmem, size = 0x8000, scoped, tag = 'input window, operand 0, single buffered']
    #allocation3 [shape = 's32[2]{0}', space=sflag, size = 0x8, scoped, tag = 'scoped memory for sgc_classifier.2']
    #allocation4 [shape = 'u8[1024]{0}', space=vmem, size = 0x400, scoped, tag = 'input window, operand 2, single buffered']
    #allocation5 [shape = 's32[1]{0}', space=sflag, size = 0x4, scoped, tag = 'scoped memory for sgc_classifier.2']
    #allocation6 [shape = 'u8[32768]{0}', space=vmem, size = 0x8000, scoped, tag = 'input window, operand 3']
    #allocation7 [shape = 'u8[4096]{0}', space=vmem, size = 0x1000, scoped, tag = 'input window, operand 4']
    %10 = vsyncpa [#allocation3], 0
    %11 = vsyncpa [#allocation5], 0
    loop: start=0, step=1, limit=4
    $region2: #{sgc_classifier.2} parent=1 // loop_pre_header
      _
    $region3: #{sgc_classifier.2} parent=1 // loop_header
      %s13 = sphi 0, %s17
      %p14 = scmp.ge.s32.totalorder %s13, 4
      %s21 = sphi 0, %s21
      %s23 = sphi 0, %s21
      %s24 = sphi 0, %s23
      %s38 = sphi 0, %s24
      %s42 = sphi 0, %s42
      %s44 = sphi 0, %s42
      %s45 = sphi 0, %s44
      %s59 = sphi 0, %s45
      %s63 = sphi 0, %s63
      %s65 = sphi 0, %s63
      %s66 = sphi 0, %s65
      %s80 = sphi 0, %s66
      %s86 = sphi 0, %s88
      %s89 = sphi 0, %s86
      %s90 = sphi 0, %s89
      %s106 = sphi 0, %s90
      %s112 = sphi 0, %s114
      %s115 = sphi 0, %s112
      %s116 = sphi 0, %s115
      %s132 = sphi 0, %s116
      %s138 = sphi 0, %s140
      %s141 = sphi 0, %s138
      %s142 = sphi 0, %s141
      %s158 = sphi 0, %s142
    $region4: #{sgc_classifier.2} parent=1 // loop_header_branch
      %16 = sbr.rel (%p14) target = $region8
    $region5: #{sgc_classifier.2} parent=1 // loop_body
      %s18 = ssub.s32 %s13, 1
      %s19 = ssub.s32 %s13, 2
      %s20 = sadd.s32 %s13, 1
      %s22 = sadd.s32 %s21, 1
      %p25 = scmp.eq.s32.totalorder %s13, 1
      %p26 = scmp.ne.s32.totalorder %s21, %s23
      %p27 = scmp.eq.s32.totalorder %s13, 0
      %p28 = por %p26, %p27
      %p29 = scmp.ne.s32.totalorder %s21, %s23
      %p30 = scmp.eq.s32.totalorder %s18, 1
      %p31 = por %p29, %p30
      %p32 = scmp.ne.s32.totalorder %s23, %s24
      %p33 = scmp.eq.s32.totalorder %s18, 0
      %p34 = por %p32, %p33
      %p35 = scmp.ne.s32.totalorder %s23, %s24
      %p36 = scmp.eq.s32.totalorder %s19, 1
      %p37 = por %p35, %p36
      %p39 = scmp.ne.s32.totalorder %s24, %s38
      %p40 = scmp.eq.s32.totalorder %s19, 0
      %p41 = por %p39, %p40
      %s43 = sadd.s32 %s42, 1
      %p46 = scmp.eq.s32.totalorder %s13, 1
      %p47 = scmp.ne.s32.totalorder %s42, %s44
      %p48 = scmp.eq.s32.totalorder %s13, 0
      %p49 = por %p47, %p48
      %p50 = scmp.ne.s32.totalorder %s42, %s44
      %p51 = scmp.eq.s32.totalorder %s18, 1
      %p52 = por %p50, %p51
      %p53 = scmp.ne.s32.totalorder %s44, %s45
      %p54 = scmp.eq.s32.totalorder %s18, 0
      %p55 = por %p53, %p54
      %p56 = scmp.ne.s32.totalorder %s44, %s45
      %p57 = scmp.eq.s32.totalorder %s19, 1
      %p58 = por %p56, %p57
      %p60 = scmp.ne.s32.totalorder %s45, %s59
      %p61 = scmp.eq.s32.totalorder %s19, 0
      %p62 = por %p60, %p61
      %s64 = sadd.s32 %s63, 1
      %p67 = scmp.eq.s32.totalorder %s13, 1
      %p68 = scmp.ne.s32.totalorder %s63, %s65
      %p69 = scmp.eq.s32.totalorder %s13, 0
      %p70 = por %p68, %p69
      %p71 = scmp.ne.s32.totalorder %s63, %s65
      %p72 = scmp.eq.s32.totalorder %s18, 1
      %p73 = por %p71, %p72
      %p74 = scmp.ne.s32.totalorder %s65, %s66
      %p75 = scmp.eq.s32.totalorder %s18, 0
      %p76 = por %p74, %p75
      %p77 = scmp.ne.s32.totalorder %s65, %s66
      %p78 = scmp.eq.s32.totalorder %s19, 1
      %p79 = por %p77, %p78
      %p81 = scmp.ne.s32.totalorder %s66, %s80
      %p82 = scmp.eq.s32.totalorder %s19, 0
      %p83 = por %p81, %p82
      %s84 = ssub.s32 %s13, %s20
      %p85 = scmp.eq.s32.totalorder %s84, 0
      %s87 = sadd.s32 %s86, 1
      %s88 = scalar_select %p85, %s86, %s87
      %p91 = pneg %p85
      %p92 = scmp.eq.s32.totalorder %s13, 1
      %p93 = por %p91, %p92
      %p94 = scmp.ne.s32.totalorder %s86, %s89
      %p95 = scmp.eq.s32.totalorder %s13, 0
      %p96 = por %p94, %p95
      %p97 = scmp.ne.s32.totalorder %s86, %s89
      %p98 = scmp.eq.s32.totalorder %s18, 1
      %p99 = por %p97, %p98
      %p100 = scmp.ne.s32.totalorder %s89, %s90
      %p101 = scmp.eq.s32.totalorder %s18, 0
      %p102 = por %p100, %p101
      %p103 = scmp.ne.s32.totalorder %s89, %s90
      %p104 = scmp.eq.s32.totalorder %s19, 1
      %p105 = por %p103, %p104
      %p107 = scmp.ne.s32.totalorder %s90, %s106
      %p108 = scmp.eq.s32.totalorder %s19, 0
      %p109 = por %p107, %p108
      %s110 = ssub.s32 %s13, %s20
      %p111 = scmp.eq.s32.totalorder %s110, 0
      %s113 = sadd.s32 %s112, 1
      %s114 = scalar_select %p111, %s112, %s113
      %p117 = pneg %p111
      %p118 = scmp.eq.s32.totalorder %s13, 1
      %p119 = por %p117, %p118
      %p120 = scmp.ne.s32.totalorder %s112, %s115
      %p121 = scmp.eq.s32.totalorder %s13, 0
      %p122 = por %p120, %p121
      %p123 = scmp.ne.s32.totalorder %s112, %s115
      %p124 = scmp.eq.s32.totalorder %s18, 1
      %p125 = por %p123, %p124
      %p126 = scmp.ne.s32.totalorder %s115, %s116
      %p127 = scmp.eq.s32.totalorder %s18, 0
      %p128 = por %p126, %p127
      %p129 = scmp.ne.s32.totalorder %s115, %s116
      %p130 = scmp.eq.s32.totalorder %s19, 1
      %p131 = por %p129, %p130
      %p133 = scmp.ne.s32.totalorder %s116, %s132
      %p134 = scmp.eq.s32.totalorder %s19, 0
      %p135 = por %p133, %p134
      %s136 = ssub.s32 %s13, %s20
      %p137 = scmp.eq.s32.totalorder %s136, 0
      %s139 = sadd.s32 %s138, 1
      %s140 = scalar_select %p137, %s138, %s139
      %p143 = pneg %p137
      %p144 = scmp.eq.s32.totalorder %s13, 1
      %p145 = por %p143, %p144
      %p146 = scmp.ne.s32.totalorder %s138, %s141
      %p147 = scmp.eq.s32.totalorder %s13, 0
      %p148 = por %p146, %p147
      %p149 = scmp.ne.s32.totalorder %s138, %s141
      %p150 = scmp.eq.s32.totalorder %s18, 1
      %p151 = por %p149, %p150
      %p152 = scmp.ne.s32.totalorder %s141, %s142
      %p153 = scmp.eq.s32.totalorder %s18, 0
      %p154 = por %p152, %p153
      %p155 = scmp.ne.s32.totalorder %s141, %s142
      %p156 = scmp.eq.s32.totalorder %s19, 1
      %p157 = por %p155, %p156
      %p159 = scmp.ne.s32.totalorder %s142, %s158
      %p160 = scmp.eq.s32.totalorder %s19, 0
      %p161 = por %p159, %p160
      %p162 = scmp.le.s32.totalorder 1, %s13
      %p163 = scmp.lt.s32.totalorder %s13, 3
      %p164 = pnand %p162, %p163
      %p165 = pneg %p164
      // Predicated region
      $region9: #{sgc_classifier.2} parent=5 // pred_check
        _
      $region10: #{sgc_classifier.2} parent=5 // pred_check_branch
        %167 = sbr.rel (%p164) target = $region12
      $region11: #{sgc_classifier.2} parent=5 // pred_region
        %s168 = ssub.s32 %s13, 1
        // Predicated region
        $region13: #{sgc_classifier.2} parent=11 // pred_check
          %p169 = pneg %p34
        $region14: #{sgc_classifier.2} parent=11 // pred_check_branch
          %171 = sbr.rel (%p169) target = $region16
        $region15: #{sgc_classifier.2} parent=11 // pred_region
          %s173 = ssub.s32 1024, 1024
          %174 = vsyncadd [#allocation3], %s173
          %s175 = sshll.u32 [#allocation2], 4
          %s176 = int_to_ptr.vmem [resolvable:$true] %s175
          %181 = dma.hbm_to_vmem [thread:$0]  %s0, 1024, %s176, [#allocation3], 128, 128, 8
        $region16: #{sgc_classifier.2} parent=11 // pred_fallthru
          _
        // Predicated region
        $region17: #{sgc_classifier.2} parent=11 // pred_check
          %p182 = pneg %p55
        $region18: #{sgc_classifier.2} parent=11 // pred_check_branch
          %184 = sbr.rel (%p182) target = $region20
        $region19: #{sgc_classifier.2} parent=11 // pred_region
          _
        $region20: #{sgc_classifier.2} parent=11 // pred_fallthru
          _
        // Predicated region
        $region21: #{sgc_classifier.2} parent=11 // pred_check
          %p185 = pneg %p76
        $region22: #{sgc_classifier.2} parent=11 // pred_check_branch
          %187 = sbr.rel (%p185) target = $region24
        $region23: #{sgc_classifier.2} parent=11 // pred_region
          %s189 = ssub.s32 32, 32
          %190 = vsyncadd [#allocation5], %s189
          %s192 = sshll.u32 [#allocation4], 4
          %s193 = int_to_ptr.vmem [resolvable:$true] %s192
          %195 = dma.hbm_to_vmem [thread:$0]  %s2, 32, %s193, [#allocation5]
        $region24: #{sgc_classifier.2} parent=11 // pred_fallthru
          _
      $region12: #{sgc_classifier.2} parent=5 // pred_fallthru
        _
      %p196 = scmp.lt.s32.totalorder %s13, 2
      // Predicated region
      $region25: #{sgc_classifier.2} parent=5 // pred_check
        %p197 = pneg %p196
      $region26: #{sgc_classifier.2} parent=5 // pred_check_branch
        %199 = sbr.rel (%p197) target = $region28
      $region27: #{sgc_classifier.2} parent=5 // pred_region
        // Predicated region
        $region29: #{sgc_classifier.2} parent=27 // pred_check
          %p200 = pneg %p96
        $region30: #{sgc_classifier.2} parent=27 // pred_check_branch
          %202 = sbr.rel (%p200) target = $region32
        $region31: #{sgc_classifier.2} parent=27 // pred_region
          %s203 = sand.u32 %s13, 1
          %s204 = scalar_lea.sflag [#allocation3], %s203
          %s205 = sand.u32 %s86, 1
          %s206 = smul.addr %s205, 32
          %s207 = scalar_lea.vmem [#allocation6], %s206
          %s208 = smul.u32 4, %s13
          %s210 = ssub.s32 512, 512
          %211 = vsyncadd %s204, %s210
          %s212 = smul.addr %s208, 128
          %s213 = scalar_lea.hbm %s3, %s212
          %s215 = sshll.u32 %s207, 4
          %s216 = int_to_ptr.vmem [resolvable:$true] %s215
          %218 = dma.hbm_to_vmem [thread:$0]  %s213, 512, %s216, %s204
        $region32: #{sgc_classifier.2} parent=27 // pred_fallthru
          _
        // Predicated region
        $region33: #{sgc_classifier.2} parent=27 // pred_check
          %p219 = pneg %p122
        $region34: #{sgc_classifier.2} parent=27 // pred_check_branch
          %221 = sbr.rel (%p219) target = $region36
        $region35: #{sgc_classifier.2} parent=27 // pred_region
          %s222 = sand.u32 %s13, 1
          %s223 = scalar_lea.sflag [#allocation3], %s222
          %s224 = sand.u32 %s112, 1
          %s225 = smul.addr %s224, 4
          %s226 = scalar_lea.vmem [#allocation7], %s225
          %s227 = smul.u32 4, %s13
          %s229 = ssub.s32 64, 64
          %230 = vsyncadd %s223, %s229
          %s231 = smul.addr %s227, 16
          %s232 = scalar_lea.hbm %s4, %s231
          %s234 = sshll.u32 %s226, 4
          %s235 = int_to_ptr.vmem [resolvable:$true] %s234
          %237 = dma.hbm_to_vmem [thread:$0]  %s232, 64, %s235, %s223
        $region36: #{sgc_classifier.2} parent=27 // pred_fallthru
          _
      $region28: #{sgc_classifier.2} parent=5 // pred_fallthru
        _
      %p238 = scmp.le.s32.totalorder 1, %s13
      %p239 = scmp.lt.s32.totalorder %s13, 3
      %p240 = pnand %p238, %p239
      %p241 = pneg %p240
      // Predicated region
      $region37: #{sgc_classifier.2} parent=5 // pred_check
        _
      $region38: #{sgc_classifier.2} parent=5 // pred_check_branch
        %243 = sbr.rel (%p240) target = $region40
      $region39: #{sgc_classifier.2} parent=5 // pred_region
        %s244 = ssub.s32 %s13, 1
        // Predicated region
        $region41: #{sgc_classifier.2} parent=39 // pred_check
          %p245 = pneg %p34
        $region42: #{sgc_classifier.2} parent=39 // pred_check_branch
          %247 = sbr.rel (%p245) target = $region44
        $region43: #{sgc_classifier.2} parent=39 // pred_region
          %248 = dma.done [#allocation3], 1024
        $region44: #{sgc_classifier.2} parent=39 // pred_fallthru
          _
        // Predicated region
        $region45: #{sgc_classifier.2} parent=39 // pred_check
          %p249 = pneg %p76
        $region46: #{sgc_classifier.2} parent=39 // pred_check_branch
          %251 = sbr.rel (%p249) target = $region48
        $region47: #{sgc_classifier.2} parent=39 // pred_region
          %252 = dma.done [#allocation5], 32
        $region48: #{sgc_classifier.2} parent=39 // pred_fallthru
          _
        %s253 = sand.u32 %s18, 1
        %s254 = scalar_lea.sflag [#allocation3], %s253
        %s255 = sand.u32 %s89, 1
        %s256 = smul.addr %s255, 32
        %s257 = scalar_lea.vmem [#allocation6], %s256
        // Predicated region
        $region49: #{sgc_classifier.2} parent=39 // pred_check
          %p258 = pneg %p102
        $region50: #{sgc_classifier.2} parent=39 // pred_check_branch
          %260 = sbr.rel (%p258) target = $region52
        $region51: #{sgc_classifier.2} parent=39 // pred_region
          %261 = dma.done %s254, 512
        $region52: #{sgc_classifier.2} parent=39 // pred_fallthru
          _
        %s262 = sand.u32 %s18, 1
        %s263 = scalar_lea.sflag [#allocation3], %s262
        %s264 = sand.u32 %s115, 1
        %s265 = smul.addr %s264, 4
        %s266 = scalar_lea.vmem [#allocation7], %s265
        // Predicated region
        $region53: #{sgc_classifier.2} parent=39 // pred_check
          %p267 = pneg %p128
        $region54: #{sgc_classifier.2} parent=39 // pred_check_branch
          %269 = sbr.rel (%p267) target = $region56
        $region55: #{sgc_classifier.2} parent=39 // pred_region
          %270 = dma.done %s263, 64
        $region56: #{sgc_classifier.2} parent=39 // pred_fallthru
          _
        %p271 = pneg %p34
        %p272 = pneg %p31
        %p273 = pneg %p55
        %p274 = pneg %p52
        %p275 = pneg %p76
        %p276 = pneg %p73
        %s277 = sand.u32 %s18, 1
        %s278 = scalar_lea.sflag [#allocation3], %s277
        %s279 = sand.u32 %s89, 1
        %s280 = smul.addr %s279, 32
        %s281 = scalar_lea.vmem [#allocation6], %s280
        %p282 = pneg %p102
        %p283 = pneg %p99
        %s284 = sand.u32 %s18, 1
        %s285 = scalar_lea.sflag [#allocation3], %s284
        %s286 = sand.u32 %s115, 1
        %s287 = smul.addr %s286, 4
        %s288 = scalar_lea.vmem [#allocation7], %s287
        %p289 = pneg %p128
        %p290 = pneg %p125
        %p291 = pneg %p154
        %p292 = pneg %p151
        %s293 = smul.u32 4, %s18
        %p294 = scmp.lt.s32.totalorder %s293, 7
        %s295 = scalar_select %p294, %s293, 7
        %s296 = smul.addr %s295, 2
        %s297 = scalar_lea.vmem %s5, %s296
        %s298 = smul.u32 4, %s18
        %s299 = smul.u32 4, %s18
        %s300 = smul.u32 4, %s18
        %p301 = scmp.lt.s32.totalorder %s300, 7
        %s302 = scalar_select %p301, %s300, 7
        %s303 = smul.addr %s302, 2
        %s304 = scalar_lea.vmem %s5, %s303
        %s305 = smul.u32 4, %s18
        %v306 = vld [vmem:[%s1] sm:$0xff]
        %v307 = vld [vmem:[%s1 + $0x8] sm:$0xff]
        %v308 = vld [vmem:[%s1 + $0x10] sm:$0xff]
        %v309 = vld [vmem:[%s1 + $0x18] sm:$0xff]
        %v310 = vld [vmem:[%s1 + $0x20] sm:$0xff]
        %v311 = vld [vmem:[%s1 + $0x28] sm:$0xff]
        %v312 = vld [vmem:[%s1 + $0x30] sm:$0xff]
        %v313 = vld [vmem:[%s1 + $0x38] sm:$0xff]
        %v314 = vld [vmem:[%s257] sm:$0xff]
        %v315 = vld [vmem:[%s257 + $0x8] sm:$0xff]
        %v316 = vld [vmem:[%s257 + $0x10] sm:$0xff]
        %v317 = vld [vmem:[%s257 + $0x18] sm:$0xff]
        %vm318 = vcmask 64512
        %v320 = vsel %vm318, %v306, 0
        %v323 = vsel %vm318, %v307, 0
        %v326 = vsel %vm318, %v308, 0
        %v329 = vsel %vm318, %v309, 0
        %v332 = vsel %vm318, %v310, 0
        %v335 = vsel %vm318, %v311, 0
        %v338 = vsel %vm318, %v312, 0
        %v341 = vsel %vm318, %v313, 0
        %343 = vmatprep.subr.mxu0 %v315
        %344 = vmatpush1.msra.mxu0 %v314
        %345 = vmatprep.subr.mxu0 0.0
        %346 = vmatpush1.msra.mxu0 0.0
        %347 = vmatprep.subr.mxu0 0.0
        %348 = vmatpush1.msra.mxu0 0.0
        %349 = vmatprep.subr.mxu0 0.0
        %350 = vmatpush1.msra.mxu0 0.0
        %351 = vmatprep.subr.mxu0 0.0
        %352 = vmatpush1.msra.mxu0 0.0
        %353 = vmatprep.subr.mxu0 0.0
        %354 = vmatpush1.msra.mxu0 0.0
        %355 = vmatprep.subr.mxu0 0.0
        %356 = vmatpush1.msra.mxu0 0.0
        %357 = vmatprep.subr.mxu0 0.0
        %358 = vmatpush1.msra.mxu0 0.0
        %359 = vmatprep.subr.mxu0 0.0
        %360 = vmatpush1.msra.mxu0 0.0
        %361 = vmatprep.subr.mxu0 0.0
        %362 = vmatpush1.msra.mxu0 0.0
        %363 = vmatprep.subr.mxu0 0.0
        %364 = vmatpush1.msra.mxu0 0.0
        %365 = vmatprep.subr.mxu0 0.0
        %366 = vmatpush1.msra.mxu0 0.0
        %367 = vmatprep.subr.mxu0 0.0
        %368 = vmatpush1.msra.mxu0 0.0
        %369 = vmatprep.subr.mxu0 0.0
        %370 = vmatpush1.msra.mxu0 0.0
        %371 = vmatprep.subr.mxu0 0.0
        %372 = vmatpush1.msra.mxu0 0.0
        %373 = vmatprep.subr.mxu0 0.0
        %374 = vmatpush1.msra.mxu0 0.0
        %375 = vmatprep.subr.mxu0 0.0
        %376 = vmatpush1.msra.mxu0 0.0
        %377 = vmatprep.subr.mxu0 0.0
        %378 = vmatpush1.msra.mxu0 0.0
        %379 = vmatprep.subr.mxu0 0.0
        %380 = vmatpush1.msra.mxu0 0.0
        %381 = vmatprep.subr.mxu0 0.0
        %382 = vmatpush1.msra.mxu0 0.0
        %383 = vmatprep.subr.mxu0 0.0
        %384 = vmatpush1.msra.mxu0 0.0
        %385 = vmatprep.subr.mxu0 0.0
        %386 = vmatpush1.msra.mxu0 0.0
        %387 = vmatprep.subr.mxu0 0.0
        %388 = vmatpush1.msra.mxu0 0.0
        %389 = vmatprep.subr.mxu0 0.0
        %390 = vmatpush1.msra.mxu0 0.0
        %391 = vmatprep.subr.mxu0 0.0
        %392 = vmatpush1.msra.mxu0 0.0
        %393 = vmatprep.subr.mxu0 0.0
        %394 = vmatpush1.msra.mxu0 0.0
        %395 = vmatprep.subr.mxu0 0.0
        %396 = vmatpush1.msra.mxu0 0.0
        %397 = vmatprep.subr.mxu0 0.0
        %398 = vmatpush1.msra.mxu0 0.0
        %399 = vmatprep.subr.mxu0 0.0
        %400 = vmatpush1.msra.mxu0 0.0
        %401 = vmatprep.subr.mxu0 0.0
        %402 = vmatpush1.msra.mxu0 0.0
        %403 = vmatprep.subr.mxu0 0.0
        %404 = vmatpush1.msra.mxu0 0.0
        %405 = vmatprep.subr.mxu0 0.0
        %406 = vmatpush1.msra.mxu0 0.0
        %407 = vmatprep.mubr.f32.mxu0 0.0
        %408 = vmatmul.mubr.f32.gmra.mrb[0].mxu0 %v320
        %v409 = vpop.f32.mrb[0].mxu0
        %v410 = vadd.f32 0.0, %v409
        %v411 = vpop.f32.mrb[0].mxu0
        %v412 = vadd.f32 0.0, %v411
        %413 = vmatprep.mubr.f32.mxu0 0.0
        %414 = vmatmul.mubr.f32.gmra.mrb[0].mxu0 %v323
        %v415 = vpop.f32.mrb[0].mxu0
        %v416 = vadd.f32 0.0, %v415
        %v417 = vpop.f32.mrb[0].mxu0
        %v418 = vadd.f32 0.0, %v417
        %419 = vmatprep.mubr.f32.mxu0 0.0
        %420 = vmatmul.mubr.f32.gmra.mrb[0].mxu0 %v326
        %v421 = vpop.f32.mrb[0].mxu0
        %v422 = vadd.f32 0.0, %v421
        %v423 = vpop.f32.mrb[0].mxu0
        %v424 = vadd.f32 0.0, %v423
        %425 = vmatprep.mubr.f32.mxu0 0.0
        %426 = vmatmul.mubr.f32.gmra.mrb[0].mxu0 %v329
        %v427 = vpop.f32.mrb[0].mxu0
        %v428 = vadd.f32 0.0, %v427
        %v429 = vpop.f32.mrb[0].mxu0
        %v430 = vadd.f32 0.0, %v429
        %431 = vmatprep.mubr.f32.mxu0 0.0
        %432 = vmatmul.mubr.f32.gmra.mrb[0].mxu0 %v332
        %v433 = vpop.f32.mrb[0].mxu0
        %v434 = vadd.f32 0.0, %v433
        %v435 = vpop.f32.mrb[0].mxu0
        %v436 = vadd.f32 0.0, %v435
        %437 = vmatprep.mubr.f32.mxu0 0.0
        %438 = vmatmul.mubr.f32.gmra.mrb[0].mxu0 %v335
        %v439 = vpop.f32.mrb[0].mxu0
        %v440 = vadd.f32 0.0, %v439
        %v441 = vpop.f32.mrb[0].mxu0
        %v442 = vadd.f32 0.0, %v441
        %443 = vmatprep.mubr.f32.mxu0 0.0
        %444 = vmatmul.mubr.f32.gmra.mrb[0].mxu0 %v338
        %v445 = vpop.f32.mrb[0].mxu0
        %v446 = vadd.f32 0.0, %v445
        %v447 = vpop.f32.mrb[0].mxu0
        %v448 = vadd.f32 0.0, %v447
        %449 = vmatprep.mubr.f32.mxu0 0.0
        %450 = vmatmul.mubr.f32.gmra.mrb[0].mxu0 %v341
        %v451 = vpop.f32.mrb[0].mxu0
        %v452 = vadd.f32 0.0, %v451
        %v453 = vpop.f32.mrb[0].mxu0
        %v454 = vadd.f32 0.0, %v453
        %455 = vdwg.mxu0
        %456 = vmatprep.subr.mxu0 %v317
        %457 = vmatpush1.msra.mxu0 %v316
        %458 = vmatprep.subr.mxu0 0.0
        %459 = vmatpush1.msra.mxu0 0.0
        %460 = vmatprep.subr.mxu0 0.0
        %461 = vmatpush1.msra.mxu0 0.0
        %462 = vmatprep.subr.mxu0 0.0
        %463 = vmatpush1.msra.mxu0 0.0
        %464 = vmatprep.subr.mxu0 0.0
        %465 = vmatpush1.msra.mxu0 0.0
        %466 = vmatprep.subr.mxu0 0.0
        %467 = vmatpush1.msra.mxu0 0.0
        %468 = vmatprep.subr.mxu0 0.0
        %469 = vmatpush1.msra.mxu0 0.0
        %470 = vmatprep.subr.mxu0 0.0
        %471 = vmatpush1.msra.mxu0 0.0
        %472 = vmatprep.subr.mxu0 0.0
        %473 = vmatpush1.msra.mxu0 0.0
        %474 = vmatprep.subr.mxu0 0.0
        %475 = vmatpush1.msra.mxu0 0.0
        %476 = vmatprep.subr.mxu0 0.0
        %477 = vmatpush1.msra.mxu0 0.0
        %478 = vmatprep.subr.mxu0 0.0
        %479 = vmatpush1.msra.mxu0 0.0
        %480 = vmatprep.subr.mxu0 0.0
        %481 = vmatpush1.msra.mxu0 0.0
        %482 = vmatprep.subr.mxu0 0.0
        %483 = vmatpush1.msra.mxu0 0.0
        %484 = vmatprep.subr.mxu0 0.0
        %485 = vmatpush1.msra.mxu0 0.0
        %486 = vmatprep.subr.mxu0 0.0
        %487 = vmatpush1.msra.mxu0 0.0
        %488 = vmatprep.subr.mxu0 0.0
        %489 = vmatpush1.msra.mxu0 0.0
        %490 = vmatprep.subr.mxu0 0.0
        %491 = vmatpush1.msra.mxu0 0.0
        %492 = vmatprep.subr.mxu0 0.0
        %493 = vmatpush1.msra.mxu0 0.0
        %494 = vmatprep.subr.mxu0 0.0
        %495 = vmatpush1.msra.mxu0 0.0
        %496 = vmatprep.subr.mxu0 0.0
        %497 = vmatpush1.msra.mxu0 0.0
        %498 = vmatprep.subr.mxu0 0.0
        %499 = vmatpush1.msra.mxu0 0.0
        %500 = vmatprep.subr.mxu0 0.0
        %501 = vmatpush1.msra.mxu0 0.0
        %502 = vmatprep.subr.mxu0 0.0
        %503 = vmatpush1.msra.mxu0 0.0
        %504 = vmatprep.subr.mxu0 0.0
        %505 = vmatpush1.msra.mxu0 0.0
        %506 = vmatprep.subr.mxu0 0.0
        %507 = vmatpush1.msra.mxu0 0.0
        %508 = vmatprep.subr.mxu0 0.0
        %509 = vmatpush1.msra.mxu0 0.0
        %510 = vmatprep.subr.mxu0 0.0
        %511 = vmatpush1.msra.mxu0 0.0
        %512 = vmatprep.subr.mxu0 0.0
        %513 = vmatpush1.msra.mxu0 0.0
        %514 = vmatprep.subr.mxu0 0.0
        %515 = vmatpush1.msra.mxu0 0.0
        %516 = vmatprep.subr.mxu0 0.0
        %517 = vmatpush1.msra.mxu0 0.0
        %518 = vmatprep.subr.mxu0 0.0
        %519 = vmatpush1.msra.mxu0 0.0
        %520 = vmatprep.mubr.f32.mxu0 0.0
        %521 = vmatmul.mubr.f32.gmra.mrb[0].mxu0 %v320
        %v522 = vpop.f32.mrb[0].mxu0
        %v523 = vadd.f32 0.0, %v522
        %v524 = vpop.f32.mrb[0].mxu0
        %v525 = vadd.f32 0.0, %v524
        %526 = vmatprep.mubr.f32.mxu0 0.0
        %527 = vmatmul.mubr.f32.gmra.mrb[0].mxu0 %v323
        %v528 = vpop.f32.mrb[0].mxu0
        %v529 = vadd.f32 0.0, %v528
        %v530 = vpop.f32.mrb[0].mxu0
        %v531 = vadd.f32 0.0, %v530
        %532 = vmatprep.mubr.f32.mxu0 0.0
        %533 = vmatmul.mubr.f32.gmra.mrb[0].mxu0 %v326
        %v534 = vpop.f32.mrb[0].mxu0
        %v535 = vadd.f32 0.0, %v534
        %v536 = vpop.f32.mrb[0].mxu0
        %v537 = vadd.f32 0.0, %v536
        %538 = vmatprep.mubr.f32.mxu0 0.0
        %539 = vmatmul.mubr.f32.gmra.mrb[0].mxu0 %v329
        %v540 = vpop.f32.mrb[0].mxu0
        %v541 = vadd.f32 0.0, %v540
        %v542 = vpop.f32.mrb[0].mxu0
        %v543 = vadd.f32 0.0, %v542
        %544 = vmatprep.mubr.f32.mxu0 0.0
        %545 = vmatmul.mubr.f32.gmra.mrb[0].mxu0 %v332
        %v546 = vpop.f32.mrb[0].mxu0
        %v547 = vadd.f32 0.0, %v546
        %v548 = vpop.f32.mrb[0].mxu0
        %v549 = vadd.f32 0.0, %v548
        %550 = vmatprep.mubr.f32.mxu0 0.0
        %551 = vmatmul.mubr.f32.gmra.mrb[0].mxu0 %v335
        %v552 = vpop.f32.mrb[0].mxu0
        %v553 = vadd.f32 0.0, %v552
        %v554 = vpop.f32.mrb[0].mxu0
        %v555 = vadd.f32 0.0, %v554
        %556 = vmatprep.mubr.f32.mxu0 0.0
        %557 = vmatmul.mubr.f32.gmra.mrb[0].mxu0 %v338
        %v558 = vpop.f32.mrb[0].mxu0
        %v559 = vadd.f32 0.0, %v558
        %v560 = vpop.f32.mrb[0].mxu0
        %v561 = vadd.f32 0.0, %v560
        %562 = vmatprep.mubr.f32.mxu0 0.0
        %563 = vmatmul.mubr.f32.gmra.mrb[0].mxu0 %v341
        %v564 = vpop.f32.mrb[0].mxu0
        %v565 = vadd.f32 0.0, %v564
        %v566 = vpop.f32.mrb[0].mxu0
        %v567 = vadd.f32 0.0, %v566
        %568 = vdwg.mxu0
        %v569 = vld [vmem:[#allocation2] sm:$0xff]
        %v570 = vld [vmem:[#allocation2 + $0x8] sm:$0xff]
        %v571 = vld [vmem:[#allocation2 + $0x10] sm:$0xff]
        %v572 = vld [vmem:[#allocation2 + $0x18] sm:$0xff]
        %v573 = vld [vmem:[#allocation2 + $0x20] sm:$0xff]
        %v574 = vld [vmem:[#allocation2 + $0x28] sm:$0xff]
        %v575 = vld [vmem:[#allocation2 + $0x30] sm:$0xff]
        %v576 = vld [vmem:[#allocation2 + $0x38] sm:$0xff]
        %vm577 = vcmask 523264
        %v579 = vsel %vm577, %v569, 0
        %v582 = vsel %vm577, %v570, 0
        %v585 = vsel %vm577, %v571, 0
        %v588 = vsel %vm577, %v572, 0
        %v591 = vsel %vm577, %v573, 0
        %v594 = vsel %vm577, %v574, 0
        %v597 = vsel %vm577, %v575, 0
        %v600 = vsel %vm577, %v576, 0
        %602 = vmatprep.subr.mxu0 %v412
        %603 = vmatpush1.msra.mxu0 %v410
        %604 = vmatprep.subr.mxu0 %v418
        %605 = vmatpush1.msra.mxu0 %v416
        %606 = vmatprep.subr.mxu0 %v424
        %607 = vmatpush1.msra.mxu0 %v422
        %608 = vmatprep.subr.mxu0 %v430
        %609 = vmatpush1.msra.mxu0 %v428
        %610 = vmatprep.subr.mxu0 %v436
        %611 = vmatpush1.msra.mxu0 %v434
        %612 = vmatprep.subr.mxu0 %v442
        %613 = vmatpush1.msra.mxu0 %v440
        %614 = vmatprep.subr.mxu0 %v448
        %615 = vmatpush1.msra.mxu0 %v446
        %616 = vmatprep.subr.mxu0 %v454
        %617 = vmatpush1.msra.mxu0 %v452
        %618 = vmatprep.subr.mxu0 0.0
        %619 = vmatpush1.msra.mxu0 0.0
        %620 = vmatprep.subr.mxu0 0.0
        %621 = vmatpush1.msra.mxu0 0.0
        %622 = vmatprep.subr.mxu0 0.0
        %623 = vmatpush1.msra.mxu0 0.0
        %624 = vmatprep.subr.mxu0 0.0
        %625 = vmatpush1.msra.mxu0 0.0
        %626 = vmatprep.subr.mxu0 0.0
        %627 = vmatpush1.msra.mxu0 0.0
        %628 = vmatprep.subr.mxu0 0.0
        %629 = vmatpush1.msra.mxu0 0.0
        %630 = vmatprep.subr.mxu0 0.0
        %631 = vmatpush1.msra.mxu0 0.0
        %632 = vmatprep.subr.mxu0 0.0
        %633 = vmatpush1.msra.mxu0 0.0
        %634 = vmatprep.subr.mxu0 0.0
        %635 = vmatpush1.msra.mxu0 0.0
        %636 = vmatprep.subr.mxu0 0.0
        %637 = vmatpush1.msra.mxu0 0.0
        %638 = vmatprep.subr.mxu0 0.0
        %639 = vmatpush1.msra.mxu0 0.0
        %640 = vmatprep.subr.mxu0 0.0
        %641 = vmatpush1.msra.mxu0 0.0
        %642 = vmatprep.subr.mxu0 0.0
        %643 = vmatpush1.msra.mxu0 0.0
        %644 = vmatprep.subr.mxu0 0.0
        %645 = vmatpush1.msra.mxu0 0.0
        %646 = vmatprep.subr.mxu0 0.0
        %647 = vmatpush1.msra.mxu0 0.0
        %648 = vmatprep.subr.mxu0 0.0
        %649 = vmatpush1.msra.mxu0 0.0
        %650 = vmatprep.subr.mxu0 0.0
        %651 = vmatpush1.msra.mxu0 0.0
        %652 = vmatprep.subr.mxu0 0.0
        %653 = vmatpush1.msra.mxu0 0.0
        %654 = vmatprep.subr.mxu0 0.0
        %655 = vmatpush1.msra.mxu0 0.0
        %656 = vmatprep.subr.mxu0 0.0
        %657 = vmatpush1.msra.mxu0 0.0
        %658 = vmatprep.subr.mxu0 0.0
        %659 = vmatpush1.msra.mxu0 0.0
        %660 = vmatprep.subr.mxu0 0.0
        %661 = vmatpush1.msra.mxu0 0.0
        %662 = vmatprep.subr.mxu0 0.0
        %663 = vmatpush1.msra.mxu0 0.0
        %664 = vmatprep.subr.mxu0 0.0
        %665 = vmatpush1.msra.mxu0 0.0
        %666 = vmatprep.mubr.f32.mxu0 0.0
        %667 = vmatmul.mubr.f32.gmra.mrb[0].mxu0 %v579
        %v668 = vpop.f32.mrb[0].mxu0
        %v669 = vadd.f32 0.0, %v668
        %v670 = vpop.f32.mrb[0].mxu0
        %v671 = vadd.f32 0.0, %v670
        %672 = vmatprep.mubr.f32.mxu0 0.0
        %673 = vmatmul.mubr.f32.gmra.mrb[0].mxu0 %v582
        %v674 = vpop.f32.mrb[0].mxu0
        %v675 = vadd.f32 0.0, %v674
        %v676 = vpop.f32.mrb[0].mxu0
        %v677 = vadd.f32 0.0, %v676
        %678 = vmatprep.mubr.f32.mxu0 0.0
        %679 = vmatmul.mubr.f32.gmra.mrb[0].mxu0 %v585
        %v680 = vpop.f32.mrb[0].mxu0
        %v681 = vadd.f32 0.0, %v680
        %v682 = vpop.f32.mrb[0].mxu0
        %v683 = vadd.f32 0.0, %v682
        %684 = vmatprep.mubr.f32.mxu0 0.0
        %685 = vmatmul.mubr.f32.gmra.mrb[0].mxu0 %v588
        %v686 = vpop.f32.mrb[0].mxu0
        %v687 = vadd.f32 0.0, %v686
        %v688 = vpop.f32.mrb[0].mxu0
        %v689 = vadd.f32 0.0, %v688
        %690 = vmatprep.mubr.f32.mxu0 0.0
        %691 = vmatmul.mubr.f32.gmra.mrb[0].mxu0 %v591
        %v692 = vpop.f32.mrb[0].mxu0
        %v693 = vadd.f32 0.0, %v692
        %v694 = vpop.f32.mrb[0].mxu0
        %v695 = vadd.f32 0.0, %v694
        %696 = vmatprep.mubr.f32.mxu0 0.0
        %697 = vmatmul.mubr.f32.gmra.mrb[0].mxu0 %v594
        %v698 = vpop.f32.mrb[0].mxu0
        %v699 = vadd.f32 0.0, %v698
        %v700 = vpop.f32.mrb[0].mxu0
        %v701 = vadd.f32 0.0, %v700
        %702 = vmatprep.mubr.f32.mxu0 0.0
        %703 = vmatmul.mubr.f32.gmra.mrb[0].mxu0 %v597
        %v704 = vpop.f32.mrb[0].mxu0
        %v705 = vadd.f32 0.0, %v704
        %v706 = vpop.f32.mrb[0].mxu0
        %v707 = vadd.f32 0.0, %v706
        %708 = vmatprep.mubr.f32.mxu0 0.0
        %709 = vmatmul.mubr.f32.gmra.mrb[0].mxu0 %v600
        %v710 = vpop.f32.mrb[0].mxu0
        %v711 = vadd.f32 0.0, %v710
        %v712 = vpop.f32.mrb[0].mxu0
        %v713 = vadd.f32 0.0, %v712
        %714 = vdwg.mxu0
        %715 = vmatprep.subr.mxu0 %v525
        %716 = vmatpush1.msra.mxu0 %v523
        %717 = vmatprep.subr.mxu0 %v531
        %718 = vmatpush1.msra.mxu0 %v529
        %719 = vmatprep.subr.mxu0 %v537
        %720 = vmatpush1.msra.mxu0 %v535
        %721 = vmatprep.subr.mxu0 %v543
        %722 = vmatpush1.msra.mxu0 %v541
        %723 = vmatprep.subr.mxu0 %v549
        %724 = vmatpush1.msra.mxu0 %v547
        %725 = vmatprep.subr.mxu0 %v555
        %726 = vmatpush1.msra.mxu0 %v553
        %727 = vmatprep.subr.mxu0 %v561
        %728 = vmatpush1.msra.mxu0 %v559
        %729 = vmatprep.subr.mxu0 %v567
        %730 = vmatpush1.msra.mxu0 %v565
        %731 = vmatprep.subr.mxu0 0.0
        %732 = vmatpush1.msra.mxu0 0.0
        %733 = vmatprep.subr.mxu0 0.0
        %734 = vmatpush1.msra.mxu0 0.0
        %735 = vmatprep.subr.mxu0 0.0
        %736 = vmatpush1.msra.mxu0 0.0
        %737 = vmatprep.subr.mxu0 0.0
        %738 = vmatpush1.msra.mxu0 0.0
        %739 = vmatprep.subr.mxu0 0.0
        %740 = vmatpush1.msra.mxu0 0.0
        %741 = vmatprep.subr.mxu0 0.0
        %742 = vmatpush1.msra.mxu0 0.0
        %743 = vmatprep.subr.mxu0 0.0
        %744 = vmatpush1.msra.mxu0 0.0
        %745 = vmatprep.subr.mxu0 0.0
        %746 = vmatpush1.msra.mxu0 0.0
        %747 = vmatprep.subr.mxu0 0.0
        %748 = vmatpush1.msra.mxu0 0.0
        %749 = vmatprep.subr.mxu0 0.0
        %750 = vmatpush1.msra.mxu0 0.0
        %751 = vmatprep.subr.mxu0 0.0
        %752 = vmatpush1.msra.mxu0 0.0
        %753 = vmatprep.subr.mxu0 0.0
        %754 = vmatpush1.msra.mxu0 0.0
        %755 = vmatprep.subr.mxu0 0.0
        %756 = vmatpush1.msra.mxu0 0.0
        %757 = vmatprep.subr.mxu0 0.0
        %758 = vmatpush1.msra.mxu0 0.0
        %759 = vmatprep.subr.mxu0 0.0
        %760 = vmatpush1.msra.mxu0 0.0
        %761 = vmatprep.subr.mxu0 0.0
        %762 = vmatpush1.msra.mxu0 0.0
        %763 = vmatprep.subr.mxu0 0.0
        %764 = vmatpush1.msra.mxu0 0.0
        %765 = vmatprep.subr.mxu0 0.0
        %766 = vmatpush1.msra.mxu0 0.0
        %767 = vmatprep.subr.mxu0 0.0
        %768 = vmatpush1.msra.mxu0 0.0
        %769 = vmatprep.subr.mxu0 0.0
        %770 = vmatpush1.msra.mxu0 0.0
        %771 = vmatprep.subr.mxu0 0.0
        %772 = vmatpush1.msra.mxu0 0.0
        %773 = vmatprep.subr.mxu0 0.0
        %774 = vmatpush1.msra.mxu0 0.0
        %775 = vmatprep.subr.mxu0 0.0
        %776 = vmatpush1.msra.mxu0 0.0
        %777 = vmatprep.subr.mxu0 0.0
        %778 = vmatpush1.msra.mxu0 0.0
        %779 = vmatprep.mubr.f32.mxu0 0.0
        %780 = vmatmul.mubr.f32.gmra.mrb[0].mxu0 %v579
        %v781 = vpop.f32.mrb[0].mxu0
        %v782 = vadd.f32 0.0, %v781
        %v783 = vpop.f32.mrb[0].mxu0
        %v784 = vadd.f32 0.0, %v783
        %785 = vmatprep.mubr.f32.mxu0 0.0
        %786 = vmatmul.mubr.f32.gmra.mrb[0].mxu0 %v582
        %v787 = vpop.f32.mrb[0].mxu0
        %v788 = vadd.f32 0.0, %v787
        %v789 = vpop.f32.mrb[0].mxu0
        %v790 = vadd.f32 0.0, %v789
        %791 = vmatprep.mubr.f32.mxu0 0.0
        %792 = vmatmul.mubr.f32.gmra.mrb[0].mxu0 %v585
        %v793 = vpop.f32.mrb[0].mxu0
        %v794 = vadd.f32 0.0, %v793
        %v795 = vpop.f32.mrb[0].mxu0
        %v796 = vadd.f32 0.0, %v795
        %797 = vmatprep.mubr.f32.mxu0 0.0
        %798 = vmatmul.mubr.f32.gmra.mrb[0].mxu0 %v588
        %v799 = vpop.f32.mrb[0].mxu0
        %v800 = vadd.f32 0.0, %v799
        %v801 = vpop.f32.mrb[0].mxu0
        %v802 = vadd.f32 0.0, %v801
        %803 = vmatprep.mubr.f32.mxu0 0.0
        %804 = vmatmul.mubr.f32.gmra.mrb[0].mxu0 %v591
        %v805 = vpop.f32.mrb[0].mxu0
        %v806 = vadd.f32 0.0, %v805
        %v807 = vpop.f32.mrb[0].mxu0
        %v808 = vadd.f32 0.0, %v807
        %809 = vmatprep.mubr.f32.mxu0 0.0
        %810 = vmatmul.mubr.f32.gmra.mrb[0].mxu0 %v594
        %v811 = vpop.f32.mrb[0].mxu0
        %v812 = vadd.f32 0.0, %v811
        %v813 = vpop.f32.mrb[0].mxu0
        %v814 = vadd.f32 0.0, %v813
        %815 = vmatprep.mubr.f32.mxu0 0.0
        %816 = vmatmul.mubr.f32.gmra.mrb[0].mxu0 %v597
        %v817 = vpop.f32.mrb[0].mxu0
        %v818 = vadd.f32 0.0, %v817
        %v819 = vpop.f32.mrb[0].mxu0
        %v820 = vadd.f32 0.0, %v819
        %821 = vmatprep.mubr.f32.mxu0 0.0
        %822 = vmatmul.mubr.f32.gmra.mrb[0].mxu0 %v600
        %v823 = vpop.f32.mrb[0].mxu0
        %v824 = vadd.f32 0.0, %v823
        %v825 = vpop.f32.mrb[0].mxu0
        %v826 = vadd.f32 0.0, %v825
        %827 = vdwg.mxu0
        %828 = vmatprep.subr.mxu0 %v671
        %829 = vmatpush1.msra.mxu0 %v669
        %830 = vmatprep.subr.mxu0 %v677
        %831 = vmatpush1.msra.mxu0 %v675
        %832 = vmatprep.subr.mxu0 %v683
        %833 = vmatpush1.msra.mxu0 %v681
        %834 = vmatprep.subr.mxu0 %v689
        %835 = vmatpush1.msra.mxu0 %v687
        %836 = vmatprep.subr.mxu0 %v695
        %837 = vmatpush1.msra.mxu0 %v693
        %838 = vmatprep.subr.mxu0 %v701
        %839 = vmatpush1.msra.mxu0 %v699
        %840 = vmatprep.subr.mxu0 %v707
        %841 = vmatpush1.msra.mxu0 %v705
        %842 = vmatprep.subr.mxu0 %v713
        %843 = vmatpush1.msra.mxu0 %v711
        %844 = vmatprep.subr.mxu0 0.0
        %845 = vmatpush1.msra.mxu0 0.0
        %846 = vmatprep.subr.mxu0 0.0
        %847 = vmatpush1.msra.mxu0 0.0
        %848 = vmatprep.subr.mxu0 0.0
        %849 = vmatpush1.msra.mxu0 0.0
        %850 = vmatprep.subr.mxu0 0.0
        %851 = vmatpush1.msra.mxu0 0.0
        %852 = vmatprep.subr.mxu0 0.0
        %853 = vmatpush1.msra.mxu0 0.0
        %854 = vmatprep.subr.mxu0 0.0
        %855 = vmatpush1.msra.mxu0 0.0
        %856 = vmatprep.subr.mxu0 0.0
        %857 = vmatpush1.msra.mxu0 0.0
        %858 = vmatprep.subr.mxu0 0.0
        %859 = vmatpush1.msra.mxu0 0.0
        %860 = vmatprep.subr.mxu0 0.0
        %861 = vmatpush1.msra.mxu0 0.0
        %862 = vmatprep.subr.mxu0 0.0
        %863 = vmatpush1.msra.mxu0 0.0
        %864 = vmatprep.subr.mxu0 0.0
        %865 = vmatpush1.msra.mxu0 0.0
        %866 = vmatprep.subr.mxu0 0.0
        %867 = vmatpush1.msra.mxu0 0.0
        %868 = vmatprep.subr.mxu0 0.0
        %869 = vmatpush1.msra.mxu0 0.0
        %870 = vmatprep.subr.mxu0 0.0
        %871 = vmatpush1.msra.mxu0 0.0
        %872 = vmatprep.subr.mxu0 0.0
        %873 = vmatpush1.msra.mxu0 0.0
        %874 = vmatprep.subr.mxu0 0.0
        %875 = vmatpush1.msra.mxu0 0.0
        %876 = vmatprep.subr.mxu0 0.0
        %877 = vmatpush1.msra.mxu0 0.0
        %878 = vmatprep.subr.mxu0 0.0
        %879 = vmatpush1.msra.mxu0 0.0
        %880 = vmatprep.subr.mxu0 0.0
        %881 = vmatpush1.msra.mxu0 0.0
        %882 = vmatprep.subr.mxu0 0.0
        %883 = vmatpush1.msra.mxu0 0.0
        %884 = vmatprep.subr.mxu0 0.0
        %885 = vmatpush1.msra.mxu0 0.0
        %886 = vmatprep.subr.mxu0 0.0
        %887 = vmatpush1.msra.mxu0 0.0
        %888 = vmatprep.subr.mxu0 0.0
        %889 = vmatpush1.msra.mxu0 0.0
        %890 = vmatprep.subr.mxu0 0.0
        %891 = vmatpush1.msra.mxu0 0.0
        %892 = vmatprep.mubr.f32.mxu0 0.0
        %893 = vmatmul.mubr.f32.gmra.mrb[0].mxu0 %v579
        %v894 = vpop.f32.mrb[0].mxu0
        %v895 = vadd.f32 0.0, %v894
        %v896 = vpop.f32.mrb[0].mxu0
        %v897 = vadd.f32 0.0, %v896
        %898 = vmatprep.mubr.f32.mxu0 0.0
        %899 = vmatmul.mubr.f32.gmra.mrb[0].mxu0 %v582
        %v900 = vpop.f32.mrb[0].mxu0
        %v901 = vadd.f32 0.0, %v900
        %v902 = vpop.f32.mrb[0].mxu0
        %v903 = vadd.f32 0.0, %v902
        %904 = vmatprep.mubr.f32.mxu0 0.0
        %905 = vmatmul.mubr.f32.gmra.mrb[0].mxu0 %v585
        %v906 = vpop.f32.mrb[0].mxu0
        %v907 = vadd.f32 0.0, %v906
        %v908 = vpop.f32.mrb[0].mxu0
        %v909 = vadd.f32 0.0, %v908
        %910 = vmatprep.mubr.f32.mxu0 0.0
        %911 = vmatmul.mubr.f32.gmra.mrb[0].mxu0 %v588
        %v912 = vpop.f32.mrb[0].mxu0
        %v913 = vadd.f32 0.0, %v912
        %v914 = vpop.f32.mrb[0].mxu0
        %v915 = vadd.f32 0.0, %v914
        %916 = vmatprep.mubr.f32.mxu0 0.0
        %917 = vmatmul.mubr.f32.gmra.mrb[0].mxu0 %v591
        %v918 = vpop.f32.mrb[0].mxu0
        %v919 = vadd.f32 0.0, %v918
        %v920 = vpop.f32.mrb[0].mxu0
        %v921 = vadd.f32 0.0, %v920
        %922 = vmatprep.mubr.f32.mxu0 0.0
        %923 = vmatmul.mubr.f32.gmra.mrb[0].mxu0 %v594
        %v924 = vpop.f32.mrb[0].mxu0
        %v925 = vadd.f32 0.0, %v924
        %v926 = vpop.f32.mrb[0].mxu0
        %v927 = vadd.f32 0.0, %v926
        %928 = vmatprep.mubr.f32.mxu0 0.0
        %929 = vmatmul.mubr.f32.gmra.mrb[0].mxu0 %v597
        %v930 = vpop.f32.mrb[0].mxu0
        %v931 = vadd.f32 0.0, %v930
        %v932 = vpop.f32.mrb[0].mxu0
        %v933 = vadd.f32 0.0, %v932
        %934 = vmatprep.mubr.f32.mxu0 0.0
        %935 = vmatmul.mubr.f32.gmra.mrb[0].mxu0 %v600
        %v936 = vpop.f32.mrb[0].mxu0
        %v937 = vadd.f32 0.0, %v936
        %v938 = vpop.f32.mrb[0].mxu0
        %v939 = vadd.f32 0.0, %v938
        %940 = vdwg.mxu0
        %941 = vmatprep.subr.mxu0 %v784
        %942 = vmatpush1.msra.mxu0 %v782
        %943 = vmatprep.subr.mxu0 %v790
        %944 = vmatpush1.msra.mxu0 %v788
        %945 = vmatprep.subr.mxu0 %v796
        %946 = vmatpush1.msra.mxu0 %v794
        %947 = vmatprep.subr.mxu0 %v802
        %948 = vmatpush1.msra.mxu0 %v800
        %949 = vmatprep.subr.mxu0 %v808
        %950 = vmatpush1.msra.mxu0 %v806
        %951 = vmatprep.subr.mxu0 %v814
        %952 = vmatpush1.msra.mxu0 %v812
        %953 = vmatprep.subr.mxu0 %v820
        %954 = vmatpush1.msra.mxu0 %v818
        %955 = vmatprep.subr.mxu0 %v826
        %956 = vmatpush1.msra.mxu0 %v824
        %957 = vmatprep.subr.mxu0 0.0
        %958 = vmatpush1.msra.mxu0 0.0
        %959 = vmatprep.subr.mxu0 0.0
        %960 = vmatpush1.msra.mxu0 0.0
        %961 = vmatprep.subr.mxu0 0.0
        %962 = vmatpush1.msra.mxu0 0.0
        %963 = vmatprep.subr.mxu0 0.0
        %964 = vmatpush1.msra.mxu0 0.0
        %965 = vmatprep.subr.mxu0 0.0
        %966 = vmatpush1.msra.mxu0 0.0
        %967 = vmatprep.subr.mxu0 0.0
        %968 = vmatpush1.msra.mxu0 0.0
        %969 = vmatprep.subr.mxu0 0.0
        %970 = vmatpush1.msra.mxu0 0.0
        %971 = vmatprep.subr.mxu0 0.0
        %972 = vmatpush1.msra.mxu0 0.0
        %973 = vmatprep.subr.mxu0 0.0
        %974 = vmatpush1.msra.mxu0 0.0
        %975 = vmatprep.subr.mxu0 0.0
        %976 = vmatpush1.msra.mxu0 0.0
        %977 = vmatprep.subr.mxu0 0.0
        %978 = vmatpush1.msra.mxu0 0.0
        %979 = vmatprep.subr.mxu0 0.0
        %980 = vmatpush1.msra.mxu0 0.0
        %981 = vmatprep.subr.mxu0 0.0
        %982 = vmatpush1.msra.mxu0 0.0
        %983 = vmatprep.subr.mxu0 0.0
        %984 = vmatpush1.msra.mxu0 0.0
        %985 = vmatprep.subr.mxu0 0.0
        %986 = vmatpush1.msra.mxu0 0.0
        %987 = vmatprep.subr.mxu0 0.0
        %988 = vmatpush1.msra.mxu0 0.0
        %989 = vmatprep.subr.mxu0 0.0
        %990 = vmatpush1.msra.mxu0 0.0
        %991 = vmatprep.subr.mxu0 0.0
        %992 = vmatpush1.msra.mxu0 0.0
        %993 = vmatprep.subr.mxu0 0.0
        %994 = vmatpush1.msra.mxu0 0.0
        %995 = vmatprep.subr.mxu0 0.0
        %996 = vmatpush1.msra.mxu0 0.0
        %997 = vmatprep.subr.mxu0 0.0
        %998 = vmatpush1.msra.mxu0 0.0
        %999 = vmatprep.subr.mxu0 0.0
        %1000 = vmatpush1.msra.mxu0 0.0
        %1001 = vmatprep.subr.mxu0 0.0
        %1002 = vmatpush1.msra.mxu0 0.0
        %1003 = vmatprep.subr.mxu0 0.0
        %1004 = vmatpush1.msra.mxu0 0.0
        %1005 = vmatprep.mubr.f32.mxu0 0.0
        %1006 = vmatmul.mubr.f32.gmra.mrb[0].mxu0 %v579
        %v1007 = vpop.f32.mrb[0].mxu0
        %v1008 = vadd.f32 0.0, %v1007
        %v1009 = vpop.f32.mrb[0].mxu0
        %v1010 = vadd.f32 0.0, %v1009
        %1011 = vmatprep.mubr.f32.mxu0 0.0
        %1012 = vmatmul.mubr.f32.gmra.mrb[0].mxu0 %v582
        %v1013 = vpop.f32.mrb[0].mxu0
        %v1014 = vadd.f32 0.0, %v1013
        %v1015 = vpop.f32.mrb[0].mxu0
        %v1016 = vadd.f32 0.0, %v1015
        %1017 = vmatprep.mubr.f32.mxu0 0.0
        %1018 = vmatmul.mubr.f32.gmra.mrb[0].mxu0 %v585
        %v1019 = vpop.f32.mrb[0].mxu0
        %v1020 = vadd.f32 0.0, %v1019
        %v1021 = vpop.f32.mrb[0].mxu0
        %v1022 = vadd.f32 0.0, %v1021
        %1023 = vmatprep.mubr.f32.mxu0 0.0
        %1024 = vmatmul.mubr.f32.gmra.mrb[0].mxu0 %v588
        %v1025 = vpop.f32.mrb[0].mxu0
        %v1026 = vadd.f32 0.0, %v1025
        %v1027 = vpop.f32.mrb[0].mxu0
        %v1028 = vadd.f32 0.0, %v1027
        %1029 = vmatprep.mubr.f32.mxu0 0.0
        %1030 = vmatmul.mubr.f32.gmra.mrb[0].mxu0 %v591
        %v1031 = vpop.f32.mrb[0].mxu0
        %v1032 = vadd.f32 0.0, %v1031
        %v1033 = vpop.f32.mrb[0].mxu0
        %v1034 = vadd.f32 0.0, %v1033
        %1035 = vmatprep.mubr.f32.mxu0 0.0
        %1036 = vmatmul.mubr.f32.gmra.mrb[0].mxu0 %v594
        %v1037 = vpop.f32.mrb[0].mxu0
        %v1038 = vadd.f32 0.0, %v1037
        %v1039 = vpop.f32.mrb[0].mxu0
        %v1040 = vadd.f32 0.0, %v1039
        %1041 = vmatprep.mubr.f32.mxu0 0.0
        %1042 = vmatmul.mubr.f32.gmra.mrb[0].mxu0 %v597
        %v1043 = vpop.f32.mrb[0].mxu0
        %v1044 = vadd.f32 0.0, %v1043
        %v1045 = vpop.f32.mrb[0].mxu0
        %v1046 = vadd.f32 0.0, %v1045
        %1047 = vmatprep.mubr.f32.mxu0 0.0
        %1048 = vmatmul.mubr.f32.gmra.mrb[0].mxu0 %v600
        %v1049 = vpop.f32.mrb[0].mxu0
        %v1050 = vadd.f32 0.0, %v1049
        %v1051 = vpop.f32.mrb[0].mxu0
        %v1052 = vadd.f32 0.0, %v1051
        %1053 = vdwg.mxu0
        %1054 = vmatprep.subr.mxu0 %v897
        %1055 = vmatpush1.msra.mxu0 %v895
        %1056 = vmatprep.subr.mxu0 %v903
        %1057 = vmatpush1.msra.mxu0 %v901
        %1058 = vmatprep.subr.mxu0 %v909
        %1059 = vmatpush1.msra.mxu0 %v907
        %1060 = vmatprep.subr.mxu0 %v915
        %1061 = vmatpush1.msra.mxu0 %v913
        %1062 = vmatprep.subr.mxu0 %v921
        %1063 = vmatpush1.msra.mxu0 %v919
        %1064 = vmatprep.subr.mxu0 %v927
        %1065 = vmatpush1.msra.mxu0 %v925
        %1066 = vmatprep.subr.mxu0 %v933
        %1067 = vmatpush1.msra.mxu0 %v931
        %1068 = vmatprep.subr.mxu0 %v939
        %1069 = vmatpush1.msra.mxu0 %v937
        %1070 = vmatprep.subr.mxu0 0.0
        %1071 = vmatpush1.msra.mxu0 0.0
        %1072 = vmatprep.subr.mxu0 0.0
        %1073 = vmatpush1.msra.mxu0 0.0
        %1074 = vmatprep.subr.mxu0 0.0
        %1075 = vmatpush1.msra.mxu0 0.0
        %1076 = vmatprep.subr.mxu0 0.0
        %1077 = vmatpush1.msra.mxu0 0.0
        %1078 = vmatprep.subr.mxu0 0.0
        %1079 = vmatpush1.msra.mxu0 0.0
        %1080 = vmatprep.subr.mxu0 0.0
        %1081 = vmatpush1.msra.mxu0 0.0
        %1082 = vmatprep.subr.mxu0 0.0
        %1083 = vmatpush1.msra.mxu0 0.0
        %1084 = vmatprep.subr.mxu0 0.0
        %1085 = vmatpush1.msra.mxu0 0.0
        %1086 = vmatprep.subr.mxu0 0.0
        %1087 = vmatpush1.msra.mxu0 0.0
        %1088 = vmatprep.subr.mxu0 0.0
        %1089 = vmatpush1.msra.mxu0 0.0
        %1090 = vmatprep.subr.mxu0 0.0
        %1091 = vmatpush1.msra.mxu0 0.0
        %1092 = vmatprep.subr.mxu0 0.0
        %1093 = vmatpush1.msra.mxu0 0.0
        %1094 = vmatprep.subr.mxu0 0.0
        %1095 = vmatpush1.msra.mxu0 0.0
        %1096 = vmatprep.subr.mxu0 0.0
        %1097 = vmatpush1.msra.mxu0 0.0
        %1098 = vmatprep.subr.mxu0 0.0
        %1099 = vmatpush1.msra.mxu0 0.0
        %1100 = vmatprep.subr.mxu0 0.0
        %1101 = vmatpush1.msra.mxu0 0.0
        %1102 = vmatprep.subr.mxu0 0.0
        %1103 = vmatpush1.msra.mxu0 0.0
        %1104 = vmatprep.subr.mxu0 0.0
        %1105 = vmatpush1.msra.mxu0 0.0
        %1106 = vmatprep.subr.mxu0 0.0
        %1107 = vmatpush1.msra.mxu0 0.0
        %1108 = vmatprep.subr.mxu0 0.0
        %1109 = vmatpush1.msra.mxu0 0.0
        %1110 = vmatprep.subr.mxu0 0.0
        %1111 = vmatpush1.msra.mxu0 0.0
        %1112 = vmatprep.subr.mxu0 0.0
        %1113 = vmatpush1.msra.mxu0 0.0
        %1114 = vmatprep.subr.mxu0 0.0
        %1115 = vmatpush1.msra.mxu0 0.0
        %1116 = vmatprep.subr.mxu0 0.0
        %1117 = vmatpush1.msra.mxu0 0.0
        %1118 = vmatprep.mubr.f32.mxu0 0.0
        %1119 = vmatmul.mubr.f32.gmra.mrb[0].mxu0 %v579
        %v1120 = vpop.f32.mrb[0].mxu0
        %v1121 = vadd.f32 0.0, %v1120
        %v1122 = vpop.f32.mrb[0].mxu0
        %v1123 = vadd.f32 0.0, %v1122
        %1124 = vmatprep.mubr.f32.mxu0 0.0
        %1125 = vmatmul.mubr.f32.gmra.mrb[0].mxu0 %v582
        %v1126 = vpop.f32.mrb[0].mxu0
        %v1127 = vadd.f32 0.0, %v1126
        %v1128 = vpop.f32.mrb[0].mxu0
        %v1129 = vadd.f32 0.0, %v1128
        %1130 = vmatprep.mubr.f32.mxu0 0.0
        %1131 = vmatmul.mubr.f32.gmra.mrb[0].mxu0 %v585
        %v1132 = vpop.f32.mrb[0].mxu0
        %v1133 = vadd.f32 0.0, %v1132
        %v1134 = vpop.f32.mrb[0].mxu0
        %v1135 = vadd.f32 0.0, %v1134
        %1136 = vmatprep.mubr.f32.mxu0 0.0
        %1137 = vmatmul.mubr.f32.gmra.mrb[0].mxu0 %v588
        %v1138 = vpop.f32.mrb[0].mxu0
        %v1139 = vadd.f32 0.0, %v1138
        %v1140 = vpop.f32.mrb[0].mxu0
        %v1141 = vadd.f32 0.0, %v1140
        %1142 = vmatprep.mubr.f32.mxu0 0.0
        %1143 = vmatmul.mubr.f32.gmra.mrb[0].mxu0 %v591
        %v1144 = vpop.f32.mrb[0].mxu0
        %v1145 = vadd.f32 0.0, %v1144
        %v1146 = vpop.f32.mrb[0].mxu0
        %v1147 = vadd.f32 0.0, %v1146
        %1148 = vmatprep.mubr.f32.mxu0 0.0
        %1149 = vmatmul.mubr.f32.gmra.mrb[0].mxu0 %v594
        %v1150 = vpop.f32.mrb[0].mxu0
        %v1151 = vadd.f32 0.0, %v1150
        %v1152 = vpop.f32.mrb[0].mxu0
        %v1153 = vadd.f32 0.0, %v1152
        %1154 = vmatprep.mubr.f32.mxu0 0.0
        %1155 = vmatmul.mubr.f32.gmra.mrb[0].mxu0 %v597
        %v1156 = vpop.f32.mrb[0].mxu0
        %v1157 = vadd.f32 0.0, %v1156
        %v1158 = vpop.f32.mrb[0].mxu0
        %v1159 = vadd.f32 0.0, %v1158
        %1160 = vmatprep.mubr.f32.mxu0 0.0
        %1161 = vmatmul.mubr.f32.gmra.mrb[0].mxu0 %v600
        %v1162 = vpop.f32.mrb[0].mxu0
        %v1163 = vadd.f32 0.0, %v1162
        %v1164 = vpop.f32.mrb[0].mxu0
        %v1165 = vadd.f32 0.0, %v1164
        %1166 = vdwg.mxu0
        %1167 = vmatprep.subr.mxu0 %v1010
        %1168 = vmatpush1.msra.mxu0 %v1008
        %1169 = vmatprep.subr.mxu0 %v1016
        %1170 = vmatpush1.msra.mxu0 %v1014
        %1171 = vmatprep.subr.mxu0 %v1022
        %1172 = vmatpush1.msra.mxu0 %v1020
        %1173 = vmatprep.subr.mxu0 %v1028
        %1174 = vmatpush1.msra.mxu0 %v1026
        %1175 = vmatprep.subr.mxu0 %v1034
        %1176 = vmatpush1.msra.mxu0 %v1032
        %1177 = vmatprep.subr.mxu0 %v1040
        %1178 = vmatpush1.msra.mxu0 %v1038
        %1179 = vmatprep.subr.mxu0 %v1046
        %1180 = vmatpush1.msra.mxu0 %v1044
        %1181 = vmatprep.subr.mxu0 %v1052
        %1182 = vmatpush1.msra.mxu0 %v1050
        %1183 = vmatprep.subr.mxu0 0.0
        %1184 = vmatpush1.msra.mxu0 0.0
        %1185 = vmatprep.subr.mxu0 0.0
        %1186 = vmatpush1.msra.mxu0 0.0
        %1187 = vmatprep.subr.mxu0 0.0
        %1188 = vmatpush1.msra.mxu0 0.0
        %1189 = vmatprep.subr.mxu0 0.0
        %1190 = vmatpush1.msra.mxu0 0.0
        %1191 = vmatprep.subr.mxu0 0.0
        %1192 = vmatpush1.msra.mxu0 0.0
        %1193 = vmatprep.subr.mxu0 0.0
        %1194 = vmatpush1.msra.mxu0 0.0
        %1195 = vmatprep.subr.mxu0 0.0
        %1196 = vmatpush1.msra.mxu0 0.0
        %1197 = vmatprep.subr.mxu0 0.0
        %1198 = vmatpush1.msra.mxu0 0.0
        %1199 = vmatprep.subr.mxu0 0.0
        %1200 = vmatpush1.msra.mxu0 0.0
        %1201 = vmatprep.subr.mxu0 0.0
        %1202 = vmatpush1.msra.mxu0 0.0
        %1203 = vmatprep.subr.mxu0 0.0
        %1204 = vmatpush1.msra.mxu0 0.0
        %1205 = vmatprep.subr.mxu0 0.0
        %1206 = vmatpush1.msra.mxu0 0.0
        %1207 = vmatprep.subr.mxu0 0.0
        %1208 = vmatpush1.msra.mxu0 0.0
        %1209 = vmatprep.subr.mxu0 0.0
        %1210 = vmatpush1.msra.mxu0 0.0
        %1211 = vmatprep.subr.mxu0 0.0
        %1212 = vmatpush1.msra.mxu0 0.0
        %1213 = vmatprep.subr.mxu0 0.0
        %1214 = vmatpush1.msra.mxu0 0.0
        %1215 = vmatprep.subr.mxu0 0.0
        %1216 = vmatpush1.msra.mxu0 0.0
        %1217 = vmatprep.subr.mxu0 0.0
        %1218 = vmatpush1.msra.mxu0 0.0
        %1219 = vmatprep.subr.mxu0 0.0
        %1220 = vmatpush1.msra.mxu0 0.0
        %1221 = vmatprep.subr.mxu0 0.0
        %1222 = vmatpush1.msra.mxu0 0.0
        %1223 = vmatprep.subr.mxu0 0.0
        %1224 = vmatpush1.msra.mxu0 0.0
        %1225 = vmatprep.subr.mxu0 0.0
        %1226 = vmatpush1.msra.mxu0 0.0
        %1227 = vmatprep.subr.mxu0 0.0
        %1228 = vmatpush1.msra.mxu0 0.0
        %1229 = vmatprep.subr.mxu0 0.0
        %1230 = vmatpush1.msra.mxu0 0.0
        %1231 = vmatprep.mubr.f32.mxu0 0.0
        %1232 = vmatmul.mubr.f32.gmra.mrb[0].mxu0 %v579
        %v1233 = vpop.f32.mrb[0].mxu0
        %v1234 = vadd.f32 0.0, %v1233
        %v1235 = vpop.f32.mrb[0].mxu0
        %v1236 = vadd.f32 0.0, %v1235
        %1237 = vmatprep.mubr.f32.mxu0 0.0
        %1238 = vmatmul.mubr.f32.gmra.mrb[0].mxu0 %v582
        %v1239 = vpop.f32.mrb[0].mxu0
        %v1240 = vadd.f32 0.0, %v1239
        %v1241 = vpop.f32.mrb[0].mxu0
        %v1242 = vadd.f32 0.0, %v1241
        %1243 = vmatprep.mubr.f32.mxu0 0.0
        %1244 = vmatmul.mubr.f32.gmra.mrb[0].mxu0 %v585
        %v1245 = vpop.f32.mrb[0].mxu0
        %v1246 = vadd.f32 0.0, %v1245
        %v1247 = vpop.f32.mrb[0].mxu0
        %v1248 = vadd.f32 0.0, %v1247
        %1249 = vmatprep.mubr.f32.mxu0 0.0
        %1250 = vmatmul.mubr.f32.gmra.mrb[0].mxu0 %v588
        %v1251 = vpop.f32.mrb[0].mxu0
        %v1252 = vadd.f32 0.0, %v1251
        %v1253 = vpop.f32.mrb[0].mxu0
        %v1254 = vadd.f32 0.0, %v1253
        %1255 = vmatprep.mubr.f32.mxu0 0.0
        %1256 = vmatmul.mubr.f32.gmra.mrb[0].mxu0 %v591
        %v1257 = vpop.f32.mrb[0].mxu0
        %v1258 = vadd.f32 0.0, %v1257
        %v1259 = vpop.f32.mrb[0].mxu0
        %v1260 = vadd.f32 0.0, %v1259
        %1261 = vmatprep.mubr.f32.mxu0 0.0
        %1262 = vmatmul.mubr.f32.gmra.mrb[0].mxu0 %v594
        %v1263 = vpop.f32.mrb[0].mxu0
        %v1264 = vadd.f32 0.0, %v1263
        %v1265 = vpop.f32.mrb[0].mxu0
        %v1266 = vadd.f32 0.0, %v1265
        %1267 = vmatprep.mubr.f32.mxu0 0.0
        %1268 = vmatmul.mubr.f32.gmra.mrb[0].mxu0 %v597
        %v1269 = vpop.f32.mrb[0].mxu0
        %v1270 = vadd.f32 0.0, %v1269
        %v1271 = vpop.f32.mrb[0].mxu0
        %v1272 = vadd.f32 0.0, %v1271
        %1273 = vmatprep.mubr.f32.mxu0 0.0
        %1274 = vmatmul.mubr.f32.gmra.mrb[0].mxu0 %v600
        %v1275 = vpop.f32.mrb[0].mxu0
        %v1276 = vadd.f32 0.0, %v1275
        %v1277 = vpop.f32.mrb[0].mxu0
        %v1278 = vadd.f32 0.0, %v1277
        %1279 = vdwg.mxu0
        %1280 = vmatprep.subr.mxu0 %v1123
        %1281 = vmatpush1.msra.mxu0 %v1121
        %1282 = vmatprep.subr.mxu0 %v1129
        %1283 = vmatpush1.msra.mxu0 %v1127
        %1284 = vmatprep.subr.mxu0 %v1135
        %1285 = vmatpush1.msra.mxu0 %v1133
        %1286 = vmatprep.subr.mxu0 %v1141
        %1287 = vmatpush1.msra.mxu0 %v1139
        %1288 = vmatprep.subr.mxu0 %v1147
        %1289 = vmatpush1.msra.mxu0 %v1145
        %1290 = vmatprep.subr.mxu0 %v1153
        %1291 = vmatpush1.msra.mxu0 %v1151
        %1292 = vmatprep.subr.mxu0 %v1159
        %1293 = vmatpush1.msra.mxu0 %v1157
        %1294 = vmatprep.subr.mxu0 %v1165
        %1295 = vmatpush1.msra.mxu0 %v1163
        %1296 = vmatprep.subr.mxu0 0.0
        %1297 = vmatpush1.msra.mxu0 0.0
        %1298 = vmatprep.subr.mxu0 0.0
        %1299 = vmatpush1.msra.mxu0 0.0
        %1300 = vmatprep.subr.mxu0 0.0
        %1301 = vmatpush1.msra.mxu0 0.0
        %1302 = vmatprep.subr.mxu0 0.0
        %1303 = vmatpush1.msra.mxu0 0.0
        %1304 = vmatprep.subr.mxu0 0.0
        %1305 = vmatpush1.msra.mxu0 0.0
        %1306 = vmatprep.subr.mxu0 0.0
        %1307 = vmatpush1.msra.mxu0 0.0
        %1308 = vmatprep.subr.mxu0 0.0
        %1309 = vmatpush1.msra.mxu0 0.0
        %1310 = vmatprep.subr.mxu0 0.0
        %1311 = vmatpush1.msra.mxu0 0.0
        %1312 = vmatprep.subr.mxu0 0.0
        %1313 = vmatpush1.msra.mxu0 0.0
        %1314 = vmatprep.subr.mxu0 0.0
        %1315 = vmatpush1.msra.mxu0 0.0
        %1316 = vmatprep.subr.mxu0 0.0
        %1317 = vmatpush1.msra.mxu0 0.0
        %1318 = vmatprep.subr.mxu0 0.0
        %1319 = vmatpush1.msra.mxu0 0.0
        %1320 = vmatprep.subr.mxu0 0.0
        %1321 = vmatpush1.msra.mxu0 0.0
        %1322 = vmatprep.subr.mxu0 0.0
        %1323 = vmatpush1.msra.mxu0 0.0
        %1324 = vmatprep.subr.mxu0 0.0
        %1325 = vmatpush1.msra.mxu0 0.0
        %1326 = vmatprep.subr.mxu0 0.0
        %1327 = vmatpush1.msra.mxu0 0.0
        %1328 = vmatprep.subr.mxu0 0.0
        %1329 = vmatpush1.msra.mxu0 0.0
        %1330 = vmatprep.subr.mxu0 0.0
        %1331 = vmatpush1.msra.mxu0 0.0
        %1332 = vmatprep.subr.mxu0 0.0
        %1333 = vmatpush1.msra.mxu0 0.0
        %1334 = vmatprep.subr.mxu0 0.0
        %1335 = vmatpush1.msra.mxu0 0.0
        %1336 = vmatprep.subr.mxu0 0.0
        %1337 = vmatpush1.msra.mxu0 0.0
        %1338 = vmatprep.subr.mxu0 0.0
        %1339 = vmatpush1.msra.mxu0 0.0
        %1340 = vmatprep.subr.mxu0 0.0
        %1341 = vmatpush1.msra.mxu0 0.0
        %1342 = vmatprep.subr.mxu0 0.0
        %1343 = vmatpush1.msra.mxu0 0.0
        %1344 = vmatprep.mubr.f32.mxu0 0.0
        %1345 = vmatmul.mubr.f32.gmra.mrb[0].mxu0 %v579
        %v1346 = vpop.f32.mrb[0].mxu0
        %v1347 = vadd.f32 0.0, %v1346
        %v1348 = vpop.f32.mrb[0].mxu0
        %v1349 = vadd.f32 0.0, %v1348
        %1350 = vmatprep.mubr.f32.mxu0 0.0
        %1351 = vmatmul.mubr.f32.gmra.mrb[0].mxu0 %v582
        %v1352 = vpop.f32.mrb[0].mxu0
        %v1353 = vadd.f32 0.0, %v1352
        %v1354 = vpop.f32.mrb[0].mxu0
        %v1355 = vadd.f32 0.0, %v1354
        %1356 = vmatprep.mubr.f32.mxu0 0.0
        %1357 = vmatmul.mubr.f32.gmra.mrb[0].mxu0 %v585
        %v1358 = vpop.f32.mrb[0].mxu0
        %v1359 = vadd.f32 0.0, %v1358
        %v1360 = vpop.f32.mrb[0].mxu0
        %v1361 = vadd.f32 0.0, %v1360
        %1362 = vmatprep.mubr.f32.mxu0 0.0
        %1363 = vmatmul.mubr.f32.gmra.mrb[0].mxu0 %v588
        %v1364 = vpop.f32.mrb[0].mxu0
        %v1365 = vadd.f32 0.0, %v1364
        %v1366 = vpop.f32.mrb[0].mxu0
        %v1367 = vadd.f32 0.0, %v1366
        %1368 = vmatprep.mubr.f32.mxu0 0.0
        %1369 = vmatmul.mubr.f32.gmra.mrb[0].mxu0 %v591
        %v1370 = vpop.f32.mrb[0].mxu0
        %v1371 = vadd.f32 0.0, %v1370
        %v1372 = vpop.f32.mrb[0].mxu0
        %v1373 = vadd.f32 0.0, %v1372
        %1374 = vmatprep.mubr.f32.mxu0 0.0
        %1375 = vmatmul.mubr.f32.gmra.mrb[0].mxu0 %v594
        %v1376 = vpop.f32.mrb[0].mxu0
        %v1377 = vadd.f32 0.0, %v1376
        %v1378 = vpop.f32.mrb[0].mxu0
        %v1379 = vadd.f32 0.0, %v1378
        %1380 = vmatprep.mubr.f32.mxu0 0.0
        %1381 = vmatmul.mubr.f32.gmra.mrb[0].mxu0 %v597
        %v1382 = vpop.f32.mrb[0].mxu0
        %v1383 = vadd.f32 0.0, %v1382
        %v1384 = vpop.f32.mrb[0].mxu0
        %v1385 = vadd.f32 0.0, %v1384
        %1386 = vmatprep.mubr.f32.mxu0 0.0
        %1387 = vmatmul.mubr.f32.gmra.mrb[0].mxu0 %v600
        %v1388 = vpop.f32.mrb[0].mxu0
        %v1389 = vadd.f32 0.0, %v1388
        %v1390 = vpop.f32.mrb[0].mxu0
        %v1391 = vadd.f32 0.0, %v1390
        %1392 = vdwg.mxu0
        %1393 = vmatprep.subr.mxu0 %v1236
        %1394 = vmatpush1.msra.mxu0 %v1234
        %1395 = vmatprep.subr.mxu0 %v1242
        %1396 = vmatpush1.msra.mxu0 %v1240
        %1397 = vmatprep.subr.mxu0 %v1248
        %1398 = vmatpush1.msra.mxu0 %v1246
        %1399 = vmatprep.subr.mxu0 %v1254
        %1400 = vmatpush1.msra.mxu0 %v1252
        %1401 = vmatprep.subr.mxu0 %v1260
        %1402 = vmatpush1.msra.mxu0 %v1258
        %1403 = vmatprep.subr.mxu0 %v1266
        %1404 = vmatpush1.msra.mxu0 %v1264
        %1405 = vmatprep.subr.mxu0 %v1272
        %1406 = vmatpush1.msra.mxu0 %v1270
        %1407 = vmatprep.subr.mxu0 %v1278
        %1408 = vmatpush1.msra.mxu0 %v1276
        %1409 = vmatprep.subr.mxu0 0.0
        %1410 = vmatpush1.msra.mxu0 0.0
        %1411 = vmatprep.subr.mxu0 0.0
        %1412 = vmatpush1.msra.mxu0 0.0
        %1413 = vmatprep.subr.mxu0 0.0
        %1414 = vmatpush1.msra.mxu0 0.0
        %1415 = vmatprep.subr.mxu0 0.0
        %1416 = vmatpush1.msra.mxu0 0.0
        %1417 = vmatprep.subr.mxu0 0.0
        %1418 = vmatpush1.msra.mxu0 0.0
        %1419 = vmatprep.subr.mxu0 0.0
        %1420 = vmatpush1.msra.mxu0 0.0
        %1421 = vmatprep.subr.mxu0 0.0
        %1422 = vmatpush1.msra.mxu0 0.0
        %1423 = vmatprep.subr.mxu0 0.0
        %1424 = vmatpush1.msra.mxu0 0.0
        %1425 = vmatprep.subr.mxu0 0.0
        %1426 = vmatpush1.msra.mxu0 0.0
        %1427 = vmatprep.subr.mxu0 0.0
        %1428 = vmatpush1.msra.mxu0 0.0
        %1429 = vmatprep.subr.mxu0 0.0
        %1430 = vmatpush1.msra.mxu0 0.0
        %1431 = vmatprep.subr.mxu0 0.0
        %1432 = vmatpush1.msra.mxu0 0.0
        %1433 = vmatprep.subr.mxu0 0.0
        %1434 = vmatpush1.msra.mxu0 0.0
        %1435 = vmatprep.subr.mxu0 0.0
        %1436 = vmatpush1.msra.mxu0 0.0
        %1437 = vmatprep.subr.mxu0 0.0
        %1438 = vmatpush1.msra.mxu0 0.0
        %1439 = vmatprep.subr.mxu0 0.0
        %1440 = vmatpush1.msra.mxu0 0.0
        %1441 = vmatprep.subr.mxu0 0.0
        %1442 = vmatpush1.msra.mxu0 0.0
        %1443 = vmatprep.subr.mxu0 0.0
        %1444 = vmatpush1.msra.mxu0 0.0
        %1445 = vmatprep.subr.mxu0 0.0
        %1446 = vmatpush1.msra.mxu0 0.0
        %1447 = vmatprep.subr.mxu0 0.0
        %1448 = vmatpush1.msra.mxu0 0.0
        %1449 = vmatprep.subr.mxu0 0.0
        %1450 = vmatpush1.msra.mxu0 0.0
        %1451 = vmatprep.subr.mxu0 0.0
        %1452 = vmatpush1.msra.mxu0 0.0
        %1453 = vmatprep.subr.mxu0 0.0
        %1454 = vmatpush1.msra.mxu0 0.0
        %1455 = vmatprep.subr.mxu0 0.0
        %1456 = vmatpush1.msra.mxu0 0.0
        %1457 = vmatprep.mubr.f32.mxu0 0.0
        %1458 = vmatmul.mubr.f32.gmra.mrb[0].mxu0 %v579
        %v1459 = vpop.f32.mrb[0].mxu0
        %v1460 = vadd.f32 0.0, %v1459
        %v1461 = vpop.f32.mrb[0].mxu0
        %v1462 = vadd.f32 0.0, %v1461
        %1463 = vmatprep.mubr.f32.mxu0 0.0
        %1464 = vmatmul.mubr.f32.gmra.mrb[0].mxu0 %v582
        %v1465 = vpop.f32.mrb[0].mxu0
        %v1466 = vadd.f32 0.0, %v1465
        %v1467 = vpop.f32.mrb[0].mxu0
        %v1468 = vadd.f32 0.0, %v1467
        %1469 = vmatprep.mubr.f32.mxu0 0.0
        %1470 = vmatmul.mubr.f32.gmra.mrb[0].mxu0 %v585
        %v1471 = vpop.f32.mrb[0].mxu0
        %v1472 = vadd.f32 0.0, %v1471
        %v1473 = vpop.f32.mrb[0].mxu0
        %v1474 = vadd.f32 0.0, %v1473
        %1475 = vmatprep.mubr.f32.mxu0 0.0
        %1476 = vmatmul.mubr.f32.gmra.mrb[0].mxu0 %v588
        %v1477 = vpop.f32.mrb[0].mxu0
        %v1478 = vadd.f32 0.0, %v1477
        %v1479 = vpop.f32.mrb[0].mxu0
        %v1480 = vadd.f32 0.0, %v1479
        %1481 = vmatprep.mubr.f32.mxu0 0.0
        %1482 = vmatmul.mubr.f32.gmra.mrb[0].mxu0 %v591
        %v1483 = vpop.f32.mrb[0].mxu0
        %v1484 = vadd.f32 0.0, %v1483
        %v1485 = vpop.f32.mrb[0].mxu0
        %v1486 = vadd.f32 0.0, %v1485
        %1487 = vmatprep.mubr.f32.mxu0 0.0
        %1488 = vmatmul.mubr.f32.gmra.mrb[0].mxu0 %v594
        %v1489 = vpop.f32.mrb[0].mxu0
        %v1490 = vadd.f32 0.0, %v1489
        %v1491 = vpop.f32.mrb[0].mxu0
        %v1492 = vadd.f32 0.0, %v1491
        %1493 = vmatprep.mubr.f32.mxu0 0.0
        %1494 = vmatmul.mubr.f32.gmra.mrb[0].mxu0 %v597
        %v1495 = vpop.f32.mrb[0].mxu0
        %v1496 = vadd.f32 0.0, %v1495
        %v1497 = vpop.f32.mrb[0].mxu0
        %v1498 = vadd.f32 0.0, %v1497
        %1499 = vmatprep.mubr.f32.mxu0 0.0
        %1500 = vmatmul.mubr.f32.gmra.mrb[0].mxu0 %v600
        %v1501 = vpop.f32.mrb[0].mxu0
        %v1502 = vadd.f32 0.0, %v1501
        %v1503 = vpop.f32.mrb[0].mxu0
        %v1504 = vadd.f32 0.0, %v1503
        %1505 = vdwg.mxu0
        %v1506 = vld [vmem:[%s266] sm:$0xf]
        %v1508 = vlaneseq
        %v1509 = vshrl.u32 %v1508, 7
        %v1510 = vsub.s32 0, %v1509
        %v1511 = vrot.slane %v1506, %v1510
        %v1512 = vlaneseq
        %v1513 = vshrl.u32 %v1512, 7
        %v1514 = vsub.s32 1, %v1513
        %v1515 = vrot.slane %v1506, %v1514
        %v1516 = vlaneseq
        %v1517 = vshrl.u32 %v1516, 7
        %v1518 = vsub.s32 2, %v1517
        %v1519 = vrot.slane %v1506, %v1518
        %v1520 = vlaneseq
        %v1521 = vshrl.u32 %v1520, 7
        %v1522 = vsub.s32 3, %v1521
        %v1523 = vrot.slane %v1506, %v1522
        %1528 = vmatprep.subr.mxu0 %v1349
        %1529 = vmatpush1.msra.mxu0 %v1347
        %1530 = vmatprep.subr.mxu0 %v1355
        %1531 = vmatpush1.msra.mxu0 %v1353
        %1532 = vmatprep.subr.mxu0 %v1361
        %1533 = vmatpush1.msra.mxu0 %v1359
        %1534 = vmatprep.subr.mxu0 %v1367
        %1535 = vmatpush1.msra.mxu0 %v1365
        %1536 = vmatprep.subr.mxu0 %v1373
        %1537 = vmatpush1.msra.mxu0 %v1371
        %1538 = vmatprep.subr.mxu0 %v1379
        %1539 = vmatpush1.msra.mxu0 %v1377
        %1540 = vmatprep.subr.mxu0 %v1385
        %1541 = vmatpush1.msra.mxu0 %v1383
        %1542 = vmatprep.subr.mxu0 %v1391
        %1543 = vmatpush1.msra.mxu0 %v1389
        %1544 = vmatprep.subr.mxu0 0.0
        %1545 = vmatpush1.msra.mxu0 0.0
        %1546 = vmatprep.subr.mxu0 0.0
        %1547 = vmatpush1.msra.mxu0 0.0
        %1548 = vmatprep.subr.mxu0 0.0
        %1549 = vmatpush1.msra.mxu0 0.0
        %1550 = vmatprep.subr.mxu0 0.0
        %1551 = vmatpush1.msra.mxu0 0.0
        %1552 = vmatprep.subr.mxu0 0.0
        %1553 = vmatpush1.msra.mxu0 0.0
        %1554 = vmatprep.subr.mxu0 0.0
        %1555 = vmatpush1.msra.mxu0 0.0
        %1556 = vmatprep.subr.mxu0 0.0
        %1557 = vmatpush1.msra.mxu0 0.0
        %1558 = vmatprep.subr.mxu0 0.0
        %1559 = vmatpush1.msra.mxu0 0.0
        %1560 = vmatprep.subr.mxu0 0.0
        %1561 = vmatpush1.msra.mxu0 0.0
        %1562 = vmatprep.subr.mxu0 0.0
        %1563 = vmatpush1.msra.mxu0 0.0
        %1564 = vmatprep.subr.mxu0 0.0
        %1565 = vmatpush1.msra.mxu0 0.0
        %1566 = vmatprep.subr.mxu0 0.0
        %1567 = vmatpush1.msra.mxu0 0.0
        %1568 = vmatprep.subr.mxu0 0.0
        %1569 = vmatpush1.msra.mxu0 0.0
        %1570 = vmatprep.subr.mxu0 0.0
        %1571 = vmatpush1.msra.mxu0 0.0
        %1572 = vmatprep.subr.mxu0 0.0
        %1573 = vmatpush1.msra.mxu0 0.0
        %1574 = vmatprep.subr.mxu0 0.0
        %1575 = vmatpush1.msra.mxu0 0.0
        %1576 = vmatprep.subr.mxu0 0.0
        %1577 = vmatpush1.msra.mxu0 0.0
        %1578 = vmatprep.subr.mxu0 0.0
        %1579 = vmatpush1.msra.mxu0 0.0
        %1580 = vmatprep.subr.mxu0 0.0
        %1581 = vmatpush1.msra.mxu0 0.0
        %1582 = vmatprep.subr.mxu0 0.0
        %1583 = vmatpush1.msra.mxu0 0.0
        %1584 = vmatprep.subr.mxu0 0.0
        %1585 = vmatpush1.msra.mxu0 0.0
        %1586 = vmatprep.subr.mxu0 0.0
        %1587 = vmatpush1.msra.mxu0 0.0
        %1588 = vmatprep.subr.mxu0 0.0
        %1589 = vmatpush1.msra.mxu0 0.0
        %1590 = vmatprep.subr.mxu0 0.0
        %1591 = vmatpush1.msra.mxu0 0.0
        %1592 = vmatprep.mubr.f32.mxu0 0.0
        %1593 = vmatmul.mubr.f32.gmra.mrb[0].mxu0 %v579
        %v1594 = vpop.f32.mrb[0].mxu0
        %v1595 = vadd.f32 %v1511, %v1594
        %v1596 = vpop.f32.mrb[0].mxu0
        %v1597 = vadd.f32 %v1515, %v1596
        %1598 = vmatprep.mubr.f32.mxu0 0.0
        %1599 = vmatmul.mubr.f32.gmra.mrb[0].mxu0 %v582
        %v1600 = vpop.f32.mrb[0].mxu0
        %v1601 = vadd.f32 %v1511, %v1600
        %v1602 = vpop.f32.mrb[0].mxu0
        %v1603 = vadd.f32 %v1515, %v1602
        %1604 = vmatprep.mubr.f32.mxu0 0.0
        %1605 = vmatmul.mubr.f32.gmra.mrb[0].mxu0 %v585
        %v1606 = vpop.f32.mrb[0].mxu0
        %v1607 = vadd.f32 %v1511, %v1606
        %v1608 = vpop.f32.mrb[0].mxu0
        %v1609 = vadd.f32 %v1515, %v1608
        %1610 = vmatprep.mubr.f32.mxu0 0.0
        %1611 = vmatmul.mubr.f32.gmra.mrb[0].mxu0 %v588
        %v1612 = vpop.f32.mrb[0].mxu0
        %v1613 = vadd.f32 %v1511, %v1612
        %v1614 = vpop.f32.mrb[0].mxu0
        %v1615 = vadd.f32 %v1515, %v1614
        %1616 = vmatprep.mubr.f32.mxu0 0.0
        %1617 = vmatmul.mubr.f32.gmra.mrb[0].mxu0 %v591
        %v1618 = vpop.f32.mrb[0].mxu0
        %v1619 = vadd.f32 %v1511, %v1618
        %v1620 = vpop.f32.mrb[0].mxu0
        %v1621 = vadd.f32 %v1515, %v1620
        %1622 = vmatprep.mubr.f32.mxu0 0.0
        %1623 = vmatmul.mubr.f32.gmra.mrb[0].mxu0 %v594
        %v1624 = vpop.f32.mrb[0].mxu0
        %v1625 = vadd.f32 %v1511, %v1624
        %v1626 = vpop.f32.mrb[0].mxu0
        %v1627 = vadd.f32 %v1515, %v1626
        %1628 = vmatprep.mubr.f32.mxu0 0.0
        %1629 = vmatmul.mubr.f32.gmra.mrb[0].mxu0 %v597
        %v1630 = vpop.f32.mrb[0].mxu0
        %v1631 = vadd.f32 %v1511, %v1630
        %v1632 = vpop.f32.mrb[0].mxu0
        %v1633 = vadd.f32 %v1515, %v1632
        %1634 = vmatprep.mubr.f32.mxu0 0.0
        %1635 = vmatmul.mubr.f32.gmra.mrb[0].mxu0 %v600
        %v1636 = vpop.f32.mrb[0].mxu0
        %v1637 = vadd.f32 %v1511, %v1636
        %v1638 = vpop.f32.mrb[0].mxu0
        %v1639 = vadd.f32 %v1515, %v1638
        %1640 = vdwg.mxu0
        %1641 = vmatprep.subr.mxu0 %v1462
        %1642 = vmatpush1.msra.mxu0 %v1460
        %1643 = vmatprep.subr.mxu0 %v1468
        %1644 = vmatpush1.msra.mxu0 %v1466
        %1645 = vmatprep.subr.mxu0 %v1474
        %1646 = vmatpush1.msra.mxu0 %v1472
        %1647 = vmatprep.subr.mxu0 %v1480
        %1648 = vmatpush1.msra.mxu0 %v1478
        %1649 = vmatprep.subr.mxu0 %v1486
        %1650 = vmatpush1.msra.mxu0 %v1484
        %1651 = vmatprep.subr.mxu0 %v1492
        %1652 = vmatpush1.msra.mxu0 %v1490
        %1653 = vmatprep.subr.mxu0 %v1498
        %1654 = vmatpush1.msra.mxu0 %v1496
        %1655 = vmatprep.subr.mxu0 %v1504
        %1656 = vmatpush1.msra.mxu0 %v1502
        %1657 = vmatprep.subr.mxu0 0.0
        %1658 = vmatpush1.msra.mxu0 0.0
        %1659 = vmatprep.subr.mxu0 0.0
        %1660 = vmatpush1.msra.mxu0 0.0
        %1661 = vmatprep.subr.mxu0 0.0
        %1662 = vmatpush1.msra.mxu0 0.0
        %1663 = vmatprep.subr.mxu0 0.0
        %1664 = vmatpush1.msra.mxu0 0.0
        %1665 = vmatprep.subr.mxu0 0.0
        %1666 = vmatpush1.msra.mxu0 0.0
        %1667 = vmatprep.subr.mxu0 0.0
        %1668 = vmatpush1.msra.mxu0 0.0
        %1669 = vmatprep.subr.mxu0 0.0
        %1670 = vmatpush1.msra.mxu0 0.0
        %1671 = vmatprep.subr.mxu0 0.0
        %1672 = vmatpush1.msra.mxu0 0.0
        %1673 = vmatprep.subr.mxu0 0.0
        %1674 = vmatpush1.msra.mxu0 0.0
        %1675 = vmatprep.subr.mxu0 0.0
        %1676 = vmatpush1.msra.mxu0 0.0
        %1677 = vmatprep.subr.mxu0 0.0
        %1678 = vmatpush1.msra.mxu0 0.0
        %1679 = vmatprep.subr.mxu0 0.0
        %1680 = vmatpush1.msra.mxu0 0.0
        %1681 = vmatprep.subr.mxu0 0.0
        %1682 = vmatpush1.msra.mxu0 0.0
        %1683 = vmatprep.subr.mxu0 0.0
        %1684 = vmatpush1.msra.mxu0 0.0
        %1685 = vmatprep.subr.mxu0 0.0
        %1686 = vmatpush1.msra.mxu0 0.0
        %1687 = vmatprep.subr.mxu0 0.0
        %1688 = vmatpush1.msra.mxu0 0.0
        %1689 = vmatprep.subr.mxu0 0.0
        %1690 = vmatpush1.msra.mxu0 0.0
        %1691 = vmatprep.subr.mxu0 0.0
        %1692 = vmatpush1.msra.mxu0 0.0
        %1693 = vmatprep.subr.mxu0 0.0
        %1694 = vmatpush1.msra.mxu0 0.0
        %1695 = vmatprep.subr.mxu0 0.0
        %1696 = vmatpush1.msra.mxu0 0.0
        %1697 = vmatprep.subr.mxu0 0.0
        %1698 = vmatpush1.msra.mxu0 0.0
        %1699 = vmatprep.subr.mxu0 0.0
        %1700 = vmatpush1.msra.mxu0 0.0
        %1701 = vmatprep.subr.mxu0 0.0
        %1702 = vmatpush1.msra.mxu0 0.0
        %1703 = vmatprep.subr.mxu0 0.0
        %1704 = vmatpush1.msra.mxu0 0.0
        %1705 = vmatprep.mubr.f32.mxu0 0.0
        %1706 = vmatmul.mubr.f32.gmra.mrb[0].mxu0 %v579
        %v1707 = vpop.f32.mrb[0].mxu0
        %v1708 = vadd.f32 %v1519, %v1707
        %v1709 = vpop.f32.mrb[0].mxu0
        %v1710 = vadd.f32 %v1523, %v1709
        %1711 = vmatprep.mubr.f32.mxu0 0.0
        %1712 = vmatmul.mubr.f32.gmra.mrb[0].mxu0 %v582
        %v1713 = vpop.f32.mrb[0].mxu0
        %v1714 = vadd.f32 %v1519, %v1713
        %v1715 = vpop.f32.mrb[0].mxu0
        %v1716 = vadd.f32 %v1523, %v1715
        %1717 = vmatprep.mubr.f32.mxu0 0.0
        %1718 = vmatmul.mubr.f32.gmra.mrb[0].mxu0 %v585
        %v1719 = vpop.f32.mrb[0].mxu0
        %v1720 = vadd.f32 %v1519, %v1719
        %v1721 = vpop.f32.mrb[0].mxu0
        %v1722 = vadd.f32 %v1523, %v1721
        %1723 = vmatprep.mubr.f32.mxu0 0.0
        %1724 = vmatmul.mubr.f32.gmra.mrb[0].mxu0 %v588
        %v1725 = vpop.f32.mrb[0].mxu0
        %v1726 = vadd.f32 %v1519, %v1725
        %v1727 = vpop.f32.mrb[0].mxu0
        %v1728 = vadd.f32 %v1523, %v1727
        %1729 = vmatprep.mubr.f32.mxu0 0.0
        %1730 = vmatmul.mubr.f32.gmra.mrb[0].mxu0 %v591
        %v1731 = vpop.f32.mrb[0].mxu0
        %v1732 = vadd.f32 %v1519, %v1731
        %v1733 = vpop.f32.mrb[0].mxu0
        %v1734 = vadd.f32 %v1523, %v1733
        %1735 = vmatprep.mubr.f32.mxu0 0.0
        %1736 = vmatmul.mubr.f32.gmra.mrb[0].mxu0 %v594
        %v1737 = vpop.f32.mrb[0].mxu0
        %v1738 = vadd.f32 %v1519, %v1737
        %v1739 = vpop.f32.mrb[0].mxu0
        %v1740 = vadd.f32 %v1523, %v1739
        %1741 = vmatprep.mubr.f32.mxu0 0.0
        %1742 = vmatmul.mubr.f32.gmra.mrb[0].mxu0 %v597
        %v1743 = vpop.f32.mrb[0].mxu0
        %v1744 = vadd.f32 %v1519, %v1743
        %v1745 = vpop.f32.mrb[0].mxu0
        %v1746 = vadd.f32 %v1523, %v1745
        %1747 = vmatprep.mubr.f32.mxu0 0.0
        %1748 = vmatmul.mubr.f32.gmra.mrb[0].mxu0 %v600
        %v1749 = vpop.f32.mrb[0].mxu0
        %v1750 = vadd.f32 %v1519, %v1749
        %v1751 = vpop.f32.mrb[0].mxu0
        %v1752 = vadd.f32 %v1523, %v1751
        %1753 = vdwg.mxu0
        %v1754 = vmax.f32 %v1595, 0.0
        %v1755 = vmax.f32 %v1597, 0.0
        %v1756 = vmax.f32 %v1708, 0.0
        %v1757 = vmax.f32 %v1710, 0.0
        %v1758 = vmax.f32 %v1601, 0.0
        %v1759 = vmax.f32 %v1603, 0.0
        %v1760 = vmax.f32 %v1714, 0.0
        %v1761 = vmax.f32 %v1716, 0.0
        %v1762 = vmax.f32 %v1607, 0.0
        %v1763 = vmax.f32 %v1609, 0.0
        %v1764 = vmax.f32 %v1720, 0.0
        %v1765 = vmax.f32 %v1722, 0.0
        %v1766 = vmax.f32 %v1613, 0.0
        %v1767 = vmax.f32 %v1615, 0.0
        %v1768 = vmax.f32 %v1726, 0.0
        %v1769 = vmax.f32 %v1728, 0.0
        %v1770 = vmax.f32 %v1619, 0.0
        %v1771 = vmax.f32 %v1621, 0.0
        %v1772 = vmax.f32 %v1732, 0.0
        %v1773 = vmax.f32 %v1734, 0.0
        %v1774 = vmax.f32 %v1625, 0.0
        %v1775 = vmax.f32 %v1627, 0.0
        %v1776 = vmax.f32 %v1738, 0.0
        %v1777 = vmax.f32 %v1740, 0.0
        %v1778 = vmax.f32 %v1631, 0.0
        %v1779 = vmax.f32 %v1633, 0.0
        %v1780 = vmax.f32 %v1744, 0.0
        %v1781 = vmax.f32 %v1746, 0.0
        %v1782 = vmax.f32 %v1637, 0.0
        %v1783 = vmax.f32 %v1639, 0.0
        %v1784 = vmax.f32 %v1750, 0.0
        %v1785 = vmax.f32 %v1752, 0.0
        %v1786 = vld [vmem:[#allocation4] sm:$0x3]
        %v1787 = vlaneseq
        %v1788 = vshrl.u32 %v1787, 7
        %v1789 = vsub.s32 0, %v1788
        %v1790 = vrot.slane %v1786, %v1789
        %1792 = vbcast.lane.b32.xlu0 %v1790, 256
        %v1793 = vpop.permute.xlu0 %1792
        %s1795 = sor.u32 256, 8
        %1796 = vbcast.lane.b32.xlu0 %v1790, %s1795
        %v1797 = vpop.permute.xlu0 %1796
        %s1799 = sor.u32 256, 16
        %1800 = vbcast.lane.b32.xlu0 %v1790, %s1799
        %v1801 = vpop.permute.xlu0 %1800
        %s1803 = sor.u32 256, 24
        %1804 = vbcast.lane.b32.xlu0 %v1790, %s1803
        %v1805 = vpop.permute.xlu0 %1804
        %s1807 = sor.u32 256, 32
        %1808 = vbcast.lane.b32.xlu0 %v1790, %s1807
        %v1809 = vpop.permute.xlu0 %1808
        %s1811 = sor.u32 256, 40
        %1812 = vbcast.lane.b32.xlu0 %v1790, %s1811
        %v1813 = vpop.permute.xlu0 %1812
        %s1815 = sor.u32 256, 48
        %1816 = vbcast.lane.b32.xlu0 %v1790, %s1815
        %v1817 = vpop.permute.xlu0 %1816
        %s1819 = sor.u32 256, 56
        %1820 = vbcast.lane.b32.xlu0 %v1790, %s1819
        %v1821 = vpop.permute.xlu0 %1820
        %v1822 = vmul.f32 %v1754, %v1793
        %v1823 = vmul.f32 %v1755, %v1793
        %v1824 = vmul.f32 %v1756, %v1793
        %v1825 = vmul.f32 %v1757, %v1793
        %v1826 = vmul.f32 %v1758, %v1797
        %v1827 = vmul.f32 %v1759, %v1797
        %v1828 = vmul.f32 %v1760, %v1797
        %v1829 = vmul.f32 %v1761, %v1797
        %v1830 = vmul.f32 %v1762, %v1801
        %v1831 = vmul.f32 %v1763, %v1801
        %v1832 = vmul.f32 %v1764, %v1801
        %v1833 = vmul.f32 %v1765, %v1801
        %v1834 = vmul.f32 %v1766, %v1805
        %v1835 = vmul.f32 %v1767, %v1805
        %v1836 = vmul.f32 %v1768, %v1805
        %v1837 = vmul.f32 %v1769, %v1805
        %v1838 = vmul.f32 %v1770, %v1809
        %v1839 = vmul.f32 %v1771, %v1809
        %v1840 = vmul.f32 %v1772, %v1809
        %v1841 = vmul.f32 %v1773, %v1809
        %v1842 = vmul.f32 %v1774, %v1813
        %v1843 = vmul.f32 %v1775, %v1813
        %v1844 = vmul.f32 %v1776, %v1813
        %v1845 = vmul.f32 %v1777, %v1813
        %v1846 = vmul.f32 %v1778, %v1817
        %v1847 = vmul.f32 %v1779, %v1817
        %v1848 = vmul.f32 %v1780, %v1817
        %v1849 = vmul.f32 %v1781, %v1817
        %v1850 = vmul.f32 %v1782, %v1821
        %v1851 = vmul.f32 %v1783, %v1821
        %v1852 = vmul.f32 %v1784, %v1821
        %v1853 = vmul.f32 %v1785, %v1821
        %v1854 = vmax.f32 %v1822, %v1826
        %v1855 = vmax.f32 %v1854, %v1830
        %v1856 = vmax.f32 %v1855, %v1834
        %v1857 = vmax.f32 %v1856, %v1838
        %v1858 = vmax.f32 %v1857, %v1842
        %v1859 = vmax.f32 %v1858, %v1846
        %v1860 = vmax.f32 %v1859, %v1850
        %v1861 = vrot.slane %v1860, 4
        %v1862 = vmax.f32 %v1860, %v1861
        %v1863 = vrot.slane %v1862, 2
        %v1864 = vmax.f32 %v1862, %v1863
        %v1865 = vrot.slane %v1864, 1
        %v1866 = vmax.f32 %v1864, %v1865
        %v1867 = vmax.f32 %v1823, %v1827
        %v1868 = vmax.f32 %v1867, %v1831
        %v1869 = vmax.f32 %v1868, %v1835
        %v1870 = vmax.f32 %v1869, %v1839
        %v1871 = vmax.f32 %v1870, %v1843
        %v1872 = vmax.f32 %v1871, %v1847
        %v1873 = vmax.f32 %v1872, %v1851
        %v1874 = vrot.slane %v1873, 4
        %v1875 = vmax.f32 %v1873, %v1874
        %v1876 = vrot.slane %v1875, 2
        %v1877 = vmax.f32 %v1875, %v1876
        %v1878 = vrot.slane %v1877, 1
        %v1879 = vmax.f32 %v1877, %v1878
        %v1880 = vmax.f32 %v1824, %v1828
        %v1881 = vmax.f32 %v1880, %v1832
        %v1882 = vmax.f32 %v1881, %v1836
        %v1883 = vmax.f32 %v1882, %v1840
        %v1884 = vmax.f32 %v1883, %v1844
        %v1885 = vmax.f32 %v1884, %v1848
        %v1886 = vmax.f32 %v1885, %v1852
        %v1887 = vrot.slane %v1886, 4
        %v1888 = vmax.f32 %v1886, %v1887
        %v1889 = vrot.slane %v1888, 2
        %v1890 = vmax.f32 %v1888, %v1889
        %v1891 = vrot.slane %v1890, 1
        %v1892 = vmax.f32 %v1890, %v1891
        %v1893 = vmax.f32 %v1825, %v1829
        %v1894 = vmax.f32 %v1893, %v1833
        %v1895 = vmax.f32 %v1894, %v1837
        %v1896 = vmax.f32 %v1895, %v1841
        %v1897 = vmax.f32 %v1896, %v1845
        %v1898 = vmax.f32 %v1897, %v1849
        %v1899 = vmax.f32 %v1898, %v1853
        %v1900 = vrot.slane %v1899, 4
        %v1901 = vmax.f32 %v1899, %v1900
        %v1902 = vrot.slane %v1901, 2
        %v1903 = vmax.f32 %v1901, %v1902
        %v1904 = vrot.slane %v1903, 1
        %v1905 = vmax.f32 %v1903, %v1904
        %v1906 = vlaneseq
        %v1907 = vshrl.u32 %v1906, 7
        %v1908 = vsub.s32 1, %v1907
        %v1909 = vrot.slane %v1786, %v1908
        %1911 = vbcast.lane.b32.xlu0 %v1909, 256
        %v1912 = vpop.permute.xlu0 %1911
        %s1914 = sor.u32 256, 8
        %1915 = vbcast.lane.b32.xlu0 %v1909, %s1914
        %v1916 = vpop.permute.xlu0 %1915
        %s1918 = sor.u32 256, 16
        %1919 = vbcast.lane.b32.xlu0 %v1909, %s1918
        %v1920 = vpop.permute.xlu0 %1919
        %s1922 = sor.u32 256, 24
        %1923 = vbcast.lane.b32.xlu0 %v1909, %s1922
        %v1924 = vpop.permute.xlu0 %1923
        %s1926 = sor.u32 256, 32
        %1927 = vbcast.lane.b32.xlu0 %v1909, %s1926
        %v1928 = vpop.permute.xlu0 %1927
        %s1930 = sor.u32 256, 40
        %1931 = vbcast.lane.b32.xlu0 %v1909, %s1930
        %v1932 = vpop.permute.xlu0 %1931
        %s1934 = sor.u32 256, 48
        %1935 = vbcast.lane.b32.xlu0 %v1909, %s1934
        %v1936 = vpop.permute.xlu0 %1935
        %s1938 = sor.u32 256, 56
        %1939 = vbcast.lane.b32.xlu0 %v1909, %s1938
        %v1940 = vpop.permute.xlu0 %1939
        %v1941 = vmul.f32 %v1754, %v1912
        %v1942 = vmul.f32 %v1755, %v1912
        %v1943 = vmul.f32 %v1756, %v1912
        %v1944 = vmul.f32 %v1757, %v1912
        %v1945 = vmul.f32 %v1758, %v1916
        %v1946 = vmul.f32 %v1759, %v1916
        %v1947 = vmul.f32 %v1760, %v1916
        %v1948 = vmul.f32 %v1761, %v1916
        %v1949 = vmul.f32 %v1762, %v1920
        %v1950 = vmul.f32 %v1763, %v1920
        %v1951 = vmul.f32 %v1764, %v1920
        %v1952 = vmul.f32 %v1765, %v1920
        %v1953 = vmul.f32 %v1766, %v1924
        %v1954 = vmul.f32 %v1767, %v1924
        %v1955 = vmul.f32 %v1768, %v1924
        %v1956 = vmul.f32 %v1769, %v1924
        %v1957 = vmul.f32 %v1770, %v1928
        %v1958 = vmul.f32 %v1771, %v1928
        %v1959 = vmul.f32 %v1772, %v1928
        %v1960 = vmul.f32 %v1773, %v1928
        %v1961 = vmul.f32 %v1774, %v1932
        %v1962 = vmul.f32 %v1775, %v1932
        %v1963 = vmul.f32 %v1776, %v1932
        %v1964 = vmul.f32 %v1777, %v1932
        %v1965 = vmul.f32 %v1778, %v1936
        %v1966 = vmul.f32 %v1779, %v1936
        %v1967 = vmul.f32 %v1780, %v1936
        %v1968 = vmul.f32 %v1781, %v1936
        %v1969 = vmul.f32 %v1782, %v1940
        %v1970 = vmul.f32 %v1783, %v1940
        %v1971 = vmul.f32 %v1784, %v1940
        %v1972 = vmul.f32 %v1785, %v1940
        %v1973 = vmax.f32 %v1941, %v1945
        %v1974 = vmax.f32 %v1973, %v1949
        %v1975 = vmax.f32 %v1974, %v1953
        %v1976 = vmax.f32 %v1975, %v1957
        %v1977 = vmax.f32 %v1976, %v1961
        %v1978 = vmax.f32 %v1977, %v1965
        %v1979 = vmax.f32 %v1978, %v1969
        %v1980 = vrot.slane %v1979, 4
        %v1981 = vmax.f32 %v1979, %v1980
        %v1982 = vrot.slane %v1981, 2
        %v1983 = vmax.f32 %v1981, %v1982
        %v1984 = vrot.slane %v1983, 1
        %v1985 = vmax.f32 %v1983, %v1984
        %v1986 = vmax.f32 %v1942, %v1946
        %v1987 = vmax.f32 %v1986, %v1950
        %v1988 = vmax.f32 %v1987, %v1954
        %v1989 = vmax.f32 %v1988, %v1958
        %v1990 = vmax.f32 %v1989, %v1962
        %v1991 = vmax.f32 %v1990, %v1966
        %v1992 = vmax.f32 %v1991, %v1970
        %v1993 = vrot.slane %v1992, 4
        %v1994 = vmax.f32 %v1992, %v1993
        %v1995 = vrot.slane %v1994, 2
        %v1996 = vmax.f32 %v1994, %v1995
        %v1997 = vrot.slane %v1996, 1
        %v1998 = vmax.f32 %v1996, %v1997
        %v1999 = vmax.f32 %v1943, %v1947
        %v2000 = vmax.f32 %v1999, %v1951
        %v2001 = vmax.f32 %v2000, %v1955
        %v2002 = vmax.f32 %v2001, %v1959
        %v2003 = vmax.f32 %v2002, %v1963
        %v2004 = vmax.f32 %v2003, %v1967
        %v2005 = vmax.f32 %v2004, %v1971
        %v2006 = vrot.slane %v2005, 4
        %v2007 = vmax.f32 %v2005, %v2006
        %v2008 = vrot.slane %v2007, 2
        %v2009 = vmax.f32 %v2007, %v2008
        %v2010 = vrot.slane %v2009, 1
        %v2011 = vmax.f32 %v2009, %v2010
        %v2012 = vmax.f32 %v1944, %v1948
        %v2013 = vmax.f32 %v2012, %v1952
        %v2014 = vmax.f32 %v2013, %v1956
        %v2015 = vmax.f32 %v2014, %v1960
        %v2016 = vmax.f32 %v2015, %v1964
        %v2017 = vmax.f32 %v2016, %v1968
        %v2018 = vmax.f32 %v2017, %v1972
        %v2019 = vrot.slane %v2018, 4
        %v2020 = vmax.f32 %v2018, %v2019
        %v2021 = vrot.slane %v2020, 2
        %v2022 = vmax.f32 %v2020, %v2021
        %v2023 = vrot.slane %v2022, 1
        %v2024 = vmax.f32 %v2022, %v2023
        %vm2025 = vcmask 1040384
        %v2026 = vsel %vm2025, %v1866, %v1985
        %v2027 = vsel %vm2025, %v1879, %v1998
        %v2028 = vsel %vm2025, %v1892, %v2011
        %v2029 = vsel %vm2025, %v1905, %v2024
        %v2034 = vcombine.low %v2026, %v2027
        %v2035 = vcombine.low %v2028, %v2029
        %v2037 = vunpack.c.l.s4 1983009808
        %v2038 = vunpack.c.0.s8 %v2037
        %v2039 = vlaneseq
        %v2040 = vshrl.u32 %v2039, 7
        %v2041 = vsub.s32 %v2038, %v2040
        %v2042 = vrot.slane %v2034, %v2041
        %v2044 = vunpack.c.l.s4 1983009808
        %v2045 = vunpack.c.0.s8 %v2044
        %v2046 = vlaneseq
        %v2047 = vshrl.u32 %v2046, 7
        %v2048 = vsub.s32 %v2045, %v2047
        %v2049 = vrot.slane %v2035, %v2048
        %v2050 = vcombine.low %v2042, %v2049
        %2052 = vst [vmem:[%s304] sm:$0xff] %v2050
        %s2053 = smul.u32 4, %s18
        %p2054 = scmp.lt.s32.totalorder %s2053, 7
        %s2055 = scalar_select %p2054, %s2053, 7
        %s2056 = smul.addr %s2055, 2
        %s2057 = scalar_lea.vmem %s5, %s2056
        // Predicated region
        $region57: #{sgc_classifier.2} parent=39 // pred_check
          %p2058 = pneg %p151
        $region58: #{sgc_classifier.2} parent=39 // pred_check_branch
          %2060 = sbr.rel (%p2058) target = $region60
        $region59: #{sgc_classifier.2} parent=39 // pred_region
          %s2061 = smul.u32 4, %s18
        $region60: #{sgc_classifier.2} parent=39 // pred_fallthru
          _
      $region40: #{sgc_classifier.2} parent=5 // pred_fallthru
        _
      %p2062 = scmp.le.s32.totalorder 2, %s13
      // Predicated region
      $region61: #{sgc_classifier.2} parent=5 // pred_check
        %p2063 = pneg %p2062
      $region62: #{sgc_classifier.2} parent=5 // pred_check_branch
        %2065 = sbr.rel (%p2063) target = $region64
      $region63: #{sgc_classifier.2} parent=5 // pred_region
        %s2066 = ssub.s32 %s13, 2
        // Predicated region
        $region65: #{sgc_classifier.2} parent=63 // pred_check
          %p2067 = pneg %p157
        $region66: #{sgc_classifier.2} parent=63 // pred_check_branch
          %2069 = sbr.rel (%p2067) target = $region68
        $region67: #{sgc_classifier.2} parent=63 // pred_region
          %s2070 = smul.u32 4, %s19
          %p2071 = scmp.lt.s32.totalorder %s2070, 7
          %s2072 = scalar_select %p2071, %s2070, 7
          %s2073 = smul.addr %s2072, 2
          %s2074 = scalar_lea.vmem %s5, %s2073
        $region68: #{sgc_classifier.2} parent=63 // pred_fallthru
          _
      $region64: #{sgc_classifier.2} parent=5 // pred_fallthru
        _
    $region6: #{sgc_classifier.2} parent=1 // loop_footer
      %s17 = sadd.s32 1, %s13
    $region7: #{sgc_classifier.2} parent=1 // loop_footer_branch
      %12 = sbr.rel target = $region3
    $region8: #{sgc_classifier.2} parent=1 // loop_exit
      _
    %2075 = vsyncpa [#allocation3], 1
    %s2076 = scalar_lea.sflag [#allocation3], 1
    %2077 = vsyncpa %s2076, 1
    %2078 = vsyncpa [#allocation5], 1

// kernel: sgc_classifier.3
$region0: #{sgc_classifier.3}
  #allocation0 [shape = 'u32[]', space=smem, size = 0x4, offset = 0x4, fixed_abs, tag = 'smem constant byte address 0x4 - core index']
  #allocation1 [shape = 'u32[144,128]{1,0:T(1,128)}', space=vmem, size = 0x12000, scoped, tag = 'internal scratch']
  %s0 = inlined_call_operand.vmem [shape: f32[2,1024], index: 0, kind: input, shape index: {}]
  %s1 = inlined_call_operand.hbm [shape: bf16[1024,512], index: 1, kind: input, shape index: {}]
  %s2 = inlined_call_operand.vmem [shape: f32[1,512], index: 2, kind: input, shape index: {}]
  %s3 = inlined_call_operand.vmem [shape: bf16[512,256], index: 3, kind: input, shape index: {}]
  %s4 = inlined_call_operand.vmem [shape: f32[1,256], index: 4, kind: input, shape index: {}]
  %s5 = inlined_call_operand.vmem [shape: f32[256,10], index: 5, kind: input, shape index: {}]
  %s6 = inlined_call_operand.vmem [shape: f32[1,10], index: 6, kind: input, shape index: {}]
  %s7 = inlined_call_operand.hbm [shape: f32[2,10], index: 7, kind: output, shape index: {}]
  %s8 = sld [smem:[#allocation0]]
  $region42: #{sgc_classifier.3} parent=0
    _
  %s10 = ssub.s32 1, %s8
  %s11 = scalar_select 0, %s10, %s8
  $region1: #{sgc_classifier.3} parent=0
    #allocation2 [shape = 'u8[1048576]{0}', space=vmem, size = 0x100000, scoped, tag = 'input window, operand 1, single buffered']
    #allocation3 [shape = 's32[1]{0}', space=sflag, size = 0x4, scoped, tag = 'scoped memory for sgc_classifier.3']
    #allocation4 [shape = 's32[1]{0}', space=sflag, size = 0x4, scoped, tag = 'scoped memory for sgc_classifier.3']
    #allocation5 [shape = 'u8[1024]{0}', space=vmem, size = 0x400, scoped, tag = 'output window, operand 0, single buffered']
    %12 = vsyncpa [#allocation3], 0
    %13 = vsyncpa [#allocation4], 0
    // Predicated region
    $region2: #{sgc_classifier.3} parent=1 // pred_check
      _
    $region3: #{sgc_classifier.3} parent=1 // pred_check_branch
      %15 = sbr.rel (0) target = $region5
    $region4: #{sgc_classifier.3} parent=1 // pred_region
      _
    $region5: #{sgc_classifier.3} parent=1 // pred_fallthru
      _
    // Predicated region
    $region6: #{sgc_classifier.3} parent=1 // pred_check
      _
    $region7: #{sgc_classifier.3} parent=1 // pred_check_branch
      %17 = sbr.rel (0) target = $region9
    $region8: #{sgc_classifier.3} parent=1 // pred_region
      %s19 = ssub.s32 32768, 32768
      %20 = vsyncadd [#allocation3], %s19
      %s21 = sshll.u32 [#allocation2], 4
      %s22 = int_to_ptr.vmem [resolvable:$true] %s21
      %27 = dma.hbm_to_vmem [thread:$0]  %s1, 32768, %s22, [#allocation3], 256, 256, 16
    $region9: #{sgc_classifier.3} parent=1 // pred_fallthru
      _
    // Predicated region
    $region10: #{sgc_classifier.3} parent=1 // pred_check
      _
    $region11: #{sgc_classifier.3} parent=1 // pred_check_branch
      %29 = sbr.rel (0) target = $region13
    $region12: #{sgc_classifier.3} parent=1 // pred_region
      _
    $region13: #{sgc_classifier.3} parent=1 // pred_fallthru
      _
    // Predicated region
    $region14: #{sgc_classifier.3} parent=1 // pred_check
      _
    $region15: #{sgc_classifier.3} parent=1 // pred_check_branch
      %31 = sbr.rel (0) target = $region17
    $region16: #{sgc_classifier.3} parent=1 // pred_region
      _
    $region17: #{sgc_classifier.3} parent=1 // pred_fallthru
      _
    // Predicated region
    $region18: #{sgc_classifier.3} parent=1 // pred_check
      _
    $region19: #{sgc_classifier.3} parent=1 // pred_check_branch
      %33 = sbr.rel (0) target = $region21
    $region20: #{sgc_classifier.3} parent=1 // pred_region
      _
    $region21: #{sgc_classifier.3} parent=1 // pred_fallthru
      _
    // Predicated region
    $region22: #{sgc_classifier.3} parent=1 // pred_check
      _
    $region23: #{sgc_classifier.3} parent=1 // pred_check_branch
      %35 = sbr.rel (0) target = $region25
    $region24: #{sgc_classifier.3} parent=1 // pred_region
      _
    $region25: #{sgc_classifier.3} parent=1 // pred_fallthru
      _
    // Predicated region
    $region26: #{sgc_classifier.3} parent=1 // pred_check
      _
    $region27: #{sgc_classifier.3} parent=1 // pred_check_branch
      %37 = sbr.rel (0) target = $region29
    $region28: #{sgc_classifier.3} parent=1 // pred_region
      _
    $region29: #{sgc_classifier.3} parent=1 // pred_fallthru
      _
    // Predicated region
    $region30: #{sgc_classifier.3} parent=1 // pred_check
      _
    $region31: #{sgc_classifier.3} parent=1 // pred_check_branch
      %39 = sbr.rel (0) target = $region33
    $region32: #{sgc_classifier.3} parent=1 // pred_region
      %40 = dma.done [#allocation3], 32768
    $region33: #{sgc_classifier.3} parent=1 // pred_fallthru
      _
    %v41 = vld [vmem:[%s0] sm:$0xff]
    %v42 = vld [vmem:[%s0 + $0x8] sm:$0xff]
    %v45 = vcombine.high %v41, %v41
    %v47 = vunpack.c.l.s4 1983009808
    %v48 = vunpack.c.0.s8 %v47
    %v49 = vlaneseq
    %v50 = vshrl.u32 %v49, 7
    %v51 = vsub.s32 %v48, %v50
    %v52 = vrot.slane %v41, %v51
    %v54 = vunpack.c.l.s4 1983009808
    %v55 = vunpack.c.0.s8 %v54
    %v56 = vlaneseq
    %v57 = vshrl.u32 %v56, 7
    %v58 = vsub.s32 %v55, %v57
    %v59 = vrot.slane %v45, %v58
    %v60 = vcombine.high %v52, %v52
    %v61 = vcombine.high %v59, %v59
    %v62 = vcombine.high %v42, %v42
    %v64 = vunpack.c.l.s4 1983009808
    %v65 = vunpack.c.0.s8 %v64
    %v66 = vlaneseq
    %v67 = vshrl.u32 %v66, 7
    %v68 = vsub.s32 %v65, %v67
    %v69 = vrot.slane %v42, %v68
    %v71 = vunpack.c.l.s4 1983009808
    %v72 = vunpack.c.0.s8 %v71
    %v73 = vlaneseq
    %v74 = vshrl.u32 %v73, 7
    %v75 = vsub.s32 %v72, %v74
    %v76 = vrot.slane %v62, %v75
    %v77 = vcombine.high %v69, %v69
    %v78 = vcombine.high %v76, %v76
    %v87 = vpack.c.bf16 %v52, %v52
    %v88 = vpack.c.bf16 %v60, %v60
    %v89 = vpack.c.bf16 %v59, %v59
    %v90 = vpack.c.bf16 %v61, %v61
    %v91 = vpack.c.bf16 %v69, %v69
    %v92 = vpack.c.bf16 %v77, %v77
    %v93 = vpack.c.bf16 %v76, %v76
    %v94 = vpack.c.bf16 %v78, %v78
    %v95 = vld [vmem:[#allocation2] sm:$0xff]
    %v96 = vld [vmem:[#allocation2 + $0x8] sm:$0xff]
    %v97 = vld [vmem:[#allocation2 + $0x10] sm:$0xff]
    %v98 = vld [vmem:[#allocation2 + $0x18] sm:$0xff]
    %v99 = vld [vmem:[#allocation2 + $0x20] sm:$0xff]
    %v100 = vld [vmem:[#allocation2 + $0x28] sm:$0xff]
    %v101 = vld [vmem:[#allocation2 + $0x30] sm:$0xff]
    %v102 = vld [vmem:[#allocation2 + $0x38] sm:$0xff]
    %v103 = vld [vmem:[#allocation2 + $0x40] sm:$0xff]
    %v104 = vld [vmem:[#allocation2 + $0x48] sm:$0xff]
    %v105 = vld [vmem:[#allocation2 + $0x50] sm:$0xff]
    %v106 = vld [vmem:[#allocation2 + $0x58] sm:$0xff]
    %v107 = vld [vmem:[#allocation2 + $0x60] sm:$0xff]
    %v108 = vld [vmem:[#allocation2 + $0x68] sm:$0xff]
    %v109 = vld [vmem:[#allocation2 + $0x70] sm:$0xff]
    %v110 = vld [vmem:[#allocation2 + $0x78] sm:$0xff]
    %v111 = vld [vmem:[#allocation2 + $0x80] sm:$0xff]
    %v112 = vld [vmem:[#allocation2 + $0x88] sm:$0xff]
    %v113 = vld [vmem:[#allocation2 + $0x90] sm:$0xff]
    %v114 = vld [vmem:[#allocation2 + $0x98] sm:$0xff]
    %v115 = vld [vmem:[#allocation2 + $0xa0] sm:$0xff]
    %v116 = vld [vmem:[#allocation2 + $0xa8] sm:$0xff]
    %v117 = vld [vmem:[#allocation2 + $0xb0] sm:$0xff]
    %v118 = vld [vmem:[#allocation2 + $0xb8] sm:$0xff]
    %v119 = vld [vmem:[#allocation2 + $0xc0] sm:$0xff]
    %v120 = vld [vmem:[#allocation2 + $0xc8] sm:$0xff]
    %v121 = vld [vmem:[#allocation2 + $0xd0] sm:$0xff]
    %v122 = vld [vmem:[#allocation2 + $0xd8] sm:$0xff]
    %v123 = vld [vmem:[#allocation2 + $0xe0] sm:$0xff]
    %v124 = vld [vmem:[#allocation2 + $0xe8] sm:$0xff]
    %v125 = vld [vmem:[#allocation2 + $0xf0] sm:$0xff]
    %v126 = vld [vmem:[#allocation2 + $0xf8] sm:$0xff]
    %v127 = vld [vmem:[#allocation2 + $0x100] sm:$0xff]
    %v128 = vld [vmem:[#allocation2 + $0x108] sm:$0xff]
    %v129 = vld [vmem:[#allocation2 + $0x110] sm:$0xff]
    %v130 = vld [vmem:[#allocation2 + $0x118] sm:$0xff]
    %v131 = vld [vmem:[#allocation2 + $0x120] sm:$0xff]
    %v132 = vld [vmem:[#allocation2 + $0x128] sm:$0xff]
    %v133 = vld [vmem:[#allocation2 + $0x130] sm:$0xff]
    %v134 = vld [vmem:[#allocation2 + $0x138] sm:$0xff]
    %v135 = vld [vmem:[#allocation2 + $0x140] sm:$0xff]
    %v136 = vld [vmem:[#allocation2 + $0x148] sm:$0xff]
    %v137 = vld [vmem:[#allocation2 + $0x150] sm:$0xff]
    %v138 = vld [vmem:[#allocation2 + $0x158] sm:$0xff]
    %v139 = vld [vmem:[#allocation2 + $0x160] sm:$0xff]
    %v140 = vld [vmem:[#allocation2 + $0x168] sm:$0xff]
    %v141 = vld [vmem:[#allocation2 + $0x170] sm:$0xff]
    %v142 = vld [vmem:[#allocation2 + $0x178] sm:$0xff]
    %v143 = vld [vmem:[#allocation2 + $0x180] sm:$0xff]
    %v144 = vld [vmem:[#allocation2 + $0x188] sm:$0xff]
    %v145 = vld [vmem:[#allocation2 + $0x190] sm:$0xff]
    %v146 = vld [vmem:[#allocation2 + $0x198] sm:$0xff]
    %v147 = vld [vmem:[#allocation2 + $0x1a0] sm:$0xff]
    %v148 = vld [vmem:[#allocation2 + $0x1a8] sm:$0xff]
    %v149 = vld [vmem:[#allocation2 + $0x1b0] sm:$0xff]
    %v150 = vld [vmem:[#allocation2 + $0x1b8] sm:$0xff]
    %v151 = vld [vmem:[#allocation2 + $0x1c0] sm:$0xff]
    %v152 = vld [vmem:[#allocation2 + $0x1c8] sm:$0xff]
    %v153 = vld [vmem:[#allocation2 + $0x1d0] sm:$0xff]
    %v154 = vld [vmem:[#allocation2 + $0x1d8] sm:$0xff]
    %v155 = vld [vmem:[#allocation2 + $0x1e0] sm:$0xff]
    %v156 = vld [vmem:[#allocation2 + $0x1e8] sm:$0xff]
    %v157 = vld [vmem:[#allocation2 + $0x1f0] sm:$0xff]
    %v158 = vld [vmem:[#allocation2 + $0x1f8] sm:$0xff]
    %v159 = vld [vmem:[#allocation2 + $0x200] sm:$0xff]
    %v160 = vld [vmem:[#allocation2 + $0x208] sm:$0xff]
    %v161 = vld [vmem:[#allocation2 + $0x210] sm:$0xff]
    %v162 = vld [vmem:[#allocation2 + $0x218] sm:$0xff]
    %v163 = vld [vmem:[#allocation2 + $0x220] sm:$0xff]
    %v164 = vld [vmem:[#allocation2 + $0x228] sm:$0xff]
    %v165 = vld [vmem:[#allocation2 + $0x230] sm:$0xff]
    %v166 = vld [vmem:[#allocation2 + $0x238] sm:$0xff]
    %v167 = vld [vmem:[#allocation2 + $0x240] sm:$0xff]
    %v168 = vld [vmem:[#allocation2 + $0x248] sm:$0xff]
    %v169 = vld [vmem:[#allocation2 + $0x250] sm:$0xff]
    %v170 = vld [vmem:[#allocation2 + $0x258] sm:$0xff]
    %v171 = vld [vmem:[#allocation2 + $0x260] sm:$0xff]
    %v172 = vld [vmem:[#allocation2 + $0x268] sm:$0xff]
    %v173 = vld [vmem:[#allocation2 + $0x270] sm:$0xff]
    %v174 = vld [vmem:[#allocation2 + $0x278] sm:$0xff]
    %v175 = vld [vmem:[#allocation2 + $0x280] sm:$0xff]
    %v176 = vld [vmem:[#allocation2 + $0x288] sm:$0xff]
    %v177 = vld [vmem:[#allocation2 + $0x290] sm:$0xff]
    %v178 = vld [vmem:[#allocation2 + $0x298] sm:$0xff]
    %v179 = vld [vmem:[#allocation2 + $0x2a0] sm:$0xff]
    %v180 = vld [vmem:[#allocation2 + $0x2a8] sm:$0xff]
    %v181 = vld [vmem:[#allocation2 + $0x2b0] sm:$0xff]
    %v182 = vld [vmem:[#allocation2 + $0x2b8] sm:$0xff]
    %v183 = vld [vmem:[#allocation2 + $0x2c0] sm:$0xff]
    %v184 = vld [vmem:[#allocation2 + $0x2c8] sm:$0xff]
    %v185 = vld [vmem:[#allocation2 + $0x2d0] sm:$0xff]
    %v186 = vld [vmem:[#allocation2 + $0x2d8] sm:$0xff]
    %v187 = vld [vmem:[#allocation2 + $0x2e0] sm:$0xff]
    %v188 = vld [vmem:[#allocation2 + $0x2e8] sm:$0xff]
    %v189 = vld [vmem:[#allocation2 + $0x2f0] sm:$0xff]
    %v190 = vld [vmem:[#allocation2 + $0x2f8] sm:$0xff]
    %v191 = vld [vmem:[#allocation2 + $0x300] sm:$0xff]
    %v192 = vld [vmem:[#allocation2 + $0x308] sm:$0xff]
    %v193 = vld [vmem:[#allocation2 + $0x310] sm:$0xff]
    %v194 = vld [vmem:[#allocation2 + $0x318] sm:$0xff]
    %v195 = vld [vmem:[#allocation2 + $0x320] sm:$0xff]
    %v196 = vld [vmem:[#allocation2 + $0x328] sm:$0xff]
    %v197 = vld [vmem:[#allocation2 + $0x330] sm:$0xff]
    %v198 = vld [vmem:[#allocation2 + $0x338] sm:$0xff]
    %v199 = vld [vmem:[#allocation2 + $0x340] sm:$0xff]
    %v200 = vld [vmem:[#allocation2 + $0x348] sm:$0xff]
    %v201 = vld [vmem:[#allocation2 + $0x350] sm:$0xff]
    %v202 = vld [vmem:[#allocation2 + $0x358] sm:$0xff]
    %v203 = vld [vmem:[#allocation2 + $0x360] sm:$0xff]
    %v204 = vld [vmem:[#allocation2 + $0x368] sm:$0xff]
    %v205 = vld [vmem:[#allocation2 + $0x370] sm:$0xff]
    %v206 = vld [vmem:[#allocation2 + $0x378] sm:$0xff]
    %v207 = vld [vmem:[#allocation2 + $0x380] sm:$0xff]
    %v208 = vld [vmem:[#allocation2 + $0x388] sm:$0xff]
    %v209 = vld [vmem:[#allocation2 + $0x390] sm:$0xff]
    %v210 = vld [vmem:[#allocation2 + $0x398] sm:$0xff]
    %v211 = vld [vmem:[#allocation2 + $0x3a0] sm:$0xff]
    %v212 = vld [vmem:[#allocation2 + $0x3a8] sm:$0xff]
    %v213 = vld [vmem:[#allocation2 + $0x3b0] sm:$0xff]
    %v214 = vld [vmem:[#allocation2 + $0x3b8] sm:$0xff]
    %v215 = vld [vmem:[#allocation2 + $0x3c0] sm:$0xff]
    %v216 = vld [vmem:[#allocation2 + $0x3c8] sm:$0xff]
    %v217 = vld [vmem:[#allocation2 + $0x3d0] sm:$0xff]
    %v218 = vld [vmem:[#allocation2 + $0x3d8] sm:$0xff]
    %v219 = vld [vmem:[#allocation2 + $0x3e0] sm:$0xff]
    %v220 = vld [vmem:[#allocation2 + $0x3e8] sm:$0xff]
    %v221 = vld [vmem:[#allocation2 + $0x3f0] sm:$0xff]
    %v222 = vld [vmem:[#allocation2 + $0x3f8] sm:$0xff]
    %v223 = vld [vmem:[#allocation2 + $0x400] sm:$0xff]
    %v224 = vld [vmem:[#allocation2 + $0x408] sm:$0xff]
    %v225 = vld [vmem:[#allocation2 + $0x410] sm:$0xff]
    %v226 = vld [vmem:[#allocation2 + $0x418] sm:$0xff]
    %v227 = vld [vmem:[#allocation2 + $0x420] sm:$0xff]
    %v228 = vld [vmem:[#allocation2 + $0x428] sm:$0xff]
    %v229 = vld [vmem:[#allocation2 + $0x430] sm:$0xff]
    %v230 = vld [vmem:[#allocation2 + $0x438] sm:$0xff]
    %v231 = vld [vmem:[#allocation2 + $0x440] sm:$0xff]
    %v232 = vld [vmem:[#allocation2 + $0x448] sm:$0xff]
    %v233 = vld [vmem:[#allocation2 + $0x450] sm:$0xff]
    %v234 = vld [vmem:[#allocation2 + $0x458] sm:$0xff]
    %v235 = vld [vmem:[#allocation2 + $0x460] sm:$0xff]
    %v236 = vld [vmem:[#allocation2 + $0x468] sm:$0xff]
    %v237 = vld [vmem:[#allocation2 + $0x470] sm:$0xff]
    %v238 = vld [vmem:[#allocation2 + $0x478] sm:$0xff]
    %v239 = vld [vmem:[#allocation2 + $0x480] sm:$0xff]
    %v240 = vld [vmem:[#allocation2 + $0x488] sm:$0xff]
    %v241 = vld [vmem:[#allocation2 + $0x490] sm:$0xff]
    %v242 = vld [vmem:[#allocation2 + $0x498] sm:$0xff]
    %v243 = vld [vmem:[#allocation2 + $0x4a0] sm:$0xff]
    %v244 = vld [vmem:[#allocation2 + $0x4a8] sm:$0xff]
    %v245 = vld [vmem:[#allocation2 + $0x4b0] sm:$0xff]
    %v246 = vld [vmem:[#allocation2 + $0x4b8] sm:$0xff]
    %v247 = vld [vmem:[#allocation2 + $0x4c0] sm:$0xff]
    %v248 = vld [vmem:[#allocation2 + $0x4c8] sm:$0xff]
    %v249 = vld [vmem:[#allocation2 + $0x4d0] sm:$0xff]
    %v250 = vld [vmem:[#allocation2 + $0x4d8] sm:$0xff]
    %v251 = vld [vmem:[#allocation2 + $0x4e0] sm:$0xff]
    %v252 = vld [vmem:[#allocation2 + $0x4e8] sm:$0xff]
    %v253 = vld [vmem:[#allocation2 + $0x4f0] sm:$0xff]
    %v254 = vld [vmem:[#allocation2 + $0x4f8] sm:$0xff]
    %v255 = vld [vmem:[#allocation2 + $0x500] sm:$0xff]
    %v256 = vld [vmem:[#allocation2 + $0x508] sm:$0xff]
    %v257 = vld [vmem:[#allocation2 + $0x510] sm:$0xff]
    %v258 = vld [vmem:[#allocation2 + $0x518] sm:$0xff]
    %v259 = vld [vmem:[#allocation2 + $0x520] sm:$0xff]
    %v260 = vld [vmem:[#allocation2 + $0x528] sm:$0xff]
    %v261 = vld [vmem:[#allocation2 + $0x530] sm:$0xff]
    %v262 = vld [vmem:[#allocation2 + $0x538] sm:$0xff]
    %v263 = vld [vmem:[#allocation2 + $0x540] sm:$0xff]
    %v264 = vld [vmem:[#allocation2 + $0x548] sm:$0xff]
    %v265 = vld [vmem:[#allocation2 + $0x550] sm:$0xff]
    %v266 = vld [vmem:[#allocation2 + $0x558] sm:$0xff]
    %v267 = vld [vmem:[#allocation2 + $0x560] sm:$0xff]
    %v268 = vld [vmem:[#allocation2 + $0x568] sm:$0xff]
    %v269 = vld [vmem:[#allocation2 + $0x570] sm:$0xff]
    %v270 = vld [vmem:[#allocation2 + $0x578] sm:$0xff]
    %v271 = vld [vmem:[#allocation2 + $0x580] sm:$0xff]
    %v272 = vld [vmem:[#allocation2 + $0x588] sm:$0xff]
    %v273 = vld [vmem:[#allocation2 + $0x590] sm:$0xff]
    %v274 = vld [vmem:[#allocation2 + $0x598] sm:$0xff]
    %v275 = vld [vmem:[#allocation2 + $0x5a0] sm:$0xff]
    %v276 = vld [vmem:[#allocation2 + $0x5a8] sm:$0xff]
    %v277 = vld [vmem:[#allocation2 + $0x5b0] sm:$0xff]
    %v278 = vld [vmem:[#allocation2 + $0x5b8] sm:$0xff]
    %v279 = vld [vmem:[#allocation2 + $0x5c0] sm:$0xff]
    %v280 = vld [vmem:[#allocation2 + $0x5c8] sm:$0xff]
    %v281 = vld [vmem:[#allocation2 + $0x5d0] sm:$0xff]
    %v282 = vld [vmem:[#allocation2 + $0x5d8] sm:$0xff]
    %v283 = vld [vmem:[#allocation2 + $0x5e0] sm:$0xff]
    %v284 = vld [vmem:[#allocation2 + $0x5e8] sm:$0xff]
    %v285 = vld [vmem:[#allocation2 + $0x5f0] sm:$0xff]
    %v286 = vld [vmem:[#allocation2 + $0x5f8] sm:$0xff]
    %v287 = vld [vmem:[#allocation2 + $0x600] sm:$0xff]
    %v288 = vld [vmem:[#allocation2 + $0x608] sm:$0xff]
    %v289 = vld [vmem:[#allocation2 + $0x610] sm:$0xff]
    %v290 = vld [vmem:[#allocation2 + $0x618] sm:$0xff]
    %v291 = vld [vmem:[#allocation2 + $0x620] sm:$0xff]
    %v292 = vld [vmem:[#allocation2 + $0x628] sm:$0xff]
    %v293 = vld [vmem:[#allocation2 + $0x630] sm:$0xff]
    %v294 = vld [vmem:[#allocation2 + $0x638] sm:$0xff]
    %v295 = vld [vmem:[#allocation2 + $0x640] sm:$0xff]
    %v296 = vld [vmem:[#allocation2 + $0x648] sm:$0xff]
    %v297 = vld [vmem:[#allocation2 + $0x650] sm:$0xff]
    %v298 = vld [vmem:[#allocation2 + $0x658] sm:$0xff]
    %v299 = vld [vmem:[#allocation2 + $0x660] sm:$0xff]
    %v300 = vld [vmem:[#allocation2 + $0x668] sm:$0xff]
    %v301 = vld [vmem:[#allocation2 + $0x670] sm:$0xff]
    %v302 = vld [vmem:[#allocation2 + $0x678] sm:$0xff]
    %v303 = vld [vmem:[#allocation2 + $0x680] sm:$0xff]
    %v304 = vld [vmem:[#allocation2 + $0x688] sm:$0xff]
    %v305 = vld [vmem:[#allocation2 + $0x690] sm:$0xff]
    %v306 = vld [vmem:[#allocation2 + $0x698] sm:$0xff]
    %v307 = vld [vmem:[#allocation2 + $0x6a0] sm:$0xff]
    %v308 = vld [vmem:[#allocation2 + $0x6a8] sm:$0xff]
    %v309 = vld [vmem:[#allocation2 + $0x6b0] sm:$0xff]
    %v310 = vld [vmem:[#allocation2 + $0x6b8] sm:$0xff]
    %v311 = vld [vmem:[#allocation2 + $0x6c0] sm:$0xff]
    %v312 = vld [vmem:[#allocation2 + $0x6c8] sm:$0xff]
    %v313 = vld [vmem:[#allocation2 + $0x6d0] sm:$0xff]
    %v314 = vld [vmem:[#allocation2 + $0x6d8] sm:$0xff]
    %v315 = vld [vmem:[#allocation2 + $0x6e0] sm:$0xff]
    %v316 = vld [vmem:[#allocation2 + $0x6e8] sm:$0xff]
    %v317 = vld [vmem:[#allocation2 + $0x6f0] sm:$0xff]
    %v318 = vld [vmem:[#allocation2 + $0x6f8] sm:$0xff]
    %v319 = vld [vmem:[#allocation2 + $0x700] sm:$0xff]
    %v320 = vld [vmem:[#allocation2 + $0x708] sm:$0xff]
    %v321 = vld [vmem:[#allocation2 + $0x710] sm:$0xff]
    %v322 = vld [vmem:[#allocation2 + $0x718] sm:$0xff]
    %v323 = vld [vmem:[#allocation2 + $0x720] sm:$0xff]
    %v324 = vld [vmem:[#allocation2 + $0x728] sm:$0xff]
    %v325 = vld [vmem:[#allocation2 + $0x730] sm:$0xff]
    %v326 = vld [vmem:[#allocation2 + $0x738] sm:$0xff]
    %v327 = vld [vmem:[#allocation2 + $0x740] sm:$0xff]
    %v328 = vld [vmem:[#allocation2 + $0x748] sm:$0xff]
    %v329 = vld [vmem:[#allocation2 + $0x750] sm:$0xff]
    %v330 = vld [vmem:[#allocation2 + $0x758] sm:$0xff]
    %v331 = vld [vmem:[#allocation2 + $0x760] sm:$0xff]
    %v332 = vld [vmem:[#allocation2 + $0x768] sm:$0xff]
    %v333 = vld [vmem:[#allocation2 + $0x770] sm:$0xff]
    %v334 = vld [vmem:[#allocation2 + $0x778] sm:$0xff]
    %v335 = vld [vmem:[#allocation2 + $0x780] sm:$0xff]
    %v336 = vld [vmem:[#allocation2 + $0x788] sm:$0xff]
    %v337 = vld [vmem:[#allocation2 + $0x790] sm:$0xff]
    %v338 = vld [vmem:[#allocation2 + $0x798] sm:$0xff]
    %v339 = vld [vmem:[#allocation2 + $0x7a0] sm:$0xff]
    %v340 = vld [vmem:[#allocation2 + $0x7a8] sm:$0xff]
    %v341 = vld [vmem:[#allocation2 + $0x7b0] sm:$0xff]
    %v342 = vld [vmem:[#allocation2 + $0x7b8] sm:$0xff]
    %v343 = vld [vmem:[#allocation2 + $0x7c0] sm:$0xff]
    %v344 = vld [vmem:[#allocation2 + $0x7c8] sm:$0xff]
    %v345 = vld [vmem:[#allocation2 + $0x7d0] sm:$0xff]
    %v346 = vld [vmem:[#allocation2 + $0x7d8] sm:$0xff]
    %v347 = vld [vmem:[#allocation2 + $0x7e0] sm:$0xff]
    %v348 = vld [vmem:[#allocation2 + $0x7e8] sm:$0xff]
    %v349 = vld [vmem:[#allocation2 + $0x7f0] sm:$0xff]
    %v350 = vld [vmem:[#allocation2 + $0x7f8] sm:$0xff]
    %v351 = vld [vmem:[%s2] sm:$0xf]
    %v353 = vlaneseq
    %v354 = vshrl.u32 %v353, 7
    %v355 = vsub.s32 0, %v354
    %v356 = vrot.slane %v351, %v355
    %v357 = vlaneseq
    %v358 = vshrl.u32 %v357, 7
    %v359 = vsub.s32 1, %v358
    %v360 = vrot.slane %v351, %v359
    %v361 = vlaneseq
    %v362 = vshrl.u32 %v361, 7
    %v363 = vsub.s32 2, %v362
    %v364 = vrot.slane %v351, %v363
    %v365 = vlaneseq
    %v366 = vshrl.u32 %v365, 7
    %v367 = vsub.s32 3, %v366
    %v368 = vrot.slane %v351, %v367
    %v629 = vunpack.c.l.b16 %v95
    %v630 = vunpack.c.h.b16 %v95
    %v631 = vunpack.c.l.b16 %v96
    %v632 = vunpack.c.h.b16 %v96
    %v633 = vunpack.c.l.b16 %v97
    %v634 = vunpack.c.h.b16 %v97
    %v635 = vunpack.c.l.b16 %v98
    %v636 = vunpack.c.h.b16 %v98
    %v637 = vunpack.c.l.b16 %v99
    %v638 = vunpack.c.h.b16 %v99
    %v639 = vunpack.c.l.b16 %v100
    %v640 = vunpack.c.h.b16 %v100
    %v641 = vunpack.c.l.b16 %v101
    %v642 = vunpack.c.h.b16 %v101
    %v643 = vunpack.c.l.b16 %v102
    %v644 = vunpack.c.h.b16 %v102
    %v645 = vunpack.c.l.b16 %v103
    %v646 = vunpack.c.h.b16 %v103
    %v647 = vunpack.c.l.b16 %v104
    %v648 = vunpack.c.h.b16 %v104
    %v649 = vunpack.c.l.b16 %v105
    %v650 = vunpack.c.h.b16 %v105
    %v651 = vunpack.c.l.b16 %v106
    %v652 = vunpack.c.h.b16 %v106
    %v653 = vunpack.c.l.b16 %v107
    %v654 = vunpack.c.h.b16 %v107
    %v655 = vunpack.c.l.b16 %v108
    %v656 = vunpack.c.h.b16 %v108
    %v657 = vunpack.c.l.b16 %v109
    %v658 = vunpack.c.h.b16 %v109
    %v659 = vunpack.c.l.b16 %v110
    %v660 = vunpack.c.h.b16 %v110
    %v661 = vunpack.c.l.b16 %v111
    %v662 = vunpack.c.h.b16 %v111
    %v663 = vunpack.c.l.b16 %v112
    %v664 = vunpack.c.h.b16 %v112
    %v665 = vunpack.c.l.b16 %v113
    %v666 = vunpack.c.h.b16 %v113
    %v667 = vunpack.c.l.b16 %v114
    %v668 = vunpack.c.h.b16 %v114
    %v669 = vunpack.c.l.b16 %v115
    %v670 = vunpack.c.h.b16 %v115
    %v671 = vunpack.c.l.b16 %v116
    %v672 = vunpack.c.h.b16 %v116
    %v673 = vunpack.c.l.b16 %v117
    %v674 = vunpack.c.h.b16 %v117
    %v675 = vunpack.c.l.b16 %v118
    %v676 = vunpack.c.h.b16 %v118
    %v677 = vunpack.c.l.b16 %v119
    %v678 = vunpack.c.h.b16 %v119
    %v679 = vunpack.c.l.b16 %v120
    %v680 = vunpack.c.h.b16 %v120
    %v681 = vunpack.c.l.b16 %v121
    %v682 = vunpack.c.h.b16 %v121
    %v683 = vunpack.c.l.b16 %v122
    %v684 = vunpack.c.h.b16 %v122
    %v685 = vunpack.c.l.b16 %v123
    %v686 = vunpack.c.h.b16 %v123
    %v687 = vunpack.c.l.b16 %v124
    %v688 = vunpack.c.h.b16 %v124
    %v689 = vunpack.c.l.b16 %v125
    %v690 = vunpack.c.h.b16 %v125
    %v691 = vunpack.c.l.b16 %v126
    %v692 = vunpack.c.h.b16 %v126
    %v693 = vunpack.c.l.b16 %v127
    %v694 = vunpack.c.h.b16 %v127
    %v695 = vunpack.c.l.b16 %v128
    %v696 = vunpack.c.h.b16 %v128
    %v697 = vunpack.c.l.b16 %v129
    %v698 = vunpack.c.h.b16 %v129
    %v699 = vunpack.c.l.b16 %v130
    %v700 = vunpack.c.h.b16 %v130
    %v701 = vunpack.c.l.b16 %v131
    %v702 = vunpack.c.h.b16 %v131
    %v703 = vunpack.c.l.b16 %v132
    %v704 = vunpack.c.h.b16 %v132
    %v705 = vunpack.c.l.b16 %v133
    %v706 = vunpack.c.h.b16 %v133
    %v707 = vunpack.c.l.b16 %v134
    %v708 = vunpack.c.h.b16 %v134
    %v709 = vunpack.c.l.b16 %v135
    %v710 = vunpack.c.h.b16 %v135
    %v711 = vunpack.c.l.b16 %v136
    %v712 = vunpack.c.h.b16 %v136
    %v713 = vunpack.c.l.b16 %v137
    %v714 = vunpack.c.h.b16 %v137
    %v715 = vunpack.c.l.b16 %v138
    %v716 = vunpack.c.h.b16 %v138
    %v717 = vunpack.c.l.b16 %v139
    %v718 = vunpack.c.h.b16 %v139
    %v719 = vunpack.c.l.b16 %v140
    %v720 = vunpack.c.h.b16 %v140
    %v721 = vunpack.c.l.b16 %v141
    %v722 = vunpack.c.h.b16 %v141
    %v723 = vunpack.c.l.b16 %v142
    %v724 = vunpack.c.h.b16 %v142
    %v725 = vunpack.c.l.b16 %v143
    %v726 = vunpack.c.h.b16 %v143
    %v727 = vunpack.c.l.b16 %v144
    %v728 = vunpack.c.h.b16 %v144
    %v729 = vunpack.c.l.b16 %v145
    %v730 = vunpack.c.h.b16 %v145
    %v731 = vunpack.c.l.b16 %v146
    %v732 = vunpack.c.h.b16 %v146
    %v733 = vunpack.c.l.b16 %v147
    %v734 = vunpack.c.h.b16 %v147
    %v735 = vunpack.c.l.b16 %v148
    %v736 = vunpack.c.h.b16 %v148
    %v737 = vunpack.c.l.b16 %v149
    %v738 = vunpack.c.h.b16 %v149
    %v739 = vunpack.c.l.b16 %v150
    %v740 = vunpack.c.h.b16 %v150
    %v741 = vunpack.c.l.b16 %v151
    %v742 = vunpack.c.h.b16 %v151
    %v743 = vunpack.c.l.b16 %v152
    %v744 = vunpack.c.h.b16 %v152
    %v745 = vunpack.c.l.b16 %v153
    %v746 = vunpack.c.h.b16 %v153
    %v747 = vunpack.c.l.b16 %v154
    %v748 = vunpack.c.h.b16 %v154
    %v749 = vunpack.c.l.b16 %v155
    %v750 = vunpack.c.h.b16 %v155
    %v751 = vunpack.c.l.b16 %v156
    %v752 = vunpack.c.h.b16 %v156
    %v753 = vunpack.c.l.b16 %v157
    %v754 = vunpack.c.h.b16 %v157
    %v755 = vunpack.c.l.b16 %v158
    %v756 = vunpack.c.h.b16 %v158
    %v757 = vunpack.c.l.b16 %v159
    %v758 = vunpack.c.h.b16 %v159
    %v759 = vunpack.c.l.b16 %v160
    %v760 = vunpack.c.h.b16 %v160
    %v761 = vunpack.c.l.b16 %v161
    %v762 = vunpack.c.h.b16 %v161
    %v763 = vunpack.c.l.b16 %v162
    %v764 = vunpack.c.h.b16 %v162
    %v765 = vunpack.c.l.b16 %v163
    %v766 = vunpack.c.h.b16 %v163
    %v767 = vunpack.c.l.b16 %v164
    %v768 = vunpack.c.h.b16 %v164
    %v769 = vunpack.c.l.b16 %v165
    %v770 = vunpack.c.h.b16 %v165
    %v771 = vunpack.c.l.b16 %v166
    %v772 = vunpack.c.h.b16 %v166
    %v773 = vunpack.c.l.b16 %v167
    %v774 = vunpack.c.h.b16 %v167
    %v775 = vunpack.c.l.b16 %v168
    %v776 = vunpack.c.h.b16 %v168
    %v777 = vunpack.c.l.b16 %v169
    %v778 = vunpack.c.h.b16 %v169
    %v779 = vunpack.c.l.b16 %v170
    %v780 = vunpack.c.h.b16 %v170
    %v781 = vunpack.c.l.b16 %v171
    %v782 = vunpack.c.h.b16 %v171
    %v783 = vunpack.c.l.b16 %v172
    %v784 = vunpack.c.h.b16 %v172
    %v785 = vunpack.c.l.b16 %v173
    %v786 = vunpack.c.h.b16 %v173
    %v787 = vunpack.c.l.b16 %v174
    %v788 = vunpack.c.h.b16 %v174
    %v789 = vunpack.c.l.b16 %v175
    %v790 = vunpack.c.h.b16 %v175
    %v791 = vunpack.c.l.b16 %v176
    %v792 = vunpack.c.h.b16 %v176
    %v793 = vunpack.c.l.b16 %v177
    %v794 = vunpack.c.h.b16 %v177
    %v795 = vunpack.c.l.b16 %v178
    %v796 = vunpack.c.h.b16 %v178
    %v797 = vunpack.c.l.b16 %v179
    %v798 = vunpack.c.h.b16 %v179
    %v799 = vunpack.c.l.b16 %v180
    %v800 = vunpack.c.h.b16 %v180
    %v801 = vunpack.c.l.b16 %v181
    %v802 = vunpack.c.h.b16 %v181
    %v803 = vunpack.c.l.b16 %v182
    %v804 = vunpack.c.h.b16 %v182
    %v805 = vunpack.c.l.b16 %v183
    %v806 = vunpack.c.h.b16 %v183
    %v807 = vunpack.c.l.b16 %v184
    %v808 = vunpack.c.h.b16 %v184
    %v809 = vunpack.c.l.b16 %v185
    %v810 = vunpack.c.h.b16 %v185
    %v811 = vunpack.c.l.b16 %v186
    %v812 = vunpack.c.h.b16 %v186
    %v813 = vunpack.c.l.b16 %v187
    %v814 = vunpack.c.h.b16 %v187
    %v815 = vunpack.c.l.b16 %v188
    %v816 = vunpack.c.h.b16 %v188
    %v817 = vunpack.c.l.b16 %v189
    %v818 = vunpack.c.h.b16 %v189
    %v819 = vunpack.c.l.b16 %v190
    %v820 = vunpack.c.h.b16 %v190
    %v821 = vunpack.c.l.b16 %v191
    %v822 = vunpack.c.h.b16 %v191
    %v823 = vunpack.c.l.b16 %v192
    %v824 = vunpack.c.h.b16 %v192
    %v825 = vunpack.c.l.b16 %v193
    %v826 = vunpack.c.h.b16 %v193
    %v827 = vunpack.c.l.b16 %v194
    %v828 = vunpack.c.h.b16 %v194
    %v829 = vunpack.c.l.b16 %v195
    %v830 = vunpack.c.h.b16 %v195
    %v831 = vunpack.c.l.b16 %v196
    %v832 = vunpack.c.h.b16 %v196
    %v833 = vunpack.c.l.b16 %v197
    %v834 = vunpack.c.h.b16 %v197
    %v835 = vunpack.c.l.b16 %v198
    %v836 = vunpack.c.h.b16 %v198
    %v837 = vunpack.c.l.b16 %v199
    %v838 = vunpack.c.h.b16 %v199
    %v839 = vunpack.c.l.b16 %v200
    %v840 = vunpack.c.h.b16 %v200
    %v841 = vunpack.c.l.b16 %v201
    %v842 = vunpack.c.h.b16 %v201
    %v843 = vunpack.c.l.b16 %v202
    %v844 = vunpack.c.h.b16 %v202
    %v845 = vunpack.c.l.b16 %v203
    %v846 = vunpack.c.h.b16 %v203
    %v847 = vunpack.c.l.b16 %v204
    %v848 = vunpack.c.h.b16 %v204
    %v849 = vunpack.c.l.b16 %v205
    %v850 = vunpack.c.h.b16 %v205
    %v851 = vunpack.c.l.b16 %v206
    %v852 = vunpack.c.h.b16 %v206
    %v853 = vunpack.c.l.b16 %v207
    %v854 = vunpack.c.h.b16 %v207
    %v855 = vunpack.c.l.b16 %v208
    %v856 = vunpack.c.h.b16 %v208
    %v857 = vunpack.c.l.b16 %v209
    %v858 = vunpack.c.h.b16 %v209
    %v859 = vunpack.c.l.b16 %v210
    %v860 = vunpack.c.h.b16 %v210
    %v861 = vunpack.c.l.b16 %v211
    %v862 = vunpack.c.h.b16 %v211
    %v863 = vunpack.c.l.b16 %v212
    %v864 = vunpack.c.h.b16 %v212
    %v865 = vunpack.c.l.b16 %v213
    %v866 = vunpack.c.h.b16 %v213
    %v867 = vunpack.c.l.b16 %v214
    %v868 = vunpack.c.h.b16 %v214
    %v869 = vunpack.c.l.b16 %v215
    %v870 = vunpack.c.h.b16 %v215
    %v871 = vunpack.c.l.b16 %v216
    %v872 = vunpack.c.h.b16 %v216
    %v873 = vunpack.c.l.b16 %v217
    %v874 = vunpack.c.h.b16 %v217
    %v875 = vunpack.c.l.b16 %v218
    %v876 = vunpack.c.h.b16 %v218
    %v877 = vunpack.c.l.b16 %v219
    %v878 = vunpack.c.h.b16 %v219
    %v879 = vunpack.c.l.b16 %v220
    %v880 = vunpack.c.h.b16 %v220
    %v881 = vunpack.c.l.b16 %v221
    %v882 = vunpack.c.h.b16 %v221
    %v883 = vunpack.c.l.b16 %v222
    %v884 = vunpack.c.h.b16 %v222
    %v885 = vunpack.c.l.b16 %v223
    %v886 = vunpack.c.h.b16 %v223
    %v887 = vunpack.c.l.b16 %v224
    %v888 = vunpack.c.h.b16 %v224
    %v889 = vunpack.c.l.b16 %v225
    %v890 = vunpack.c.h.b16 %v225
    %v891 = vunpack.c.l.b16 %v226
    %v892 = vunpack.c.h.b16 %v226
    %v893 = vunpack.c.l.b16 %v227
    %v894 = vunpack.c.h.b16 %v227
    %v895 = vunpack.c.l.b16 %v228
    %v896 = vunpack.c.h.b16 %v228
    %v897 = vunpack.c.l.b16 %v229
    %v898 = vunpack.c.h.b16 %v229
    %v899 = vunpack.c.l.b16 %v230
    %v900 = vunpack.c.h.b16 %v230
    %v901 = vunpack.c.l.b16 %v231
    %v902 = vunpack.c.h.b16 %v231
    %v903 = vunpack.c.l.b16 %v232
    %v904 = vunpack.c.h.b16 %v232
    %v905 = vunpack.c.l.b16 %v233
    %v906 = vunpack.c.h.b16 %v233
    %v907 = vunpack.c.l.b16 %v234
    %v908 = vunpack.c.h.b16 %v234
    %v909 = vunpack.c.l.b16 %v235
    %v910 = vunpack.c.h.b16 %v235
    %v911 = vunpack.c.l.b16 %v236
    %v912 = vunpack.c.h.b16 %v236
    %v913 = vunpack.c.l.b16 %v237
    %v914 = vunpack.c.h.b16 %v237
    %v915 = vunpack.c.l.b16 %v238
    %v916 = vunpack.c.h.b16 %v238
    %v917 = vunpack.c.l.b16 %v239
    %v918 = vunpack.c.h.b16 %v239
    %v919 = vunpack.c.l.b16 %v240
    %v920 = vunpack.c.h.b16 %v240
    %v921 = vunpack.c.l.b16 %v241
    %v922 = vunpack.c.h.b16 %v241
    %v923 = vunpack.c.l.b16 %v242
    %v924 = vunpack.c.h.b16 %v242
    %v925 = vunpack.c.l.b16 %v243
    %v926 = vunpack.c.h.b16 %v243
    %v927 = vunpack.c.l.b16 %v244
    %v928 = vunpack.c.h.b16 %v244
    %v929 = vunpack.c.l.b16 %v245
    %v930 = vunpack.c.h.b16 %v245
    %v931 = vunpack.c.l.b16 %v246
    %v932 = vunpack.c.h.b16 %v246
    %v933 = vunpack.c.l.b16 %v247
    %v934 = vunpack.c.h.b16 %v247
    %v935 = vunpack.c.l.b16 %v248
    %v936 = vunpack.c.h.b16 %v248
    %v937 = vunpack.c.l.b16 %v249
    %v938 = vunpack.c.h.b16 %v249
    %v939 = vunpack.c.l.b16 %v250
    %v940 = vunpack.c.h.b16 %v250
    %v941 = vunpack.c.l.b16 %v251
    %v942 = vunpack.c.h.b16 %v251
    %v943 = vunpack.c.l.b16 %v252
    %v944 = vunpack.c.h.b16 %v252
    %v945 = vunpack.c.l.b16 %v253
    %v946 = vunpack.c.h.b16 %v253
    %v947 = vunpack.c.l.b16 %v254
    %v948 = vunpack.c.h.b16 %v254
    %v949 = vunpack.c.l.b16 %v255
    %v950 = vunpack.c.h.b16 %v255
    %v951 = vunpack.c.l.b16 %v256
    %v952 = vunpack.c.h.b16 %v256
    %v953 = vunpack.c.l.b16 %v257
    %v954 = vunpack.c.h.b16 %v257
    %v955 = vunpack.c.l.b16 %v258
    %v956 = vunpack.c.h.b16 %v258
    %v957 = vunpack.c.l.b16 %v259
    %v958 = vunpack.c.h.b16 %v259
    %v959 = vunpack.c.l.b16 %v260
    %v960 = vunpack.c.h.b16 %v260
    %v961 = vunpack.c.l.b16 %v261
    %v962 = vunpack.c.h.b16 %v261
    %v963 = vunpack.c.l.b16 %v262
    %v964 = vunpack.c.h.b16 %v262
    %v965 = vunpack.c.l.b16 %v263
    %v966 = vunpack.c.h.b16 %v263
    %v967 = vunpack.c.l.b16 %v264
    %v968 = vunpack.c.h.b16 %v264
    %v969 = vunpack.c.l.b16 %v265
    %v970 = vunpack.c.h.b16 %v265
    %v971 = vunpack.c.l.b16 %v266
    %v972 = vunpack.c.h.b16 %v266
    %v973 = vunpack.c.l.b16 %v267
    %v974 = vunpack.c.h.b16 %v267
    %v975 = vunpack.c.l.b16 %v268
    %v976 = vunpack.c.h.b16 %v268
    %v977 = vunpack.c.l.b16 %v269
    %v978 = vunpack.c.h.b16 %v269
    %v979 = vunpack.c.l.b16 %v270
    %v980 = vunpack.c.h.b16 %v270
    %v981 = vunpack.c.l.b16 %v271
    %v982 = vunpack.c.h.b16 %v271
    %v983 = vunpack.c.l.b16 %v272
    %v984 = vunpack.c.h.b16 %v272
    %v985 = vunpack.c.l.b16 %v273
    %v986 = vunpack.c.h.b16 %v273
    %v987 = vunpack.c.l.b16 %v274
    %v988 = vunpack.c.h.b16 %v274
    %v989 = vunpack.c.l.b16 %v275
    %v990 = vunpack.c.h.b16 %v275
    %v991 = vunpack.c.l.b16 %v276
    %v992 = vunpack.c.h.b16 %v276
    %v993 = vunpack.c.l.b16 %v277
    %v994 = vunpack.c.h.b16 %v277
    %v995 = vunpack.c.l.b16 %v278
    %v996 = vunpack.c.h.b16 %v278
    %v997 = vunpack.c.l.b16 %v279
    %v998 = vunpack.c.h.b16 %v279
    %v999 = vunpack.c.l.b16 %v280
    %v1000 = vunpack.c.h.b16 %v280
    %v1001 = vunpack.c.l.b16 %v281
    %v1002 = vunpack.c.h.b16 %v281
    %v1003 = vunpack.c.l.b16 %v282
    %v1004 = vunpack.c.h.b16 %v282
    %v1005 = vunpack.c.l.b16 %v283
    %v1006 = vunpack.c.h.b16 %v283
    %v1007 = vunpack.c.l.b16 %v284
    %v1008 = vunpack.c.h.b16 %v284
    %v1009 = vunpack.c.l.b16 %v285
    %v1010 = vunpack.c.h.b16 %v285
    %v1011 = vunpack.c.l.b16 %v286
    %v1012 = vunpack.c.h.b16 %v286
    %v1013 = vunpack.c.l.b16 %v287
    %v1014 = vunpack.c.h.b16 %v287
    %v1015 = vunpack.c.l.b16 %v288
    %v1016 = vunpack.c.h.b16 %v288
    %v1017 = vunpack.c.l.b16 %v289
    %v1018 = vunpack.c.h.b16 %v289
    %v1019 = vunpack.c.l.b16 %v290
    %v1020 = vunpack.c.h.b16 %v290
    %v1021 = vunpack.c.l.b16 %v291
    %v1022 = vunpack.c.h.b16 %v291
    %v1023 = vunpack.c.l.b16 %v292
    %v1024 = vunpack.c.h.b16 %v292
    %v1025 = vunpack.c.l.b16 %v293
    %v1026 = vunpack.c.h.b16 %v293
    %v1027 = vunpack.c.l.b16 %v294
    %v1028 = vunpack.c.h.b16 %v294
    %v1029 = vunpack.c.l.b16 %v295
    %v1030 = vunpack.c.h.b16 %v295
    %v1031 = vunpack.c.l.b16 %v296
    %v1032 = vunpack.c.h.b16 %v296
    %v1033 = vunpack.c.l.b16 %v297
    %v1034 = vunpack.c.h.b16 %v297
    %v1035 = vunpack.c.l.b16 %v298
    %v1036 = vunpack.c.h.b16 %v298
    %v1037 = vunpack.c.l.b16 %v299
    %v1038 = vunpack.c.h.b16 %v299
    %v1039 = vunpack.c.l.b16 %v300
    %v1040 = vunpack.c.h.b16 %v300
    %v1041 = vunpack.c.l.b16 %v301
    %v1042 = vunpack.c.h.b16 %v301
    %v1043 = vunpack.c.l.b16 %v302
    %v1044 = vunpack.c.h.b16 %v302
    %v1045 = vunpack.c.l.b16 %v303
    %v1046 = vunpack.c.h.b16 %v303
    %v1047 = vunpack.c.l.b16 %v304
    %v1048 = vunpack.c.h.b16 %v304
    %v1049 = vunpack.c.l.b16 %v305
    %v1050 = vunpack.c.h.b16 %v305
    %v1051 = vunpack.c.l.b16 %v306
    %v1052 = vunpack.c.h.b16 %v306
    %v1053 = vunpack.c.l.b16 %v307
    %v1054 = vunpack.c.h.b16 %v307
    %v1055 = vunpack.c.l.b16 %v308
    %v1056 = vunpack.c.h.b16 %v308
    %v1057 = vunpack.c.l.b16 %v309
    %v1058 = vunpack.c.h.b16 %v309
    %v1059 = vunpack.c.l.b16 %v310
    %v1060 = vunpack.c.h.b16 %v310
    %v1061 = vunpack.c.l.b16 %v311
    %v1062 = vunpack.c.h.b16 %v311
    %v1063 = vunpack.c.l.b16 %v312
    %v1064 = vunpack.c.h.b16 %v312
    %v1065 = vunpack.c.l.b16 %v313
    %v1066 = vunpack.c.h.b16 %v313
    %v1067 = vunpack.c.l.b16 %v314
    %v1068 = vunpack.c.h.b16 %v314
    %v1069 = vunpack.c.l.b16 %v315
    %v1070 = vunpack.c.h.b16 %v315
    %v1071 = vunpack.c.l.b16 %v316
    %v1072 = vunpack.c.h.b16 %v316
    %v1073 = vunpack.c.l.b16 %v317
    %v1074 = vunpack.c.h.b16 %v317
    %v1075 = vunpack.c.l.b16 %v318
    %v1076 = vunpack.c.h.b16 %v318
    %v1077 = vunpack.c.l.b16 %v319
    %v1078 = vunpack.c.h.b16 %v319
    %v1079 = vunpack.c.l.b16 %v320
    %v1080 = vunpack.c.h.b16 %v320
    %v1081 = vunpack.c.l.b16 %v321
    %v1082 = vunpack.c.h.b16 %v321
    %v1083 = vunpack.c.l.b16 %v322
    %v1084 = vunpack.c.h.b16 %v322
    %v1085 = vunpack.c.l.b16 %v323
    %v1086 = vunpack.c.h.b16 %v323
    %v1087 = vunpack.c.l.b16 %v324
    %v1088 = vunpack.c.h.b16 %v324
    %v1089 = vunpack.c.l.b16 %v325
    %v1090 = vunpack.c.h.b16 %v325
    %v1091 = vunpack.c.l.b16 %v326
    %v1092 = vunpack.c.h.b16 %v326
    %v1093 = vunpack.c.l.b16 %v327
    %v1094 = vunpack.c.h.b16 %v327
    %v1095 = vunpack.c.l.b16 %v328
    %v1096 = vunpack.c.h.b16 %v328
    %v1097 = vunpack.c.l.b16 %v329
    %v1098 = vunpack.c.h.b16 %v329
    %v1099 = vunpack.c.l.b16 %v330
    %v1100 = vunpack.c.h.b16 %v330
    %v1101 = vunpack.c.l.b16 %v331
    %v1102 = vunpack.c.h.b16 %v331
    %v1103 = vunpack.c.l.b16 %v332
    %v1104 = vunpack.c.h.b16 %v332
    %v1105 = vunpack.c.l.b16 %v333
    %v1106 = vunpack.c.h.b16 %v333
    %v1107 = vunpack.c.l.b16 %v334
    %v1108 = vunpack.c.h.b16 %v334
    %v1109 = vunpack.c.l.b16 %v335
    %v1110 = vunpack.c.h.b16 %v335
    %v1111 = vunpack.c.l.b16 %v336
    %v1112 = vunpack.c.h.b16 %v336
    %v1113 = vunpack.c.l.b16 %v337
    %v1114 = vunpack.c.h.b16 %v337
    %v1115 = vunpack.c.l.b16 %v338
    %v1116 = vunpack.c.h.b16 %v338
    %v1117 = vunpack.c.l.b16 %v339
    %v1118 = vunpack.c.h.b16 %v339
    %v1119 = vunpack.c.l.b16 %v340
    %v1120 = vunpack.c.h.b16 %v340
    %v1121 = vunpack.c.l.b16 %v341
    %v1122 = vunpack.c.h.b16 %v341
    %v1123 = vunpack.c.l.b16 %v342
    %v1124 = vunpack.c.h.b16 %v342
    %v1125 = vunpack.c.l.b16 %v343
    %v1126 = vunpack.c.h.b16 %v343
    %v1127 = vunpack.c.l.b16 %v344
    %v1128 = vunpack.c.h.b16 %v344
    %v1129 = vunpack.c.l.b16 %v345
    %v1130 = vunpack.c.h.b16 %v345
    %v1131 = vunpack.c.l.b16 %v346
    %v1132 = vunpack.c.h.b16 %v346
    %v1133 = vunpack.c.l.b16 %v347
    %v1134 = vunpack.c.h.b16 %v347
    %v1135 = vunpack.c.l.b16 %v348
    %v1136 = vunpack.c.h.b16 %v348
    %v1137 = vunpack.c.l.b16 %v349
    %v1138 = vunpack.c.h.b16 %v349
    %v1139 = vunpack.c.l.b16 %v350
    %v1140 = vunpack.c.h.b16 %v350
    %v1141 = vpack.c.b16 %v633, %v629
    %v1142 = vpack.c.b16 %v634, %v630
    %v1143 = vpack.c.b16 %v635, %v631
    %v1144 = vpack.c.b16 %v636, %v632
    %v1145 = vpack.c.b16 %v641, %v637
    %v1146 = vpack.c.b16 %v642, %v638
    %v1147 = vpack.c.b16 %v643, %v639
    %v1148 = vpack.c.b16 %v644, %v640
    %v1149 = vpack.c.b16 %v649, %v645
    %v1150 = vpack.c.b16 %v650, %v646
    %v1151 = vpack.c.b16 %v651, %v647
    %v1152 = vpack.c.b16 %v652, %v648
    %v1153 = vpack.c.b16 %v657, %v653
    %v1154 = vpack.c.b16 %v658, %v654
    %v1155 = vpack.c.b16 %v659, %v655
    %v1156 = vpack.c.b16 %v660, %v656
    %v1157 = vpack.c.b16 %v665, %v661
    %v1158 = vpack.c.b16 %v666, %v662
    %v1159 = vpack.c.b16 %v667, %v663
    %v1160 = vpack.c.b16 %v668, %v664
    %v1161 = vpack.c.b16 %v673, %v669
    %v1162 = vpack.c.b16 %v674, %v670
    %v1163 = vpack.c.b16 %v675, %v671
    %v1164 = vpack.c.b16 %v676, %v672
    %v1165 = vpack.c.b16 %v681, %v677
    %v1166 = vpack.c.b16 %v682, %v678
    %v1167 = vpack.c.b16 %v683, %v679
    %v1168 = vpack.c.b16 %v684, %v680
    %v1169 = vpack.c.b16 %v689, %v685
    %v1170 = vpack.c.b16 %v690, %v686
    %v1171 = vpack.c.b16 %v691, %v687
    %v1172 = vpack.c.b16 %v692, %v688
    %v1173 = vpack.c.b16 %v697, %v693
    %v1174 = vpack.c.b16 %v698, %v694
    %v1175 = vpack.c.b16 %v699, %v695
    %v1176 = vpack.c.b16 %v700, %v696
    %v1177 = vpack.c.b16 %v705, %v701
    %v1178 = vpack.c.b16 %v706, %v702
    %v1179 = vpack.c.b16 %v707, %v703
    %v1180 = vpack.c.b16 %v708, %v704
    %v1181 = vpack.c.b16 %v713, %v709
    %v1182 = vpack.c.b16 %v714, %v710
    %v1183 = vpack.c.b16 %v715, %v711
    %v1184 = vpack.c.b16 %v716, %v712
    %v1185 = vpack.c.b16 %v721, %v717
    %v1186 = vpack.c.b16 %v722, %v718
    %v1187 = vpack.c.b16 %v723, %v719
    %v1188 = vpack.c.b16 %v724, %v720
    %v1189 = vpack.c.b16 %v729, %v725
    %v1190 = vpack.c.b16 %v730, %v726
    %v1191 = vpack.c.b16 %v731, %v727
    %v1192 = vpack.c.b16 %v732, %v728
    %v1193 = vpack.c.b16 %v737, %v733
    %v1194 = vpack.c.b16 %v738, %v734
    %v1195 = vpack.c.b16 %v739, %v735
    %v1196 = vpack.c.b16 %v740, %v736
    %v1197 = vpack.c.b16 %v745, %v741
    %v1198 = vpack.c.b16 %v746, %v742
    %v1199 = vpack.c.b16 %v747, %v743
    %v1200 = vpack.c.b16 %v748, %v744
    %v1201 = vpack.c.b16 %v753, %v749
    %v1202 = vpack.c.b16 %v754, %v750
    %v1203 = vpack.c.b16 %v755, %v751
    %v1204 = vpack.c.b16 %v756, %v752
    %v1205 = vpack.c.b16 %v761, %v757
    %v1206 = vpack.c.b16 %v762, %v758
    %v1207 = vpack.c.b16 %v763, %v759
    %v1208 = vpack.c.b16 %v764, %v760
    %v1209 = vpack.c.b16 %v769, %v765
    %v1210 = vpack.c.b16 %v770, %v766
    %v1211 = vpack.c.b16 %v771, %v767
    %v1212 = vpack.c.b16 %v772, %v768
    %v1213 = vpack.c.b16 %v777, %v773
    %v1214 = vpack.c.b16 %v778, %v774
    %v1215 = vpack.c.b16 %v779, %v775
    %v1216 = vpack.c.b16 %v780, %v776
    %v1217 = vpack.c.b16 %v785, %v781
    %v1218 = vpack.c.b16 %v786, %v782
    %v1219 = vpack.c.b16 %v787, %v783
    %v1220 = vpack.c.b16 %v788, %v784
    %v1221 = vpack.c.b16 %v793, %v789
    %v1222 = vpack.c.b16 %v794, %v790
    %v1223 = vpack.c.b16 %v795, %v791
    %v1224 = vpack.c.b16 %v796, %v792
    %v1225 = vpack.c.b16 %v801, %v797
    %v1226 = vpack.c.b16 %v802, %v798
    %v1227 = vpack.c.b16 %v803, %v799
    %v1228 = vpack.c.b16 %v804, %v800
    %v1229 = vpack.c.b16 %v809, %v805
    %v1230 = vpack.c.b16 %v810, %v806
    %v1231 = vpack.c.b16 %v811, %v807
    %v1232 = vpack.c.b16 %v812, %v808
    %v1233 = vpack.c.b16 %v817, %v813
    %v1234 = vpack.c.b16 %v818, %v814
    %v1235 = vpack.c.b16 %v819, %v815
    %v1236 = vpack.c.b16 %v820, %v816
    %v1237 = vpack.c.b16 %v825, %v821
    %v1238 = vpack.c.b16 %v826, %v822
    %v1239 = vpack.c.b16 %v827, %v823
    %v1240 = vpack.c.b16 %v828, %v824
    %v1241 = vpack.c.b16 %v833, %v829
    %v1242 = vpack.c.b16 %v834, %v830
    %v1243 = vpack.c.b16 %v835, %v831
    %v1244 = vpack.c.b16 %v836, %v832
    %v1245 = vpack.c.b16 %v841, %v837
    %v1246 = vpack.c.b16 %v842, %v838
    %v1247 = vpack.c.b16 %v843, %v839
    %v1248 = vpack.c.b16 %v844, %v840
    %v1249 = vpack.c.b16 %v849, %v845
    %v1250 = vpack.c.b16 %v850, %v846
    %v1251 = vpack.c.b16 %v851, %v847
    %v1252 = vpack.c.b16 %v852, %v848
    %v1253 = vpack.c.b16 %v857, %v853
    %v1254 = vpack.c.b16 %v858, %v854
    %v1255 = vpack.c.b16 %v859, %v855
    %v1256 = vpack.c.b16 %v860, %v856
    %v1257 = vpack.c.b16 %v865, %v861
    %v1258 = vpack.c.b16 %v866, %v862
    %v1259 = vpack.c.b16 %v867, %v863
    %v1260 = vpack.c.b16 %v868, %v864
    %v1261 = vpack.c.b16 %v873, %v869
    %v1262 = vpack.c.b16 %v874, %v870
    %v1263 = vpack.c.b16 %v875, %v871
    %v1264 = vpack.c.b16 %v876, %v872
    %v1265 = vpack.c.b16 %v881, %v877
    %v1266 = vpack.c.b16 %v882, %v878
    %v1267 = vpack.c.b16 %v883, %v879
    %v1268 = vpack.c.b16 %v884, %v880
    %v1269 = vpack.c.b16 %v889, %v885
    %v1270 = vpack.c.b16 %v890, %v886
    %v1271 = vpack.c.b16 %v891, %v887
    %v1272 = vpack.c.b16 %v892, %v888
    %v1273 = vpack.c.b16 %v897, %v893
    %v1274 = vpack.c.b16 %v898, %v894
    %v1275 = vpack.c.b16 %v899, %v895
    %v1276 = vpack.c.b16 %v900, %v896
    %v1277 = vpack.c.b16 %v905, %v901
    %v1278 = vpack.c.b16 %v906, %v902
    %v1279 = vpack.c.b16 %v907, %v903
    %v1280 = vpack.c.b16 %v908, %v904
    %v1281 = vpack.c.b16 %v913, %v909
    %v1282 = vpack.c.b16 %v914, %v910
    %v1283 = vpack.c.b16 %v915, %v911
    %v1284 = vpack.c.b16 %v916, %v912
    %v1285 = vpack.c.b16 %v921, %v917
    %v1286 = vpack.c.b16 %v922, %v918
    %v1287 = vpack.c.b16 %v923, %v919
    %v1288 = vpack.c.b16 %v924, %v920
    %v1289 = vpack.c.b16 %v929, %v925
    %v1290 = vpack.c.b16 %v930, %v926
    %v1291 = vpack.c.b16 %v931, %v927
    %v1292 = vpack.c.b16 %v932, %v928
    %v1293 = vpack.c.b16 %v937, %v933
    %v1294 = vpack.c.b16 %v938, %v934
    %v1295 = vpack.c.b16 %v939, %v935
    %v1296 = vpack.c.b16 %v940, %v936
    %v1297 = vpack.c.b16 %v945, %v941
    %v1298 = vpack.c.b16 %v946, %v942
    %v1299 = vpack.c.b16 %v947, %v943
    %v1300 = vpack.c.b16 %v948, %v944
    %v1301 = vpack.c.b16 %v953, %v949
    %v1302 = vpack.c.b16 %v954, %v950
    %v1303 = vpack.c.b16 %v955, %v951
    %v1304 = vpack.c.b16 %v956, %v952
    %v1305 = vpack.c.b16 %v961, %v957
    %v1306 = vpack.c.b16 %v962, %v958
    %v1307 = vpack.c.b16 %v963, %v959
    %v1308 = vpack.c.b16 %v964, %v960
    %v1309 = vpack.c.b16 %v969, %v965
    %v1310 = vpack.c.b16 %v970, %v966
    %v1311 = vpack.c.b16 %v971, %v967
    %v1312 = vpack.c.b16 %v972, %v968
    %v1313 = vpack.c.b16 %v977, %v973
    %v1314 = vpack.c.b16 %v978, %v974
    %v1315 = vpack.c.b16 %v979, %v975
    %v1316 = vpack.c.b16 %v980, %v976
    %v1317 = vpack.c.b16 %v985, %v981
    %v1318 = vpack.c.b16 %v986, %v982
    %v1319 = vpack.c.b16 %v987, %v983
    %v1320 = vpack.c.b16 %v988, %v984
    %v1321 = vpack.c.b16 %v993, %v989
    %v1322 = vpack.c.b16 %v994, %v990
    %v1323 = vpack.c.b16 %v995, %v991
    %v1324 = vpack.c.b16 %v996, %v992
    %v1325 = vpack.c.b16 %v1001, %v997
    %v1326 = vpack.c.b16 %v1002, %v998
    %v1327 = vpack.c.b16 %v1003, %v999
    %v1328 = vpack.c.b16 %v1004, %v1000
    %v1329 = vpack.c.b16 %v1009, %v1005
    %v1330 = vpack.c.b16 %v1010, %v1006
    %v1331 = vpack.c.b16 %v1011, %v1007
    %v1332 = vpack.c.b16 %v1012, %v1008
    %v1333 = vpack.c.b16 %v1017, %v1013
    %v1334 = vpack.c.b16 %v1018, %v1014
    %v1335 = vpack.c.b16 %v1019, %v1015
    %v1336 = vpack.c.b16 %v1020, %v1016
    %v1337 = vpack.c.b16 %v1025, %v1021
    %v1338 = vpack.c.b16 %v1026, %v1022
    %v1339 = vpack.c.b16 %v1027, %v1023
    %v1340 = vpack.c.b16 %v1028, %v1024
    %v1341 = vpack.c.b16 %v1033, %v1029
    %v1342 = vpack.c.b16 %v1034, %v1030
    %v1343 = vpack.c.b16 %v1035, %v1031
    %v1344 = vpack.c.b16 %v1036, %v1032
    %v1345 = vpack.c.b16 %v1041, %v1037
    %v1346 = vpack.c.b16 %v1042, %v1038
    %v1347 = vpack.c.b16 %v1043, %v1039
    %v1348 = vpack.c.b16 %v1044, %v1040
    %v1349 = vpack.c.b16 %v1049, %v1045
    %v1350 = vpack.c.b16 %v1050, %v1046
    %v1351 = vpack.c.b16 %v1051, %v1047
    %v1352 = vpack.c.b16 %v1052, %v1048
    %v1353 = vpack.c.b16 %v1057, %v1053
    %v1354 = vpack.c.b16 %v1058, %v1054
    %v1355 = vpack.c.b16 %v1059, %v1055
    %v1356 = vpack.c.b16 %v1060, %v1056
    %v1357 = vpack.c.b16 %v1065, %v1061
    %v1358 = vpack.c.b16 %v1066, %v1062
    %v1359 = vpack.c.b16 %v1067, %v1063
    %v1360 = vpack.c.b16 %v1068, %v1064
    %v1361 = vpack.c.b16 %v1073, %v1069
    %v1362 = vpack.c.b16 %v1074, %v1070
    %v1363 = vpack.c.b16 %v1075, %v1071
    %v1364 = vpack.c.b16 %v1076, %v1072
    %v1365 = vpack.c.b16 %v1081, %v1077
    %v1366 = vpack.c.b16 %v1082, %v1078
    %v1367 = vpack.c.b16 %v1083, %v1079
    %v1368 = vpack.c.b16 %v1084, %v1080
    %v1369 = vpack.c.b16 %v1089, %v1085
    %v1370 = vpack.c.b16 %v1090, %v1086
    %v1371 = vpack.c.b16 %v1091, %v1087
    %v1372 = vpack.c.b16 %v1092, %v1088
    %v1373 = vpack.c.b16 %v1097, %v1093
    %v1374 = vpack.c.b16 %v1098, %v1094
    %v1375 = vpack.c.b16 %v1099, %v1095
    %v1376 = vpack.c.b16 %v1100, %v1096
    %v1377 = vpack.c.b16 %v1105, %v1101
    %v1378 = vpack.c.b16 %v1106, %v1102
    %v1379 = vpack.c.b16 %v1107, %v1103
    %v1380 = vpack.c.b16 %v1108, %v1104
    %v1381 = vpack.c.b16 %v1113, %v1109
    %v1382 = vpack.c.b16 %v1114, %v1110
    %v1383 = vpack.c.b16 %v1115, %v1111
    %v1384 = vpack.c.b16 %v1116, %v1112
    %v1385 = vpack.c.b16 %v1121, %v1117
    %v1386 = vpack.c.b16 %v1122, %v1118
    %v1387 = vpack.c.b16 %v1123, %v1119
    %v1388 = vpack.c.b16 %v1124, %v1120
    %v1389 = vpack.c.b16 %v1129, %v1125
    %v1390 = vpack.c.b16 %v1130, %v1126
    %v1391 = vpack.c.b16 %v1131, %v1127
    %v1392 = vpack.c.b16 %v1132, %v1128
    %v1393 = vpack.c.b16 %v1137, %v1133
    %v1394 = vpack.c.b16 %v1138, %v1134
    %v1395 = vpack.c.b16 %v1139, %v1135
    %v1396 = vpack.c.b16 %v1140, %v1136
    %1653 = vmatprep.subr.bf16.mxu0 %v1142
    %1654 = vmatpush1.bf16.msra.mxu0 %v1141
    %1655 = vmatprep.subr.bf16.mxu0 %v1146
    %1656 = vmatpush1.bf16.msra.mxu0 %v1145
    %1657 = vmatprep.subr.bf16.mxu0 %v1150
    %1658 = vmatpush1.bf16.msra.mxu0 %v1149
    %1659 = vmatprep.subr.bf16.mxu0 %v1154
    %1660 = vmatpush1.bf16.msra.mxu0 %v1153
    %1661 = vmatprep.subr.bf16.mxu0 %v1158
    %1662 = vmatpush1.bf16.msra.mxu0 %v1157
    %1663 = vmatprep.subr.bf16.mxu0 %v1162
    %1664 = vmatpush1.bf16.msra.mxu0 %v1161
    %1665 = vmatprep.subr.bf16.mxu0 %v1166
    %1666 = vmatpush1.bf16.msra.mxu0 %v1165
    %1667 = vmatprep.subr.bf16.mxu0 %v1170
    %1668 = vmatpush1.bf16.msra.mxu0 %v1169
    %1669 = vmatprep.subr.bf16.mxu0 %v1174
    %1670 = vmatpush1.bf16.msra.mxu0 %v1173
    %1671 = vmatprep.subr.bf16.mxu0 %v1178
    %1672 = vmatpush1.bf16.msra.mxu0 %v1177
    %1673 = vmatprep.subr.bf16.mxu0 %v1182
    %1674 = vmatpush1.bf16.msra.mxu0 %v1181
    %1675 = vmatprep.subr.bf16.mxu0 %v1186
    %1676 = vmatpush1.bf16.msra.mxu0 %v1185
    %1677 = vmatprep.subr.bf16.mxu0 %v1190
    %1678 = vmatpush1.bf16.msra.mxu0 %v1189
    %1679 = vmatprep.subr.bf16.mxu0 %v1194
    %1680 = vmatpush1.bf16.msra.mxu0 %v1193
    %1681 = vmatprep.subr.bf16.mxu0 %v1198
    %1682 = vmatpush1.bf16.msra.mxu0 %v1197
    %1683 = vmatprep.subr.bf16.mxu0 %v1202
    %1684 = vmatpush1.bf16.msra.mxu0 %v1201
    %1685 = vmatprep.mubr.bf16.mxu0 %v88
    %1686 = vmatmul.mubr.bf16.gmra.mrb[0].mxu0 %v87
    %v1687 = vpop.f32.mrb[0].mxu0
    %v1688 = vadd.f32 %v356, %v1687
    %v1689 = vpop.f32.mrb[0].mxu0
    %v1690 = vadd.f32 %v360, %v1689
    %v1691 = vpop.f32.mrb[0].mxu0
    %v1692 = vpop.f32.mrb[0].mxu0
    %1693 = vdwg.mxu0
    %1694 = vmatprep.subr.bf16.mxu0 %v1206
    %1695 = vmatpush1.bf16.msra.mxu0 %v1205
    %1696 = vmatprep.subr.bf16.mxu0 %v1210
    %1697 = vmatpush1.bf16.msra.mxu0 %v1209
    %1698 = vmatprep.subr.bf16.mxu0 %v1214
    %1699 = vmatpush1.bf16.msra.mxu0 %v1213
    %1700 = vmatprep.subr.bf16.mxu0 %v1218
    %1701 = vmatpush1.bf16.msra.mxu0 %v1217
    %1702 = vmatprep.subr.bf16.mxu0 %v1222
    %1703 = vmatpush1.bf16.msra.mxu0 %v1221
    %1704 = vmatprep.subr.bf16.mxu0 %v1226
    %1705 = vmatpush1.bf16.msra.mxu0 %v1225
    %1706 = vmatprep.subr.bf16.mxu0 %v1230
    %1707 = vmatpush1.bf16.msra.mxu0 %v1229
    %1708 = vmatprep.subr.bf16.mxu0 %v1234
    %1709 = vmatpush1.bf16.msra.mxu0 %v1233
    %1710 = vmatprep.subr.bf16.mxu0 %v1238
    %1711 = vmatpush1.bf16.msra.mxu0 %v1237
    %1712 = vmatprep.subr.bf16.mxu0 %v1242
    %1713 = vmatpush1.bf16.msra.mxu0 %v1241
    %1714 = vmatprep.subr.bf16.mxu0 %v1246
    %1715 = vmatpush1.bf16.msra.mxu0 %v1245
    %1716 = vmatprep.subr.bf16.mxu0 %v1250
    %1717 = vmatpush1.bf16.msra.mxu0 %v1249
    %1718 = vmatprep.subr.bf16.mxu0 %v1254
    %1719 = vmatpush1.bf16.msra.mxu0 %v1253
    %1720 = vmatprep.subr.bf16.mxu0 %v1258
    %1721 = vmatpush1.bf16.msra.mxu0 %v1257
    %1722 = vmatprep.subr.bf16.mxu0 %v1262
    %1723 = vmatpush1.bf16.msra.mxu0 %v1261
    %1724 = vmatprep.subr.bf16.mxu0 %v1266
    %1725 = vmatpush1.bf16.msra.mxu0 %v1265
    %1726 = vmatprep.mubr.bf16.mxu0 %v90
    %1727 = vmatmul.mubr.bf16.gmra.mrb[0].mxu0 %v89
    %v1728 = vpop.f32.mrb[0].mxu0
    %v1729 = vadd.f32 %v1688, %v1728
    %v1730 = vpop.f32.mrb[0].mxu0
    %v1731 = vadd.f32 %v1690, %v1730
    %v1732 = vpop.f32.mrb[0].mxu0
    %v1733 = vpop.f32.mrb[0].mxu0
    %1734 = vdwg.mxu0
    %1735 = vmatprep.subr.bf16.mxu0 %v1270
    %1736 = vmatpush1.bf16.msra.mxu0 %v1269
    %1737 = vmatprep.subr.bf16.mxu0 %v1274
    %1738 = vmatpush1.bf16.msra.mxu0 %v1273
    %1739 = vmatprep.subr.bf16.mxu0 %v1278
    %1740 = vmatpush1.bf16.msra.mxu0 %v1277
    %1741 = vmatprep.subr.bf16.mxu0 %v1282
    %1742 = vmatpush1.bf16.msra.mxu0 %v1281
    %1743 = vmatprep.subr.bf16.mxu0 %v1286
    %1744 = vmatpush1.bf16.msra.mxu0 %v1285
    %1745 = vmatprep.subr.bf16.mxu0 %v1290
    %1746 = vmatpush1.bf16.msra.mxu0 %v1289
    %1747 = vmatprep.subr.bf16.mxu0 %v1294
    %1748 = vmatpush1.bf16.msra.mxu0 %v1293
    %1749 = vmatprep.subr.bf16.mxu0 %v1298
    %1750 = vmatpush1.bf16.msra.mxu0 %v1297
    %1751 = vmatprep.subr.bf16.mxu0 %v1302
    %1752 = vmatpush1.bf16.msra.mxu0 %v1301
    %1753 = vmatprep.subr.bf16.mxu0 %v1306
    %1754 = vmatpush1.bf16.msra.mxu0 %v1305
    %1755 = vmatprep.subr.bf16.mxu0 %v1310
    %1756 = vmatpush1.bf16.msra.mxu0 %v1309
    %1757 = vmatprep.subr.bf16.mxu0 %v1314
    %1758 = vmatpush1.bf16.msra.mxu0 %v1313
    %1759 = vmatprep.subr.bf16.mxu0 %v1318
    %1760 = vmatpush1.bf16.msra.mxu0 %v1317
    %1761 = vmatprep.subr.bf16.mxu0 %v1322
    %1762 = vmatpush1.bf16.msra.mxu0 %v1321
    %1763 = vmatprep.subr.bf16.mxu0 %v1326
    %1764 = vmatpush1.bf16.msra.mxu0 %v1325
    %1765 = vmatprep.subr.bf16.mxu0 %v1330
    %1766 = vmatpush1.bf16.msra.mxu0 %v1329
    %1767 = vmatprep.mubr.bf16.mxu0 %v92
    %1768 = vmatmul.mubr.bf16.gmra.mrb[0].mxu0 %v91
    %v1769 = vpop.f32.mrb[0].mxu0
    %v1770 = vadd.f32 %v1729, %v1769
    %v1771 = vpop.f32.mrb[0].mxu0
    %v1772 = vadd.f32 %v1731, %v1771
    %v1773 = vpop.f32.mrb[0].mxu0
    %v1774 = vpop.f32.mrb[0].mxu0
    %1775 = vdwg.mxu0
    %1776 = vmatprep.subr.bf16.mxu0 %v1334
    %1777 = vmatpush1.bf16.msra.mxu0 %v1333
    %1778 = vmatprep.subr.bf16.mxu0 %v1338
    %1779 = vmatpush1.bf16.msra.mxu0 %v1337
    %1780 = vmatprep.subr.bf16.mxu0 %v1342
    %1781 = vmatpush1.bf16.msra.mxu0 %v1341
    %1782 = vmatprep.subr.bf16.mxu0 %v1346
    %1783 = vmatpush1.bf16.msra.mxu0 %v1345
    %1784 = vmatprep.subr.bf16.mxu0 %v1350
    %1785 = vmatpush1.bf16.msra.mxu0 %v1349
    %1786 = vmatprep.subr.bf16.mxu0 %v1354
    %1787 = vmatpush1.bf16.msra.mxu0 %v1353
    %1788 = vmatprep.subr.bf16.mxu0 %v1358
    %1789 = vmatpush1.bf16.msra.mxu0 %v1357
    %1790 = vmatprep.subr.bf16.mxu0 %v1362
    %1791 = vmatpush1.bf16.msra.mxu0 %v1361
    %1792 = vmatprep.subr.bf16.mxu0 %v1366
    %1793 = vmatpush1.bf16.msra.mxu0 %v1365
    %1794 = vmatprep.subr.bf16.mxu0 %v1370
    %1795 = vmatpush1.bf16.msra.mxu0 %v1369
    %1796 = vmatprep.subr.bf16.mxu0 %v1374
    %1797 = vmatpush1.bf16.msra.mxu0 %v1373
    %1798 = vmatprep.subr.bf16.mxu0 %v1378
    %1799 = vmatpush1.bf16.msra.mxu0 %v1377
    %1800 = vmatprep.subr.bf16.mxu0 %v1382
    %1801 = vmatpush1.bf16.msra.mxu0 %v1381
    %1802 = vmatprep.subr.bf16.mxu0 %v1386
    %1803 = vmatpush1.bf16.msra.mxu0 %v1385
    %1804 = vmatprep.subr.bf16.mxu0 %v1390
    %1805 = vmatpush1.bf16.msra.mxu0 %v1389
    %1806 = vmatprep.subr.bf16.mxu0 %v1394
    %1807 = vmatpush1.bf16.msra.mxu0 %v1393
    %1808 = vmatprep.mubr.bf16.mxu0 %v94
    %1809 = vmatmul.mubr.bf16.gmra.mrb[0].mxu0 %v93
    %v1810 = vpop.f32.mrb[0].mxu0
    %v1811 = vadd.f32 %v1770, %v1810
    %v1812 = vpop.f32.mrb[0].mxu0
    %v1813 = vadd.f32 %v1772, %v1812
    %v1814 = vpop.f32.mrb[0].mxu0
    %v1815 = vpop.f32.mrb[0].mxu0
    %1816 = vdwg.mxu0
    %1817 = vmatprep.subr.bf16.mxu0 %v1144
    %1818 = vmatpush1.bf16.msra.mxu0 %v1143
    %1819 = vmatprep.subr.bf16.mxu0 %v1148
    %1820 = vmatpush1.bf16.msra.mxu0 %v1147
    %1821 = vmatprep.subr.bf16.mxu0 %v1152
    %1822 = vmatpush1.bf16.msra.mxu0 %v1151
    %1823 = vmatprep.subr.bf16.mxu0 %v1156
    %1824 = vmatpush1.bf16.msra.mxu0 %v1155
    %1825 = vmatprep.subr.bf16.mxu0 %v1160
    %1826 = vmatpush1.bf16.msra.mxu0 %v1159
    %1827 = vmatprep.subr.bf16.mxu0 %v1164
    %1828 = vmatpush1.bf16.msra.mxu0 %v1163
    %1829 = vmatprep.subr.bf16.mxu0 %v1168
    %1830 = vmatpush1.bf16.msra.mxu0 %v1167
    %1831 = vmatprep.subr.bf16.mxu0 %v1172
    %1832 = vmatpush1.bf16.msra.mxu0 %v1171
    %1833 = vmatprep.subr.bf16.mxu0 %v1176
    %1834 = vmatpush1.bf16.msra.mxu0 %v1175
    %1835 = vmatprep.subr.bf16.mxu0 %v1180
    %1836 = vmatpush1.bf16.msra.mxu0 %v1179
    %1837 = vmatprep.subr.bf16.mxu0 %v1184
    %1838 = vmatpush1.bf16.msra.mxu0 %v1183
    %1839 = vmatprep.subr.bf16.mxu0 %v1188
    %1840 = vmatpush1.bf16.msra.mxu0 %v1187
    %1841 = vmatprep.subr.bf16.mxu0 %v1192
    %1842 = vmatpush1.bf16.msra.mxu0 %v1191
    %1843 = vmatprep.subr.bf16.mxu0 %v1196
    %1844 = vmatpush1.bf16.msra.mxu0 %v1195
    %1845 = vmatprep.subr.bf16.mxu0 %v1200
    %1846 = vmatpush1.bf16.msra.mxu0 %v1199
    %1847 = vmatprep.subr.bf16.mxu0 %v1204
    %1848 = vmatpush1.bf16.msra.mxu0 %v1203
    %1849 = vmatprep.mubr.bf16.mxu0 %v88
    %1850 = vmatmul.mubr.bf16.gmra.mrb[0].mxu0 %v87
    %v1851 = vpop.f32.mrb[0].mxu0
    %v1852 = vadd.f32 %v364, %v1851
    %v1853 = vpop.f32.mrb[0].mxu0
    %v1854 = vadd.f32 %v368, %v1853
    %v1855 = vpop.f32.mrb[0].mxu0
    %v1856 = vpop.f32.mrb[0].mxu0
    %1857 = vdwg.mxu0
    %1858 = vmatprep.subr.bf16.mxu0 %v1208
    %1859 = vmatpush1.bf16.msra.mxu0 %v1207
    %1860 = vmatprep.subr.bf16.mxu0 %v1212
    %1861 = vmatpush1.bf16.msra.mxu0 %v1211
    %1862 = vmatprep.subr.bf16.mxu0 %v1216
    %1863 = vmatpush1.bf16.msra.mxu0 %v1215
    %1864 = vmatprep.subr.bf16.mxu0 %v1220
    %1865 = vmatpush1.bf16.msra.mxu0 %v1219
    %1866 = vmatprep.subr.bf16.mxu0 %v1224
    %1867 = vmatpush1.bf16.msra.mxu0 %v1223
    %1868 = vmatprep.subr.bf16.mxu0 %v1228
    %1869 = vmatpush1.bf16.msra.mxu0 %v1227
    %1870 = vmatprep.subr.bf16.mxu0 %v1232
    %1871 = vmatpush1.bf16.msra.mxu0 %v1231
    %1872 = vmatprep.subr.bf16.mxu0 %v1236
    %1873 = vmatpush1.bf16.msra.mxu0 %v1235
    %1874 = vmatprep.subr.bf16.mxu0 %v1240
    %1875 = vmatpush1.bf16.msra.mxu0 %v1239
    %1876 = vmatprep.subr.bf16.mxu0 %v1244
    %1877 = vmatpush1.bf16.msra.mxu0 %v1243
    %1878 = vmatprep.subr.bf16.mxu0 %v1248
    %1879 = vmatpush1.bf16.msra.mxu0 %v1247
    %1880 = vmatprep.subr.bf16.mxu0 %v1252
    %1881 = vmatpush1.bf16.msra.mxu0 %v1251
    %1882 = vmatprep.subr.bf16.mxu0 %v1256
    %1883 = vmatpush1.bf16.msra.mxu0 %v1255
    %1884 = vmatprep.subr.bf16.mxu0 %v1260
    %1885 = vmatpush1.bf16.msra.mxu0 %v1259
    %1886 = vmatprep.subr.bf16.mxu0 %v1264
    %1887 = vmatpush1.bf16.msra.mxu0 %v1263
    %1888 = vmatprep.subr.bf16.mxu0 %v1268
    %1889 = vmatpush1.bf16.msra.mxu0 %v1267
    %1890 = vmatprep.mubr.bf16.mxu0 %v90
    %1891 = vmatmul.mubr.bf16.gmra.mrb[0].mxu0 %v89
    %v1892 = vpop.f32.mrb[0].mxu0
    %v1893 = vadd.f32 %v1852, %v1892
    %v1894 = vpop.f32.mrb[0].mxu0
    %v1895 = vadd.f32 %v1854, %v1894
    %v1896 = vpop.f32.mrb[0].mxu0
    %v1897 = vpop.f32.mrb[0].mxu0
    %1898 = vdwg.mxu0
    %1899 = vmatprep.subr.bf16.mxu0 %v1272
    %1900 = vmatpush1.bf16.msra.mxu0 %v1271
    %1901 = vmatprep.subr.bf16.mxu0 %v1276
    %1902 = vmatpush1.bf16.msra.mxu0 %v1275
    %1903 = vmatprep.subr.bf16.mxu0 %v1280
    %1904 = vmatpush1.bf16.msra.mxu0 %v1279
    %1905 = vmatprep.subr.bf16.mxu0 %v1284
    %1906 = vmatpush1.bf16.msra.mxu0 %v1283
    %1907 = vmatprep.subr.bf16.mxu0 %v1288
    %1908 = vmatpush1.bf16.msra.mxu0 %v1287
    %1909 = vmatprep.subr.bf16.mxu0 %v1292
    %1910 = vmatpush1.bf16.msra.mxu0 %v1291
    %1911 = vmatprep.subr.bf16.mxu0 %v1296
    %1912 = vmatpush1.bf16.msra.mxu0 %v1295
    %1913 = vmatprep.subr.bf16.mxu0 %v1300
    %1914 = vmatpush1.bf16.msra.mxu0 %v1299
    %1915 = vmatprep.subr.bf16.mxu0 %v1304
    %1916 = vmatpush1.bf16.msra.mxu0 %v1303
    %1917 = vmatprep.subr.bf16.mxu0 %v1308
    %1918 = vmatpush1.bf16.msra.mxu0 %v1307
    %1919 = vmatprep.subr.bf16.mxu0 %v1312
    %1920 = vmatpush1.bf16.msra.mxu0 %v1311
    %1921 = vmatprep.subr.bf16.mxu0 %v1316
    %1922 = vmatpush1.bf16.msra.mxu0 %v1315
    %1923 = vmatprep.subr.bf16.mxu0 %v1320
    %1924 = vmatpush1.bf16.msra.mxu0 %v1319
    %1925 = vmatprep.subr.bf16.mxu0 %v1324
    %1926 = vmatpush1.bf16.msra.mxu0 %v1323
    %1927 = vmatprep.subr.bf16.mxu0 %v1328
    %1928 = vmatpush1.bf16.msra.mxu0 %v1327
    %1929 = vmatprep.subr.bf16.mxu0 %v1332
    %1930 = vmatpush1.bf16.msra.mxu0 %v1331
    %1931 = vmatprep.mubr.bf16.mxu0 %v92
    %1932 = vmatmul.mubr.bf16.gmra.mrb[0].mxu0 %v91
    %v1933 = vpop.f32.mrb[0].mxu0
    %v1934 = vadd.f32 %v1893, %v1933
    %v1935 = vpop.f32.mrb[0].mxu0
    %v1936 = vadd.f32 %v1895, %v1935
    %v1937 = vpop.f32.mrb[0].mxu0
    %v1938 = vpop.f32.mrb[0].mxu0
    %1939 = vdwg.mxu0
    %1940 = vmatprep.subr.bf16.mxu0 %v1336
    %1941 = vmatpush1.bf16.msra.mxu0 %v1335
    %1942 = vmatprep.subr.bf16.mxu0 %v1340
    %1943 = vmatpush1.bf16.msra.mxu0 %v1339
    %1944 = vmatprep.subr.bf16.mxu0 %v1344
    %1945 = vmatpush1.bf16.msra.mxu0 %v1343
    %1946 = vmatprep.subr.bf16.mxu0 %v1348
    %1947 = vmatpush1.bf16.msra.mxu0 %v1347
    %1948 = vmatprep.subr.bf16.mxu0 %v1352
    %1949 = vmatpush1.bf16.msra.mxu0 %v1351
    %1950 = vmatprep.subr.bf16.mxu0 %v1356
    %1951 = vmatpush1.bf16.msra.mxu0 %v1355
    %1952 = vmatprep.subr.bf16.mxu0 %v1360
    %1953 = vmatpush1.bf16.msra.mxu0 %v1359
    %1954 = vmatprep.subr.bf16.mxu0 %v1364
    %1955 = vmatpush1.bf16.msra.mxu0 %v1363
    %1956 = vmatprep.subr.bf16.mxu0 %v1368
    %1957 = vmatpush1.bf16.msra.mxu0 %v1367
    %1958 = vmatprep.subr.bf16.mxu0 %v1372
    %1959 = vmatpush1.bf16.msra.mxu0 %v1371
    %1960 = vmatprep.subr.bf16.mxu0 %v1376
    %1961 = vmatpush1.bf16.msra.mxu0 %v1375
    %1962 = vmatprep.subr.bf16.mxu0 %v1380
    %1963 = vmatpush1.bf16.msra.mxu0 %v1379
    %1964 = vmatprep.subr.bf16.mxu0 %v1384
    %1965 = vmatpush1.bf16.msra.mxu0 %v1383
    %1966 = vmatprep.subr.bf16.mxu0 %v1388
    %1967 = vmatpush1.bf16.msra.mxu0 %v1387
    %1968 = vmatprep.subr.bf16.mxu0 %v1392
    %1969 = vmatpush1.bf16.msra.mxu0 %v1391
    %1970 = vmatprep.subr.bf16.mxu0 %v1396
    %1971 = vmatpush1.bf16.msra.mxu0 %v1395
    %1972 = vmatprep.mubr.bf16.mxu0 %v94
    %1973 = vmatmul.mubr.bf16.gmra.mrb[0].mxu0 %v93
    %v1974 = vpop.f32.mrb[0].mxu0
    %v1975 = vadd.f32 %v1934, %v1974
    %v1976 = vpop.f32.mrb[0].mxu0
    %v1977 = vadd.f32 %v1936, %v1976
    %v1978 = vpop.f32.mrb[0].mxu0
    %v1979 = vpop.f32.mrb[0].mxu0
    %1980 = vdwg.mxu0
    %v1981 = vmax.f32 %v1811, 0.0
    %v1982 = vmax.f32 %v1813, 0.0
    %v1983 = vmax.f32 %v1975, 0.0
    %v1984 = vmax.f32 %v1977, 0.0
    %v1985 = vpack.c.bf16 %v1981, %v1981
    %v1986 = vpack.c.bf16 %v1982, %v1982
    %v1987 = vpack.c.bf16 %v1983, %v1983
    %v1988 = vpack.c.bf16 %v1984, %v1984
    %v1989 = vld [vmem:[%s3] sm:$0xff]
    %v1990 = vld [vmem:[%s3 + $0x8] sm:$0xff]
    %v1991 = vld [vmem:[%s3 + $0x10] sm:$0xff]
    %v1992 = vld [vmem:[%s3 + $0x18] sm:$0xff]
    %v1993 = vld [vmem:[%s3 + $0x20] sm:$0xff]
    %v1994 = vld [vmem:[%s3 + $0x28] sm:$0xff]
    %v1995 = vld [vmem:[%s3 + $0x30] sm:$0xff]
    %v1996 = vld [vmem:[%s3 + $0x38] sm:$0xff]
    %v1997 = vld [vmem:[%s3 + $0x40] sm:$0xff]
    %v1998 = vld [vmem:[%s3 + $0x48] sm:$0xff]
    %v1999 = vld [vmem:[%s3 + $0x50] sm:$0xff]
    %v2000 = vld [vmem:[%s3 + $0x58] sm:$0xff]
    %v2001 = vld [vmem:[%s3 + $0x60] sm:$0xff]
    %v2002 = vld [vmem:[%s3 + $0x68] sm:$0xff]
    %v2003 = vld [vmem:[%s3 + $0x70] sm:$0xff]
    %v2004 = vld [vmem:[%s3 + $0x78] sm:$0xff]
    %v2005 = vld [vmem:[%s3 + $0x80] sm:$0xff]
    %v2006 = vld [vmem:[%s3 + $0x88] sm:$0xff]
    %v2007 = vld [vmem:[%s3 + $0x90] sm:$0xff]
    %v2008 = vld [vmem:[%s3 + $0x98] sm:$0xff]
    %v2009 = vld [vmem:[%s3 + $0xa0] sm:$0xff]
    %v2010 = vld [vmem:[%s3 + $0xa8] sm:$0xff]
    %v2011 = vld [vmem:[%s3 + $0xb0] sm:$0xff]
    %v2012 = vld [vmem:[%s3 + $0xb8] sm:$0xff]
    %v2013 = vld [vmem:[%s3 + $0xc0] sm:$0xff]
    %v2014 = vld [vmem:[%s3 + $0xc8] sm:$0xff]
    %v2015 = vld [vmem:[%s3 + $0xd0] sm:$0xff]
    %v2016 = vld [vmem:[%s3 + $0xd8] sm:$0xff]
    %v2017 = vld [vmem:[%s3 + $0xe0] sm:$0xff]
    %v2018 = vld [vmem:[%s3 + $0xe8] sm:$0xff]
    %v2019 = vld [vmem:[%s3 + $0xf0] sm:$0xff]
    %v2020 = vld [vmem:[%s3 + $0xf8] sm:$0xff]
    %v2021 = vld [vmem:[%s3 + $0x100] sm:$0xff]
    %v2022 = vld [vmem:[%s3 + $0x108] sm:$0xff]
    %v2023 = vld [vmem:[%s3 + $0x110] sm:$0xff]
    %v2024 = vld [vmem:[%s3 + $0x118] sm:$0xff]
    %v2025 = vld [vmem:[%s3 + $0x120] sm:$0xff]
    %v2026 = vld [vmem:[%s3 + $0x128] sm:$0xff]
    %v2027 = vld [vmem:[%s3 + $0x130] sm:$0xff]
    %v2028 = vld [vmem:[%s3 + $0x138] sm:$0xff]
    %v2029 = vld [vmem:[%s3 + $0x140] sm:$0xff]
    %v2030 = vld [vmem:[%s3 + $0x148] sm:$0xff]
    %v2031 = vld [vmem:[%s3 + $0x150] sm:$0xff]
    %v2032 = vld [vmem:[%s3 + $0x158] sm:$0xff]
    %v2033 = vld [vmem:[%s3 + $0x160] sm:$0xff]
    %v2034 = vld [vmem:[%s3 + $0x168] sm:$0xff]
    %v2035 = vld [vmem:[%s3 + $0x170] sm:$0xff]
    %v2036 = vld [vmem:[%s3 + $0x178] sm:$0xff]
    %v2037 = vld [vmem:[%s3 + $0x180] sm:$0xff]
    %v2038 = vld [vmem:[%s3 + $0x188] sm:$0xff]
    %v2039 = vld [vmem:[%s3 + $0x190] sm:$0xff]
    %v2040 = vld [vmem:[%s3 + $0x198] sm:$0xff]
    %v2041 = vld [vmem:[%s3 + $0x1a0] sm:$0xff]
    %v2042 = vld [vmem:[%s3 + $0x1a8] sm:$0xff]
    %v2043 = vld [vmem:[%s3 + $0x1b0] sm:$0xff]
    %v2044 = vld [vmem:[%s3 + $0x1b8] sm:$0xff]
    %v2045 = vld [vmem:[%s3 + $0x1c0] sm:$0xff]
    %v2046 = vld [vmem:[%s3 + $0x1c8] sm:$0xff]
    %v2047 = vld [vmem:[%s3 + $0x1d0] sm:$0xff]
    %v2048 = vld [vmem:[%s3 + $0x1d8] sm:$0xff]
    %v2049 = vld [vmem:[%s3 + $0x1e0] sm:$0xff]
    %v2050 = vld [vmem:[%s3 + $0x1e8] sm:$0xff]
    %v2051 = vld [vmem:[%s3 + $0x1f0] sm:$0xff]
    %v2052 = vld [vmem:[%s3 + $0x1f8] sm:$0xff]
    %v2053 = vld [vmem:[%s4] sm:$0x3]
    %v2055 = vlaneseq
    %v2056 = vshrl.u32 %v2055, 7
    %v2057 = vsub.s32 0, %v2056
    %v2058 = vrot.slane %v2053, %v2057
    %v2059 = vlaneseq
    %v2060 = vshrl.u32 %v2059, 7
    %v2061 = vsub.s32 1, %v2060
    %v2062 = vrot.slane %v2053, %v2061
    %v2129 = vunpack.c.l.b16 %v1989
    %v2130 = vunpack.c.h.b16 %v1989
    %v2131 = vunpack.c.l.b16 %v1990
    %v2132 = vunpack.c.h.b16 %v1990
    %v2133 = vunpack.c.l.b16 %v1991
    %v2134 = vunpack.c.h.b16 %v1991
    %v2135 = vunpack.c.l.b16 %v1992
    %v2136 = vunpack.c.h.b16 %v1992
    %v2137 = vunpack.c.l.b16 %v1993
    %v2138 = vunpack.c.h.b16 %v1993
    %v2139 = vunpack.c.l.b16 %v1994
    %v2140 = vunpack.c.h.b16 %v1994
    %v2141 = vunpack.c.l.b16 %v1995
    %v2142 = vunpack.c.h.b16 %v1995
    %v2143 = vunpack.c.l.b16 %v1996
    %v2144 = vunpack.c.h.b16 %v1996
    %v2145 = vunpack.c.l.b16 %v1997
    %v2146 = vunpack.c.h.b16 %v1997
    %v2147 = vunpack.c.l.b16 %v1998
    %v2148 = vunpack.c.h.b16 %v1998
    %v2149 = vunpack.c.l.b16 %v1999
    %v2150 = vunpack.c.h.b16 %v1999
    %v2151 = vunpack.c.l.b16 %v2000
    %v2152 = vunpack.c.h.b16 %v2000
    %v2153 = vunpack.c.l.b16 %v2001
    %v2154 = vunpack.c.h.b16 %v2001
    %v2155 = vunpack.c.l.b16 %v2002
    %v2156 = vunpack.c.h.b16 %v2002
    %v2157 = vunpack.c.l.b16 %v2003
    %v2158 = vunpack.c.h.b16 %v2003
    %v2159 = vunpack.c.l.b16 %v2004
    %v2160 = vunpack.c.h.b16 %v2004
    %v2161 = vunpack.c.l.b16 %v2005
    %v2162 = vunpack.c.h.b16 %v2005
    %v2163 = vunpack.c.l.b16 %v2006
    %v2164 = vunpack.c.h.b16 %v2006
    %v2165 = vunpack.c.l.b16 %v2007
    %v2166 = vunpack.c.h.b16 %v2007
    %v2167 = vunpack.c.l.b16 %v2008
    %v2168 = vunpack.c.h.b16 %v2008
    %v2169 = vunpack.c.l.b16 %v2009
    %v2170 = vunpack.c.h.b16 %v2009
    %v2171 = vunpack.c.l.b16 %v2010
    %v2172 = vunpack.c.h.b16 %v2010
    %v2173 = vunpack.c.l.b16 %v2011
    %v2174 = vunpack.c.h.b16 %v2011
    %v2175 = vunpack.c.l.b16 %v2012
    %v2176 = vunpack.c.h.b16 %v2012
    %v2177 = vunpack.c.l.b16 %v2013
    %v2178 = vunpack.c.h.b16 %v2013
    %v2179 = vunpack.c.l.b16 %v2014
    %v2180 = vunpack.c.h.b16 %v2014
    %v2181 = vunpack.c.l.b16 %v2015
    %v2182 = vunpack.c.h.b16 %v2015
    %v2183 = vunpack.c.l.b16 %v2016
    %v2184 = vunpack.c.h.b16 %v2016
    %v2185 = vunpack.c.l.b16 %v2017
    %v2186 = vunpack.c.h.b16 %v2017
    %v2187 = vunpack.c.l.b16 %v2018
    %v2188 = vunpack.c.h.b16 %v2018
    %v2189 = vunpack.c.l.b16 %v2019
    %v2190 = vunpack.c.h.b16 %v2019
    %v2191 = vunpack.c.l.b16 %v2020
    %v2192 = vunpack.c.h.b16 %v2020
    %v2193 = vunpack.c.l.b16 %v2021
    %v2194 = vunpack.c.h.b16 %v2021
    %v2195 = vunpack.c.l.b16 %v2022
    %v2196 = vunpack.c.h.b16 %v2022
    %v2197 = vunpack.c.l.b16 %v2023
    %v2198 = vunpack.c.h.b16 %v2023
    %v2199 = vunpack.c.l.b16 %v2024
    %v2200 = vunpack.c.h.b16 %v2024
    %v2201 = vunpack.c.l.b16 %v2025
    %v2202 = vunpack.c.h.b16 %v2025
    %v2203 = vunpack.c.l.b16 %v2026
    %v2204 = vunpack.c.h.b16 %v2026
    %v2205 = vunpack.c.l.b16 %v2027
    %v2206 = vunpack.c.h.b16 %v2027
    %v2207 = vunpack.c.l.b16 %v2028
    %v2208 = vunpack.c.h.b16 %v2028
    %v2209 = vunpack.c.l.b16 %v2029
    %v2210 = vunpack.c.h.b16 %v2029
    %v2211 = vunpack.c.l.b16 %v2030
    %v2212 = vunpack.c.h.b16 %v2030
    %v2213 = vunpack.c.l.b16 %v2031
    %v2214 = vunpack.c.h.b16 %v2031
    %v2215 = vunpack.c.l.b16 %v2032
    %v2216 = vunpack.c.h.b16 %v2032
    %v2217 = vunpack.c.l.b16 %v2033
    %v2218 = vunpack.c.h.b16 %v2033
    %v2219 = vunpack.c.l.b16 %v2034
    %v2220 = vunpack.c.h.b16 %v2034
    %v2221 = vunpack.c.l.b16 %v2035
    %v2222 = vunpack.c.h.b16 %v2035
    %v2223 = vunpack.c.l.b16 %v2036
    %v2224 = vunpack.c.h.b16 %v2036
    %v2225 = vunpack.c.l.b16 %v2037
    %v2226 = vunpack.c.h.b16 %v2037
    %v2227 = vunpack.c.l.b16 %v2038
    %v2228 = vunpack.c.h.b16 %v2038
    %v2229 = vunpack.c.l.b16 %v2039
    %v2230 = vunpack.c.h.b16 %v2039
    %v2231 = vunpack.c.l.b16 %v2040
    %v2232 = vunpack.c.h.b16 %v2040
    %v2233 = vunpack.c.l.b16 %v2041
    %v2234 = vunpack.c.h.b16 %v2041
    %v2235 = vunpack.c.l.b16 %v2042
    %v2236 = vunpack.c.h.b16 %v2042
    %v2237 = vunpack.c.l.b16 %v2043
    %v2238 = vunpack.c.h.b16 %v2043
    %v2239 = vunpack.c.l.b16 %v2044
    %v2240 = vunpack.c.h.b16 %v2044
    %v2241 = vunpack.c.l.b16 %v2045
    %v2242 = vunpack.c.h.b16 %v2045
    %v2243 = vunpack.c.l.b16 %v2046
    %v2244 = vunpack.c.h.b16 %v2046
    %v2245 = vunpack.c.l.b16 %v2047
    %v2246 = vunpack.c.h.b16 %v2047
    %v2247 = vunpack.c.l.b16 %v2048
    %v2248 = vunpack.c.h.b16 %v2048
    %v2249 = vunpack.c.l.b16 %v2049
    %v2250 = vunpack.c.h.b16 %v2049
    %v2251 = vunpack.c.l.b16 %v2050
    %v2252 = vunpack.c.h.b16 %v2050
    %v2253 = vunpack.c.l.b16 %v2051
    %v2254 = vunpack.c.h.b16 %v2051
    %v2255 = vunpack.c.l.b16 %v2052
    %v2256 = vunpack.c.h.b16 %v2052
    %v2257 = vpack.c.b16 %v2131, %v2129
    %v2258 = vpack.c.b16 %v2132, %v2130
    %v2259 = vpack.c.b16 %v2135, %v2133
    %v2260 = vpack.c.b16 %v2136, %v2134
    %v2261 = vpack.c.b16 %v2139, %v2137
    %v2262 = vpack.c.b16 %v2140, %v2138
    %v2263 = vpack.c.b16 %v2143, %v2141
    %v2264 = vpack.c.b16 %v2144, %v2142
    %v2265 = vpack.c.b16 %v2147, %v2145
    %v2266 = vpack.c.b16 %v2148, %v2146
    %v2267 = vpack.c.b16 %v2151, %v2149
    %v2268 = vpack.c.b16 %v2152, %v2150
    %v2269 = vpack.c.b16 %v2155, %v2153
    %v2270 = vpack.c.b16 %v2156, %v2154
    %v2271 = vpack.c.b16 %v2159, %v2157
    %v2272 = vpack.c.b16 %v2160, %v2158
    %v2273 = vpack.c.b16 %v2163, %v2161
    %v2274 = vpack.c.b16 %v2164, %v2162
    %v2275 = vpack.c.b16 %v2167, %v2165
    %v2276 = vpack.c.b16 %v2168, %v2166
    %v2277 = vpack.c.b16 %v2171, %v2169
    %v2278 = vpack.c.b16 %v2172, %v2170
    %v2279 = vpack.c.b16 %v2175, %v2173
    %v2280 = vpack.c.b16 %v2176, %v2174
    %v2281 = vpack.c.b16 %v2179, %v2177
    %v2282 = vpack.c.b16 %v2180, %v2178
    %v2283 = vpack.c.b16 %v2183, %v2181
    %v2284 = vpack.c.b16 %v2184, %v2182
    %v2285 = vpack.c.b16 %v2187, %v2185
    %v2286 = vpack.c.b16 %v2188, %v2186
    %v2287 = vpack.c.b16 %v2191, %v2189
    %v2288 = vpack.c.b16 %v2192, %v2190
    %v2289 = vpack.c.b16 %v2195, %v2193
    %v2290 = vpack.c.b16 %v2196, %v2194
    %v2291 = vpack.c.b16 %v2199, %v2197
    %v2292 = vpack.c.b16 %v2200, %v2198
    %v2293 = vpack.c.b16 %v2203, %v2201
    %v2294 = vpack.c.b16 %v2204, %v2202
    %v2295 = vpack.c.b16 %v2207, %v2205
    %v2296 = vpack.c.b16 %v2208, %v2206
    %v2297 = vpack.c.b16 %v2211, %v2209
    %v2298 = vpack.c.b16 %v2212, %v2210
    %v2299 = vpack.c.b16 %v2215, %v2213
    %v2300 = vpack.c.b16 %v2216, %v2214
    %v2301 = vpack.c.b16 %v2219, %v2217
    %v2302 = vpack.c.b16 %v2220, %v2218
    %v2303 = vpack.c.b16 %v2223, %v2221
    %v2304 = vpack.c.b16 %v2224, %v2222
    %v2305 = vpack.c.b16 %v2227, %v2225
    %v2306 = vpack.c.b16 %v2228, %v2226
    %v2307 = vpack.c.b16 %v2231, %v2229
    %v2308 = vpack.c.b16 %v2232, %v2230
    %v2309 = vpack.c.b16 %v2235, %v2233
    %v2310 = vpack.c.b16 %v2236, %v2234
    %v2311 = vpack.c.b16 %v2239, %v2237
    %v2312 = vpack.c.b16 %v2240, %v2238
    %v2313 = vpack.c.b16 %v2243, %v2241
    %v2314 = vpack.c.b16 %v2244, %v2242
    %v2315 = vpack.c.b16 %v2247, %v2245
    %v2316 = vpack.c.b16 %v2248, %v2246
    %v2317 = vpack.c.b16 %v2251, %v2249
    %v2318 = vpack.c.b16 %v2252, %v2250
    %v2319 = vpack.c.b16 %v2255, %v2253
    %v2320 = vpack.c.b16 %v2256, %v2254
    %2385 = vmatprep.subr.bf16.mxu0 %v2258
    %2386 = vmatpush1.bf16.msra.mxu0 %v2257
    %2387 = vmatprep.subr.bf16.mxu0 %v2260
    %2388 = vmatpush1.bf16.msra.mxu0 %v2259
    %2389 = vmatprep.subr.bf16.mxu0 %v2262
    %2390 = vmatpush1.bf16.msra.mxu0 %v2261
    %2391 = vmatprep.subr.bf16.mxu0 %v2264
    %2392 = vmatpush1.bf16.msra.mxu0 %v2263
    %2393 = vmatprep.subr.bf16.mxu0 %v2266
    %2394 = vmatpush1.bf16.msra.mxu0 %v2265
    %2395 = vmatprep.subr.bf16.mxu0 %v2268
    %2396 = vmatpush1.bf16.msra.mxu0 %v2267
    %2397 = vmatprep.subr.bf16.mxu0 %v2270
    %2398 = vmatpush1.bf16.msra.mxu0 %v2269
    %2399 = vmatprep.subr.bf16.mxu0 %v2272
    %2400 = vmatpush1.bf16.msra.mxu0 %v2271
    %2401 = vmatprep.subr.bf16.mxu0 %v2274
    %2402 = vmatpush1.bf16.msra.mxu0 %v2273
    %2403 = vmatprep.subr.bf16.mxu0 %v2276
    %2404 = vmatpush1.bf16.msra.mxu0 %v2275
    %2405 = vmatprep.subr.bf16.mxu0 %v2278
    %2406 = vmatpush1.bf16.msra.mxu0 %v2277
    %2407 = vmatprep.subr.bf16.mxu0 %v2280
    %2408 = vmatpush1.bf16.msra.mxu0 %v2279
    %2409 = vmatprep.subr.bf16.mxu0 %v2282
    %2410 = vmatpush1.bf16.msra.mxu0 %v2281
    %2411 = vmatprep.subr.bf16.mxu0 %v2284
    %2412 = vmatpush1.bf16.msra.mxu0 %v2283
    %2413 = vmatprep.subr.bf16.mxu0 %v2286
    %2414 = vmatpush1.bf16.msra.mxu0 %v2285
    %2415 = vmatprep.subr.bf16.mxu0 %v2288
    %2416 = vmatpush1.bf16.msra.mxu0 %v2287
    %2417 = vmatprep.mubr.bf16.mxu0 %v1986
    %2418 = vmatmul.mubr.bf16.gmra.mrb[0].mxu0 %v1985
    %v2419 = vpop.f32.mrb[0].mxu0
    %v2420 = vadd.f32 %v2058, %v2419
    %v2421 = vpop.f32.mrb[0].mxu0
    %v2422 = vadd.f32 %v2062, %v2421
    %v2423 = vpop.f32.mrb[0].mxu0
    %v2424 = vpop.f32.mrb[0].mxu0
    %2425 = vdwg.mxu0
    %2426 = vmatprep.subr.bf16.mxu0 %v2290
    %2427 = vmatpush1.bf16.msra.mxu0 %v2289
    %2428 = vmatprep.subr.bf16.mxu0 %v2292
    %2429 = vmatpush1.bf16.msra.mxu0 %v2291
    %2430 = vmatprep.subr.bf16.mxu0 %v2294
    %2431 = vmatpush1.bf16.msra.mxu0 %v2293
    %2432 = vmatprep.subr.bf16.mxu0 %v2296
    %2433 = vmatpush1.bf16.msra.mxu0 %v2295
    %2434 = vmatprep.subr.bf16.mxu0 %v2298
    %2435 = vmatpush1.bf16.msra.mxu0 %v2297
    %2436 = vmatprep.subr.bf16.mxu0 %v2300
    %2437 = vmatpush1.bf16.msra.mxu0 %v2299
    %2438 = vmatprep.subr.bf16.mxu0 %v2302
    %2439 = vmatpush1.bf16.msra.mxu0 %v2301
    %2440 = vmatprep.subr.bf16.mxu0 %v2304
    %2441 = vmatpush1.bf16.msra.mxu0 %v2303
    %2442 = vmatprep.subr.bf16.mxu0 %v2306
    %2443 = vmatpush1.bf16.msra.mxu0 %v2305
    %2444 = vmatprep.subr.bf16.mxu0 %v2308
    %2445 = vmatpush1.bf16.msra.mxu0 %v2307
    %2446 = vmatprep.subr.bf16.mxu0 %v2310
    %2447 = vmatpush1.bf16.msra.mxu0 %v2309
    %2448 = vmatprep.subr.bf16.mxu0 %v2312
    %2449 = vmatpush1.bf16.msra.mxu0 %v2311
    %2450 = vmatprep.subr.bf16.mxu0 %v2314
    %2451 = vmatpush1.bf16.msra.mxu0 %v2313
    %2452 = vmatprep.subr.bf16.mxu0 %v2316
    %2453 = vmatpush1.bf16.msra.mxu0 %v2315
    %2454 = vmatprep.subr.bf16.mxu0 %v2318
    %2455 = vmatpush1.bf16.msra.mxu0 %v2317
    %2456 = vmatprep.subr.bf16.mxu0 %v2320
    %2457 = vmatpush1.bf16.msra.mxu0 %v2319
    %2458 = vmatprep.mubr.bf16.mxu0 %v1988
    %2459 = vmatmul.mubr.bf16.gmra.mrb[0].mxu0 %v1987
    %v2460 = vpop.f32.mrb[0].mxu0
    %v2461 = vadd.f32 %v2420, %v2460
    %v2462 = vpop.f32.mrb[0].mxu0
    %v2463 = vadd.f32 %v2422, %v2462
    %v2464 = vpop.f32.mrb[0].mxu0
    %v2465 = vpop.f32.mrb[0].mxu0
    %2466 = vdwg.mxu0
    %v2467 = vmax.f32 %v2461, 0.0
    %v2468 = vmax.f32 %v2463, 0.0
    %v2469 = vld [vmem:[%s5] sm:$0xff]
    %v2470 = vld [vmem:[%s5 + $0x8] sm:$0xff]
    %v2471 = vld [vmem:[%s5 + $0x10] sm:$0xff]
    %v2472 = vld [vmem:[%s5 + $0x18] sm:$0xff]
    %v2473 = vld [vmem:[%s5 + $0x20] sm:$0xff]
    %v2474 = vld [vmem:[%s5 + $0x28] sm:$0xff]
    %v2475 = vld [vmem:[%s5 + $0x30] sm:$0xff]
    %v2476 = vld [vmem:[%s5 + $0x38] sm:$0xff]
    %v2477 = vld [vmem:[%s5 + $0x40] sm:$0xff]
    %v2478 = vld [vmem:[%s5 + $0x48] sm:$0xff]
    %v2479 = vld [vmem:[%s5 + $0x50] sm:$0xff]
    %v2480 = vld [vmem:[%s5 + $0x58] sm:$0xff]
    %v2481 = vld [vmem:[%s5 + $0x60] sm:$0xff]
    %v2482 = vld [vmem:[%s5 + $0x68] sm:$0xff]
    %v2483 = vld [vmem:[%s5 + $0x70] sm:$0xff]
    %v2484 = vld [vmem:[%s5 + $0x78] sm:$0xff]
    %v2485 = vld [vmem:[%s5 + $0x80] sm:$0xff]
    %v2486 = vld [vmem:[%s5 + $0x88] sm:$0xff]
    %v2487 = vld [vmem:[%s5 + $0x90] sm:$0xff]
    %v2488 = vld [vmem:[%s5 + $0x98] sm:$0xff]
    %v2489 = vld [vmem:[%s5 + $0xa0] sm:$0xff]
    %v2490 = vld [vmem:[%s5 + $0xa8] sm:$0xff]
    %v2491 = vld [vmem:[%s5 + $0xb0] sm:$0xff]
    %v2492 = vld [vmem:[%s5 + $0xb8] sm:$0xff]
    %v2493 = vld [vmem:[%s5 + $0xc0] sm:$0xff]
    %v2494 = vld [vmem:[%s5 + $0xc8] sm:$0xff]
    %v2495 = vld [vmem:[%s5 + $0xd0] sm:$0xff]
    %v2496 = vld [vmem:[%s5 + $0xd8] sm:$0xff]
    %v2497 = vld [vmem:[%s5 + $0xe0] sm:$0xff]
    %v2498 = vld [vmem:[%s5 + $0xe8] sm:$0xff]
    %v2499 = vld [vmem:[%s5 + $0xf0] sm:$0xff]
    %v2500 = vld [vmem:[%s5 + $0xf8] sm:$0xff]
    %v2501 = vld [vmem:[%s6] sm:$0x1]
    %v2503 = vlaneseq
    %v2504 = vshrl.u32 %v2503, 7
    %v2505 = vsub.s32 0, %v2504
    %v2506 = vrot.slane %v2501, %v2505
    %2508 = vmatprep.subr.mxu0 0.0
    %2509 = vmatpush1.msra.mxu0 %v2469
    %2510 = vmatprep.subr.mxu0 0.0
    %2511 = vmatpush1.msra.mxu0 %v2470
    %2512 = vmatprep.subr.mxu0 0.0
    %2513 = vmatpush1.msra.mxu0 %v2471
    %2514 = vmatprep.subr.mxu0 0.0
    %2515 = vmatpush1.msra.mxu0 %v2472
    %2516 = vmatprep.subr.mxu0 0.0
    %2517 = vmatpush1.msra.mxu0 %v2473
    %2518 = vmatprep.subr.mxu0 0.0
    %2519 = vmatpush1.msra.mxu0 %v2474
    %2520 = vmatprep.subr.mxu0 0.0
    %2521 = vmatpush1.msra.mxu0 %v2475
    %2522 = vmatprep.subr.mxu0 0.0
    %2523 = vmatpush1.msra.mxu0 %v2476
    %2524 = vmatprep.subr.mxu0 0.0
    %2525 = vmatpush1.msra.mxu0 %v2477
    %2526 = vmatprep.subr.mxu0 0.0
    %2527 = vmatpush1.msra.mxu0 %v2478
    %2528 = vmatprep.subr.mxu0 0.0
    %2529 = vmatpush1.msra.mxu0 %v2479
    %2530 = vmatprep.subr.mxu0 0.0
    %2531 = vmatpush1.msra.mxu0 %v2480
    %2532 = vmatprep.subr.mxu0 0.0
    %2533 = vmatpush1.msra.mxu0 %v2481
    %2534 = vmatprep.subr.mxu0 0.0
    %2535 = vmatpush1.msra.mxu0 %v2482
    %2536 = vmatprep.subr.mxu0 0.0
    %2537 = vmatpush1.msra.mxu0 %v2483
    %2538 = vmatprep.subr.mxu0 0.0
    %2539 = vmatpush1.msra.mxu0 %v2484
    %2540 = vmatprep.subr.mxu0 0.0
    %2541 = vmatpush1.msra.mxu0 %v2485
    %2542 = vmatprep.subr.mxu0 0.0
    %2543 = vmatpush1.msra.mxu0 %v2486
    %2544 = vmatprep.subr.mxu0 0.0
    %2545 = vmatpush1.msra.mxu0 %v2487
    %2546 = vmatprep.subr.mxu0 0.0
    %2547 = vmatpush1.msra.mxu0 %v2488
    %2548 = vmatprep.subr.mxu0 0.0
    %2549 = vmatpush1.msra.mxu0 %v2489
    %2550 = vmatprep.subr.mxu0 0.0
    %2551 = vmatpush1.msra.mxu0 %v2490
    %2552 = vmatprep.subr.mxu0 0.0
    %2553 = vmatpush1.msra.mxu0 %v2491
    %2554 = vmatprep.subr.mxu0 0.0
    %2555 = vmatpush1.msra.mxu0 %v2492
    %2556 = vmatprep.subr.mxu0 0.0
    %2557 = vmatpush1.msra.mxu0 %v2493
    %2558 = vmatprep.subr.mxu0 0.0
    %2559 = vmatpush1.msra.mxu0 %v2494
    %2560 = vmatprep.subr.mxu0 0.0
    %2561 = vmatpush1.msra.mxu0 %v2495
    %2562 = vmatprep.subr.mxu0 0.0
    %2563 = vmatpush1.msra.mxu0 %v2496
    %2564 = vmatprep.subr.mxu0 0.0
    %2565 = vmatpush1.msra.mxu0 %v2497
    %2566 = vmatprep.subr.mxu0 0.0
    %2567 = vmatpush1.msra.mxu0 %v2498
    %2568 = vmatprep.subr.mxu0 0.0
    %2569 = vmatpush1.msra.mxu0 %v2499
    %2570 = vmatprep.subr.mxu0 0.0
    %2571 = vmatpush1.msra.mxu0 %v2500
    %2572 = vmatprep.mubr.f32.mxu0 %v2468
    %2573 = vmatmul.mubr.f32.gmra.mrb[0].mxu0 %v2467
    %v2574 = vpop.f32.mrb[0].mxu0
    %v2575 = vadd.f32 %v2506, %v2574
    %v2576 = vpop.f32.mrb[0].mxu0
    %2577 = vdwg.mxu0
    %vm2578 = vcmask 74752
    %v2579 = vsel %vm2578, %v2575, -inf
    %2580 = vmax.xlane.f32.xlu0 %v2579
    %v2581 = vpop.xlane.xlu0 %2580
    %v2582 = vsub.f32 %v2575, %v2581
    %v2583 = vmul.f32 %v2582, 1.442695
    %v2584 = vpow.pop %v2583
    %v2585 = vsel %vm2578, %v2584, 0.0
    %2586 = vadd.xlane.f32.xlu0 %v2585
    %v2587 = vpop.xlane.xlu0 %2586
    %v2588 = vlog2.pop %v2587
    %v2589 = vmul.f32 %v2588, 0.6931472
    %v2590 = vsub.f32 %v2582, %v2589
    %2591 = vst.msk [vmem:[#allocation5] sm:$0x3] %vm2578, %v2590
    // Predicated region
    $region34: #{sgc_classifier.3} parent=1 // pred_check
      _
    $region35: #{sgc_classifier.3} parent=1 // pred_check_branch
      %2593 = sbr.rel (0) target = $region37
    $region36: #{sgc_classifier.3} parent=1 // pred_region
      %s2595 = ssub.s32 32, 32
      %2596 = vsyncadd [#allocation4], %s2595
      %s2598 = sshll.u32 [#allocation5], 4
      %s2599 = int_to_ptr.vmem [resolvable:$true] %s2598
      %2601 = dma.vmem_to_hbm [thread:$0]  %s2599, 32, %s7, [#allocation4]
    $region37: #{sgc_classifier.3} parent=1 // pred_fallthru
      _
    // Predicated region
    $region38: #{sgc_classifier.3} parent=1 // pred_check
      _
    $region39: #{sgc_classifier.3} parent=1 // pred_check_branch
      %2603 = sbr.rel (0) target = $region41
    $region40: #{sgc_classifier.3} parent=1 // pred_region
      %2604 = dma.done [#allocation4], 32
    $region41: #{sgc_classifier.3} parent=1 // pred_fallthru
      _
    %2605 = vsyncpa [#allocation3], 1
    %2606 = vsyncpa [#allocation4], 1

</llo_original>
